<compile_context>
chip_gen: v6e
topology: v6e:2x2x1
jax: 0.10.0
libtpu: 0.0.40
codegen_flags: <defaults>
</compile_context>

<pallas_src>
import functools

import jax
import jax.numpy as jnp
import numpy as np
from jax.experimental import pallas as pl
from jax.experimental.pallas import tpu as pltpu


def _two_layer_lstm_kernel(
    x_ref,            # (TT, BB, I)    time chunk of time-major input (matmul dtype)
    h0_ref, c0_ref,   # (2, BB, H)     initial hidden / cell state (f32)
    wih0_ref,         # (I, 4H)        layer-0 input weights,  cols = [i|f|o|g]
    whh0_ref,         # (H, 4H)        layer-0 hidden weights, cols = [i|f|o|g]
    b0_ref,           # (1, 4H)        layer-0 combined bias (b_ih + b_hh), f32
    wih1_ref,         # (H, 4H)
    whh1_ref,         # (H, 4H)
    b1_ref,           # (1, 4H)
    wfc_ref,          # (H, Opad)      lane-dense (zero-padded) FC weights
    bfc_ref,          # (1, Opad)
    out_ref,          # (TT, BB, Opad) fc(lstm_out) for this chunk, f32
    hn_ref, cn_ref,   # (2, BB, H)     running/final hidden & cell state (resident
                      #                across the time-chunk axis -> the carry)
    xg_sc,            # scratch (TT, BB, 4H) f32: hoisted input-gate projections
    h_sc,             # scratch (TT, BB, H)  matmul dtype: per-layer hidden outs
):
    TT, BB, I = x_ref.shape
    H = whh0_ref.shape[0]
    G = 4 * H
    cdt = wih0_ref.dtype              # matmul operand dtype (f32 or bf16)
    unroll = min(TT, 8)               # capped unroll: LLO overlap w/o spill cliff

    # First time chunk of each batch block: seed the resident state carries.
    @pl.when(pl.program_id(1) == 0)
    def _():
        hn_ref[...] = h0_ref[...]
        cn_ref[...] = c0_ref[...]

    def cell(xg_t, h, c, whh):
        # gate layout after wrapper permutation: [i | f | o | g]
        gates = xg_t + jnp.dot(h.astype(cdt), whh,
                               preferred_element_type=jnp.float32)
        # sigmoid(x) = 0.5*tanh(0.5*x) + 0.5 : single EUP op per block, no divide.
        sfo = 0.5 * jnp.tanh(0.5 * gates[:, : 3 * H]) + 0.5
        g = jnp.tanh(gates[:, 3 * H:])
        i_g = sfo[:, 0 * H:1 * H]
        f_g = sfo[:, 1 * H:2 * H]
        o_g = sfo[:, 2 * H:3 * H]
        c_new = f_g * c + i_g * g
        h_new = o_g * jnp.tanh(c_new)
        return h_new, c_new

    # ---------------- layer 0 ----------------
    # Hoisted input projection: one big MXU matmul for the whole chunk.
    x2d = x_ref[...].reshape(TT * BB, I)
    xg0 = jnp.dot(x2d, wih0_ref[...],
                  preferred_element_type=jnp.float32) + b0_ref[...]
    xg_sc[...] = xg0.reshape(TT, BB, G)
    whh0 = whh0_ref[...]

    def step0(t, carry):
        h, c = cell(xg_sc[t], carry[0], carry[1], whh0)
        h_sc[t] = h.astype(h_sc.dtype)
        return (h, c)

    h_f, c_f = jax.lax.fori_loop(0, TT, step0, (hn_ref[0], cn_ref[0]),
                                 unroll=unroll)
    hn_ref[0] = h_f
    cn_ref[0] = c_f

    # ---------------- layer 1 ----------------
    # TODO(synk): wavefront-interleave with layer 0 (per-step xg1 = h0_t @ wih1)
    # to double per-iteration ILP on the latency-bound recurrence.
    l0_2d = h_sc[...].reshape(TT * BB, H)
    xg1 = jnp.dot(l0_2d, wih1_ref[...],
                  preferred_element_type=jnp.float32) + b1_ref[...]
    xg_sc[...] = xg1.reshape(TT, BB, G)
    whh1 = whh1_ref[...]

    def step1(t, carry):
        h, c = cell(xg_sc[t], carry[0], carry[1], whh1)
        h_sc[t] = h.astype(h_sc.dtype)     # reuse scratch for layer-1 hiddens
        return (h, c)

    h_f, c_f = jax.lax.fori_loop(0, TT, step1, (hn_ref[1], cn_ref[1]),
                                 unroll=unroll)
    hn_ref[1] = h_f
    cn_ref[1] = c_f

    # ---------------- batched, lane-dense FC head ----------------
    # One (TT*BB, H) @ (H, Opad) matmul + one unmasked full-lane store.
    h1_2d = h_sc[...].reshape(TT * BB, H)
    out = jnp.dot(h1_2d, wfc_ref[...],
                  preferred_element_type=jnp.float32) + bfc_ref[...]
    out_ref[...] = out.reshape(TT, BB, out_ref.shape[2]).astype(out_ref.dtype)


def _round_up(x, m):
    return ((x + m - 1) // m) * m


def _pick_t_chunk(T, cap=64):
    """Largest chunk <= cap that divides T (keeps the recurrence un-padded)."""
    if T <= cap:
        return T
    best = max((d for d in range(1, cap + 1) if T % d == 0), default=1)
    # TODO(synk): for awkward (e.g. prime) large T, pad + mask timesteps instead.
    return best if best >= 8 else T


def init_params(key, input_size, hidden_size, output_size):
    """Deterministic parameters matching nn.LSTM(num_layers=2) + nn.Linear shapes."""
    H = hidden_size
    k = 1.0 / np.sqrt(H)
    names_shapes = [
        ("w_ih_l0", (4 * H, input_size)),
        ("w_hh_l0", (4 * H, H)),
        ("b_ih_l0", (4 * H,)),
        ("b_hh_l0", (4 * H,)),
        ("w_ih_l1", (4 * H, H)),
        ("w_hh_l1", (4 * H, H)),
        ("b_ih_l1", (4 * H,)),
        ("b_hh_l1", (4 * H,)),
        ("w_fc", (output_size, H)),
        ("b_fc", (output_size,)),
    ]
    keys = jax.random.split(key, len(names_shapes))
    params = {}
    for (name, shape), kk in zip(names_shapes, keys):
        params[name] = jax.random.uniform(
            kk, shape, dtype=jnp.float32, minval=-k, maxval=k
        )
    return params


@functools.partial(jax.jit, static_argnames=("matmul_dtype",))
def lstm_forward(x, h0, c0, params, *, matmul_dtype=jnp.float32):
    """x: (B, T, I) batch_first, h0/c0: (2, B, H). Returns (out, (h_n, c_n)).

    matmul_dtype=jnp.bfloat16 enables the fast MXU-operand path (v6e/v7x, also
    fine on v5e); accumulation, activations and the c state stay float32.
    """
    B, T, I = x.shape
    L, _, H = h0.shape
    O = params["w_fc"].shape[0]
    assert L == 2

    # -------- weight prep: transpose, permute gate cols [i|f|g|o]->[i|f|o|g] ----
    def reorder(w_t):
        return jnp.concatenate(
            [w_t[..., : 2 * H], w_t[..., 3 * H:], w_t[..., 2 * H: 3 * H]], axis=-1
        )

    wih0 = reorder(params["w_ih_l0"].T).astype(matmul_dtype)              # (I, 4H)
    whh0 = reorder(params["w_hh_l0"].T).astype(matmul_dtype)              # (H, 4H)
    b0 = reorder((params["b_ih_l0"] + params["b_hh_l0"])[None, :]).astype(jnp.float32)
    wih1 = reorder(params["w_ih_l1"].T).astype(matmul_dtype)              # (H, 4H)
    whh1 = reorder(params["w_hh_l1"].T).astype(matmul_dtype)              # (H, 4H)
    b1 = reorder((params["b_ih_l1"] + params["b_hh_l1"])[None, :]).astype(jnp.float32)

    # Lane-dense FC head: pad O up to a multiple of 128 (slice after).
    O_pad = _round_up(O, 128)
    wfc = jnp.pad(params["w_fc"].T, ((0, 0), (0, O_pad - O))).astype(matmul_dtype)
    bfc = jnp.pad(params["b_fc"], (0, O_pad - O))[None, :].astype(jnp.float32)

    # -------- blocking: fill MXU rows; only split batch when it is large -------
    block_b = min(128, _round_up(B, 8))          # multiple of 8, up to 128 rows
    Bp = _round_up(B, block_b)
    TT = _pick_t_chunk(T)                        # time-chunk size (divides T)

    x_tm = jnp.transpose(x, (1, 0, 2))           # (T, B, I) time-major
    pad = Bp - B
    if pad:
        x_tm = jnp.pad(x_tm, ((0, 0), (0, pad), (0, 0)))
        h0 = jnp.pad(h0, ((0, 0), (0, pad), (0, 0)))
        c0 = jnp.pad(c0, ((0, 0), (0, pad), (0, 0)))
    x_tm = x_tm.astype(matmul_dtype)

    # grid = (batch blocks [parallel -> both v7x TCs when >=2], time chunks
    # [arbitrary, innermost; h/c carried in resident hn/cn output blocks]).
    grid = (Bp // block_b, T // TT)

    xmap = lambda b, t: (t, b, 0)
    smap = lambda b, t: (0, b, 0)
    wmap = lambda b, t: (0, 0)

    # Rough VMEM budget -> raise the scoped limit (v5e default is only 16 MiB);
    # capped at 48 MiB so it stays inside v7x's 64 MiB physical VMEM.
    cbytes = jnp.dtype(matmul_dtype).itemsize
    est = (
        2 * TT * block_b * I * cbytes                             # x block (x2 buf)
        + 4 * 2 * 2 * block_b * H * 4                             # h0,c0,hn,cn
        + 2 * (wih0.size + whh0.size + wih1.size + whh1.size + wfc.size) * cbytes
        + 2 * (b0.size + b1.size + bfc.size) * 4
        + 2 * TT * block_b * O_pad * 4                            # out block
        + TT * block_b * 4 * H * 4 + TT * block_b * H * cbytes    # scratch
    )
    vmem_limit = int(np.clip(2 * est, 32 << 20, 48 << 20))

    out_tm, h_n, c_n = pl.pallas_call(
        _two_layer_lstm_kernel,
        out_shape=(
            jax.ShapeDtypeStruct((T, Bp, O_pad), jnp.float32),
            jax.ShapeDtypeStruct((L, Bp, H), jnp.float32),
            jax.ShapeDtypeStruct((L, Bp, H), jnp.float32),
        ),
        grid=grid,
        in_specs=[
            pl.BlockSpec((TT, block_b, I), xmap),
            pl.BlockSpec((L, block_b, H), smap),
            pl.BlockSpec((L, block_b, H), smap),
            # Constant-index weight blocks (TODO(synk): single-buffer at large H).
            pl.BlockSpec(wih0.shape, wmap),
            pl.BlockSpec(whh0.shape, wmap),
            pl.BlockSpec(b0.shape, wmap),
            pl.BlockSpec(wih1.shape, wmap),
            pl.BlockSpec(whh1.shape, wmap),
            pl.BlockSpec(b1.shape, wmap),
            pl.BlockSpec(wfc.shape, wmap),
            pl.BlockSpec(bfc.shape, wmap),
        ],
        out_specs=(
            pl.BlockSpec((TT, block_b, O_pad), xmap),
            pl.BlockSpec((L, block_b, H), smap),   # resident across time chunks
            pl.BlockSpec((L, block_b, H), smap),   # resident across time chunks
        ),
        scratch_shapes=[
            pltpu.VMEM((TT, block_b, 4 * H), jnp.float32),
            pltpu.VMEM((TT, block_b, H), matmul_dtype),
        ],
        compiler_params=pltpu.CompilerParams(
            dimension_semantics=("parallel", "arbitrary"),
            vmem_limit_bytes=vmem_limit,
        ),
    )(x_tm, h0, c0, wih0, whh0, b0, wih1, whh1, b1, wfc, bfc)

    out = jnp.transpose(out_tm[:, :B, :O], (1, 0, 2))             # (B, T, O)
    return out, (h_n[:, :B, :], c_n[:, :B, :])


def lstm_reference(x, h0, c0, params):
    """Pure-JAX reference reproducing nn.LSTM(batch_first) + nn.Linear semantics."""
    B, T, I = x.shape
    H = h0.shape[-1]

    def cell(x_t, h, c, wih, whh, bih, bhh):
        gates = x_t @ wih.T + bih + h @ whh.T + bhh
        i = jax.nn.sigmoid(gates[:, 0 * H:1 * H])
        f = jax.nn.sigmoid(gates[:, 1 * H:2 * H])
        g = jnp.tanh(gates[:, 2 * H:3 * H])
        o = jax.nn.sigmoid(gates[:, 3 * H:4 * H])
        c = f * c + i * g
        h = o * jnp.tanh(c)
        return h, c

    layer_in = x
    hs, cs = [], []
    for l in range(2):
        sfx = f"_l{l}"
        h, c = h0[l], c0[l]
        outs = []
        for t in range(T):
            h, c = cell(layer_in[:, t, :], h, c,
                        params["w_ih" + sfx], params["w_hh" + sfx],
                        params["b_ih" + sfx], params["b_hh" + sfx])
            outs.append(h)
        layer_in = jnp.stack(outs, axis=1)
        hs.append(h)
        cs.append(c)
    out = layer_in @ params["w_fc"].T + params["b_fc"]
    return out, (jnp.stack(hs, 0), jnp.stack(cs, 0))


if __name__ == "__main__":
    # Small shapes implied by the module's forward: x (B, T, input_size),
    # hidden = (h0, c0) each (num_layers, B, hidden_size).
    input_size, hidden_size, output_size, num_layers = 8, 32, 4, 2
    batch, seq = 2, 8

    key = jax.random.PRNGKey(0)
    kp, kx = jax.random.split(key)
    params = init_params(kp, input_size, hidden_size, output_size)
    x = jax.random.normal(kx, (batch, seq, input_size), dtype=jnp.float32)
    h0 = jnp.zeros((num_layers, batch, hidden_size), jnp.float32)
    c0 = jnp.zeros((num_layers, batch, hidden_size), jnp.float32)

    out_ref, (h_ref, c_ref) = lstm_reference(x, h0, c0, params)

    # f32 path: tight check against the reference.
    out, (h_n, c_n) = lstm_forward(x, h0, c0, params, matmul_dtype=jnp.float32)
    jax.block_until_ready((out, h_n, c_n))
    np.testing.assert_allclose(np.asarray(out), np.asarray(out_ref), rtol=2e-3, atol=2e-3)
    np.testing.assert_allclose(np.asarray(h_n), np.asarray(h_ref), rtol=2e-3, atol=2e-3)
    np.testing.assert_allclose(np.asarray(c_n), np.asarray(c_ref), rtol=2e-3, atol=2e-3)

    # bf16 MXU-operand fast path (v6e/v7x): f32 accumulation / state, looser check.
    out_bf, (h_bf, c_bf) = lstm_forward(x, h0, c0, params, matmul_dtype=jnp.bfloat16)
    jax.block_until_ready((out_bf, h_bf, c_bf))
    np.testing.assert_allclose(np.asarray(out_bf), np.asarray(out_ref), rtol=5e-2, atol=5e-2)
    np.testing.assert_allclose(np.asarray(h_bf), np.asarray(h_ref), rtol=5e-2, atol=5e-2)
    np.testing.assert_allclose(np.asarray(c_bf), np.asarray(c_ref), rtol=5e-2, atol=5e-2)

    print("KERNEL_OK")
</pallas_src>

<mosaic_0001>
module attributes {stable_mosaic.version = 11 : i64} {
  func.func @_two_layer_lstm_kernel(%arg0: i32, %arg1: i32, %arg2: memref<8x8x8xf32, #tpu.memory_space<vmem>>, %arg3: memref<2x8x32xf32, #tpu.memory_space<vmem>>, %arg4: memref<2x8x32xf32, #tpu.memory_space<vmem>>, %arg5: memref<8x128xf32, #tpu.memory_space<vmem>>, %arg6: memref<32x128xf32, #tpu.memory_space<vmem>>, %arg7: memref<1x128xf32, #tpu.memory_space<vmem>>, %arg8: memref<32x128xf32, #tpu.memory_space<vmem>>, %arg9: memref<32x128xf32, #tpu.memory_space<vmem>>, %arg10: memref<1x128xf32, #tpu.memory_space<vmem>>, %arg11: memref<32x128xf32, #tpu.memory_space<vmem>>, %arg12: memref<1x128xf32, #tpu.memory_space<vmem>>, %arg13: memref<8x8x128xf32, #tpu.memory_space<vmem>>, %arg14: memref<2x8x32xf32, #tpu.memory_space<vmem>>, %arg15: memref<2x8x32xf32, #tpu.memory_space<vmem>>, %arg16: memref<8x8x128xf32, #tpu.memory_space<vmem>>, %arg17: memref<8x8x32xf32, #tpu.memory_space<vmem>>) attributes {dimension_semantics = [#tpu.dimension_semantics<parallel>, #tpu.dimension_semantics<arbitrary>], iteration_bounds = array<i64: 1, 1>, scalar_prefetch = 0 : i64, scratch_operands = 2 : i64, tpu.core_type = #tpu.core_type<tc>, window_params = [{transform_indices = @transform_0, window_bounds = array<i64: 8, 8, 8>}, {transform_indices = @transform_1, window_bounds = array<i64: 2, 8, 32>}, {transform_indices = @transform_2, window_bounds = array<i64: 2, 8, 32>}, {pipeline_mode = #tpu.pipeline_mode<synchronous>, transform_indices = @transform_3, window_bounds = array<i64: 8, 128>}, {pipeline_mode = #tpu.pipeline_mode<synchronous>, transform_indices = @transform_4, window_bounds = array<i64: 32, 128>}, {pipeline_mode = #tpu.pipeline_mode<synchronous>, transform_indices = @transform_5, window_bounds = array<i64: 1, 128>}, {pipeline_mode = #tpu.pipeline_mode<synchronous>, transform_indices = @transform_6, window_bounds = array<i64: 32, 128>}, {pipeline_mode = #tpu.pipeline_mode<synchronous>, transform_indices = @transform_7, window_bounds = array<i64: 32, 128>}, {pipeline_mode = #tpu.pipeline_mode<synchronous>, transform_indices = @transform_8, window_bounds = array<i64: 1, 128>}, {pipeline_mode = #tpu.pipeline_mode<synchronous>, transform_indices = @transform_9, window_bounds = array<i64: 32, 128>}, {pipeline_mode = #tpu.pipeline_mode<synchronous>, transform_indices = @transform_10, window_bounds = array<i64: 1, 128>}, {transform_indices = @transform_11, window_bounds = array<i64: 8, 8, 128>}, {transform_indices = @transform_12, window_bounds = array<i64: 2, 8, 32>}, {transform_indices = @transform_13, window_bounds = array<i64: 2, 8, 32>}]} {
    %c0_i32 = arith.constant 0 : i32
    %0 = arith.cmpi eq, %arg1, %c0_i32 : i32
    %1 = arith.extui %0 : i1 to i32
    %c0_i32_0 = arith.constant 0 : i32
    %2 = arith.cmpi ne, %1, %c0_i32_0 : i32
    scf.if %2 {
      %c0_197 = arith.constant 0 : index
      %c0_198 = arith.constant 0 : index
      %c0_199 = arith.constant 0 : index
      %484 = vector.load %arg3[%c0_197, %c0_198, %c0_199] : memref<2x8x32xf32, #tpu.memory_space<vmem>>, vector<2x8x32xf32>
      %c0_200 = arith.constant 0 : index
      %c0_201 = arith.constant 0 : index
      %c0_202 = arith.constant 0 : index
      %485 = vector.load %arg14[%c0_200, %c0_201, %c0_202] : memref<2x8x32xf32, #tpu.memory_space<vmem>>, vector<2x8x32xf32>
      tpu.vector_store %arg14[%c0_200, %c0_201, %c0_202], %484 {strides = array<i32>} : memref<2x8x32xf32, #tpu.memory_space<vmem>>, vector<2x8x32xf32>,
      %c0_203 = arith.constant 0 : index
      %c0_204 = arith.constant 0 : index
      %c0_205 = arith.constant 0 : index
      %486 = vector.load %arg4[%c0_203, %c0_204, %c0_205] : memref<2x8x32xf32, #tpu.memory_space<vmem>>, vector<2x8x32xf32>
      %c0_206 = arith.constant 0 : index
      %c0_207 = arith.constant 0 : index
      %c0_208 = arith.constant 0 : index
      %487 = vector.load %arg15[%c0_206, %c0_207, %c0_208] : memref<2x8x32xf32, #tpu.memory_space<vmem>>, vector<2x8x32xf32>
      tpu.vector_store %arg15[%c0_206, %c0_207, %c0_208], %486 {strides = array<i32>} : memref<2x8x32xf32, #tpu.memory_space<vmem>>, vector<2x8x32xf32>,
    } else {
    }
    %c0 = arith.constant 0 : index
    %c0_1 = arith.constant 0 : index
    %c0_2 = arith.constant 0 : index
    %3 = vector.load %arg2[%c0, %c0_1, %c0_2] : memref<8x8x8xf32, #tpu.memory_space<vmem>>, vector<8x8x8xf32>
    %4 = vector.shape_cast %3 : vector<8x8x8xf32> to vector<64x8xf32>
    %c0_3 = arith.constant 0 : index
    %c0_4 = arith.constant 0 : index
    %5 = vector.load %arg5[%c0_3, %c0_4] : memref<8x128xf32, #tpu.memory_space<vmem>>, vector<8x128xf32>
    %cst = arith.constant dense<0.000000e+00> : vector<64x128xf32>
    %6 = tpu.matmul %4, %5, %cst {dimension_numbers = #tpu.dot_dimension_numbers<[1], [0], [0], [1], [0, 0, 1, 1], [], []>} : vector<64x8xf32>, vector<8x128xf32>, vector<64x128xf32> -> vector<64x128xf32>
    %c0_5 = arith.constant 0 : index
    %c0_6 = arith.constant 0 : index
    %7 = vector.load %arg7[%c0_5, %c0_6] : memref<1x128xf32, #tpu.memory_space<vmem>>, vector<1x128xf32>
    %8 = vector.broadcast %7 : vector<1x128xf32> to vector<64x128xf32>
    %9 = arith.addf %6, %8 : vector<64x128xf32>
    %10 = vector.shape_cast %9 : vector<64x128xf32> to vector<8x8x128xf32>
    %c0_7 = arith.constant 0 : index
    %c0_8 = arith.constant 0 : index
    %c0_9 = arith.constant 0 : index
    %11 = vector.load %arg16[%c0_7, %c0_8, %c0_9] : memref<8x8x128xf32, #tpu.memory_space<vmem>>, vector<8x8x128xf32>
    tpu.vector_store %arg16[%c0_7, %c0_8, %c0_9], %10 {strides = array<i32>} : memref<8x8x128xf32, #tpu.memory_space<vmem>>, vector<8x8x128xf32>,
    %c0_10 = arith.constant 0 : index
    %c0_11 = arith.constant 0 : index
    %12 = vector.load %arg6[%c0_10, %c0_11] : memref<32x128xf32, #tpu.memory_space<vmem>>, vector<32x128xf32>
    %c0_12 = arith.constant 0 : index
    %c0_13 = arith.constant 0 : index
    %c0_14 = arith.constant 0 : index
    %13 = vector.load %arg14[%c0_12, %c0_13, %c0_14] : memref<2x8x32xf32, #tpu.memory_space<vmem>>, vector<1x8x32xf32>
    %14 = vector.shape_cast %13 : vector<1x8x32xf32> to vector<8x32xf32>
    %c0_15 = arith.constant 0 : index
    %c0_16 = arith.constant 0 : index
    %c0_17 = arith.constant 0 : index
    %15 = vector.load %arg15[%c0_15, %c0_16, %c0_17] : memref<2x8x32xf32, #tpu.memory_space<vmem>>, vector<1x8x32xf32>
    %16 = vector.shape_cast %15 : vector<1x8x32xf32> to vector<8x32xf32>
    %c0_i32_18 = arith.constant 0 : i32
    %17 = arith.index_cast %c0_i32_18 : i32 to index
    %c0_19 = arith.constant 0 : index
    %c0_20 = arith.constant 0 : index
    %18 = vector.load %arg16[%17, %c0_19, %c0_20] : memref<8x8x128xf32, #tpu.memory_space<vmem>>, vector<1x8x128xf32>
    %19 = vector.shape_cast %18 : vector<1x8x128xf32> to vector<8x128xf32>
    %cst_21 = arith.constant dense<0.000000e+00> : vector<8x128xf32>
    %20 = tpu.matmul %14, %12, %cst_21 {dimension_numbers = #tpu.dot_dimension_numbers<[1], [0], [0], [1], [0, 0, 1, 1], [], []>} : vector<8x32xf32>, vector<32x128xf32>, vector<8x128xf32> -> vector<8x128xf32>
    %21 = arith.addf %19, %20 : vector<8x128xf32>
    %22 = vector.extract_strided_slice %21 {offsets = [0, 0], sizes = [8, 96], strides = [1, 1]} : vector<8x128xf32> to vector<8x96xf32>
    %cst_22 = arith.constant 5.000000e-01 : f32
    %23 = vector.broadcast %cst_22 : f32 to vector<8x96xf32>
    %24 = arith.mulf %23, %22 : vector<8x96xf32>
    %25 = math.tanh %24 : vector<8x96xf32>
    %cst_23 = arith.constant 5.000000e-01 : f32
    %26 = vector.broadcast %cst_23 : f32 to vector<8x96xf32>
    %27 = arith.mulf %26, %25 : vector<8x96xf32>
    %cst_24 = arith.constant 5.000000e-01 : f32
    %28 = vector.broadcast %cst_24 : f32 to vector<8x96xf32>
    %29 = arith.addf %27, %28 : vector<8x96xf32>
    %30 = vector.extract_strided_slice %21 {offsets = [0, 96], sizes = [8, 32], strides = [1, 1]} : vector<8x128xf32> to vector<8x32xf32>
    %31 = math.tanh %30 : vector<8x32xf32>
    %32 = vector.extract_strided_slice %29 {offsets = [0, 0], sizes = [8, 32], strides = [1, 1]} : vector<8x96xf32> to vector<8x32xf32>
    %33 = vector.extract_strided_slice %29 {offsets = [0, 32], sizes = [8, 32], strides = [1, 1]} : vector<8x96xf32> to vector<8x32xf32>
    %34 = vector.extract_strided_slice %29 {offsets = [0, 64], sizes = [8, 32], strides = [1, 1]} : vector<8x96xf32> to vector<8x32xf32>
    %35 = arith.mulf %33, %16 : vector<8x32xf32>
    %36 = arith.mulf %32, %31 : vector<8x32xf32>
    %37 = arith.addf %35, %36 : vector<8x32xf32>
    %38 = math.tanh %37 : vector<8x32xf32>
    %39 = arith.mulf %34, %38 : vector<8x32xf32>
    %40 = arith.index_cast %c0_i32_18 : i32 to index
    %c0_25 = arith.constant 0 : index
    %c0_26 = arith.constant 0 : index
    %41 = vector.load %arg17[%40, %c0_25, %c0_26] : memref<8x8x32xf32, #tpu.memory_space<vmem>>, vector<1x8x32xf32>
    %42 = vector.shape_cast %41 : vector<1x8x32xf32> to vector<8x32xf32>
    %43 = vector.shape_cast %39 : vector<8x32xf32> to vector<1x8x32xf32>
    tpu.vector_store %arg17[%40, %c0_25, %c0_26], %43 {strides = array<i32>} : memref<8x8x32xf32, #tpu.memory_space<vmem>>, vector<1x8x32xf32>,
    %c1_i32 = arith.constant 1 : i32
    %44 = arith.index_cast %c1_i32 : i32 to index
    %c0_27 = arith.constant 0 : index
    %c0_28 = arith.constant 0 : index
    %45 = vector.load %arg16[%44, %c0_27, %c0_28] : memref<8x8x128xf32, #tpu.memory_space<vmem>>, vector<1x8x128xf32>
    %46 = vector.shape_cast %45 : vector<1x8x128xf32> to vector<8x128xf32>
    %cst_29 = arith.constant dense<0.000000e+00> : vector<8x128xf32>
    %47 = tpu.matmul %39, %12, %cst_29 {dimension_numbers = #tpu.dot_dimension_numbers<[1], [0], [0], [1], [0, 0, 1, 1], [], []>} : vector<8x32xf32>, vector<32x128xf32>, vector<8x128xf32> -> vector<8x128xf32>
    %48 = arith.addf %46, %47 : vector<8x128xf32>
    %49 = vector.extract_strided_slice %48 {offsets = [0, 0], sizes = [8, 96], strides = [1, 1]} : vector<8x128xf32> to vector<8x96xf32>
    %cst_30 = arith.constant 5.000000e-01 : f32
    %50 = vector.broadcast %cst_30 : f32 to vector<8x96xf32>
    %51 = arith.mulf %50, %49 : vector<8x96xf32>
    %52 = math.tanh %51 : vector<8x96xf32>
    %cst_31 = arith.constant 5.000000e-01 : f32
    %53 = vector.broadcast %cst_31 : f32 to vector<8x96xf32>
    %54 = arith.mulf %53, %52 : vector<8x96xf32>
    %cst_32 = arith.constant 5.000000e-01 : f32
    %55 = vector.broadcast %cst_32 : f32 to vector<8x96xf32>
    %56 = arith.addf %54, %55 : vector<8x96xf32>
    %57 = vector.extract_strided_slice %48 {offsets = [0, 96], sizes = [8, 32], strides = [1, 1]} : vector<8x128xf32> to vector<8x32xf32>
    %58 = math.tanh %57 : vector<8x32xf32>
    %59 = vector.extract_strided_slice %56 {offsets = [0, 0], sizes = [8, 32], strides = [1, 1]} : vector<8x96xf32> to vector<8x32xf32>
    %60 = vector.extract_strided_slice %56 {offsets = [0, 32], sizes = [8, 32], strides = [1, 1]} : vector<8x96xf32> to vector<8x32xf32>
    %61 = vector.extract_strided_slice %56 {offsets = [0, 64], sizes = [8, 32], strides = [1, 1]} : vector<8x96xf32> to vector<8x32xf32>
    %62 = arith.mulf %60, %37 : vector<8x32xf32>
    %63 = arith.mulf %59, %58 : vector<8x32xf32>
    %64 = arith.addf %62, %63 : vector<8x32xf32>
    %65 = math.tanh %64 : vector<8x32xf32>
    %66 = arith.mulf %61, %65 : vector<8x32xf32>
    %67 = arith.index_cast %c1_i32 : i32 to index
    %c0_33 = arith.constant 0 : index
    %c0_34 = arith.constant 0 : index
    %68 = vector.load %arg17[%67, %c0_33, %c0_34] : memref<8x8x32xf32, #tpu.memory_space<vmem>>, vector<1x8x32xf32>
    %69 = vector.shape_cast %68 : vector<1x8x32xf32> to vector<8x32xf32>
    %70 = vector.shape_cast %66 : vector<8x32xf32> to vector<1x8x32xf32>
    tpu.vector_store %arg17[%67, %c0_33, %c0_34], %70 {strides = array<i32>} : memref<8x8x32xf32, #tpu.memory_space<vmem>>, vector<1x8x32xf32>,
    %c2_i32 = arith.constant 2 : i32
    %71 = arith.index_cast %c2_i32 : i32 to index
    %c0_35 = arith.constant 0 : index
    %c0_36 = arith.constant 0 : index
    %72 = vector.load %arg16[%71, %c0_35, %c0_36] : memref<8x8x128xf32, #tpu.memory_space<vmem>>, vector<1x8x128xf32>
    %73 = vector.shape_cast %72 : vector<1x8x128xf32> to vector<8x128xf32>
    %cst_37 = arith.constant dense<0.000000e+00> : vector<8x128xf32>
    %74 = tpu.matmul %66, %12, %cst_37 {dimension_numbers = #tpu.dot_dimension_numbers<[1], [0], [0], [1], [0, 0, 1, 1], [], []>} : vector<8x32xf32>, vector<32x128xf32>, vector<8x128xf32> -> vector<8x128xf32>
    %75 = arith.addf %73, %74 : vector<8x128xf32>
    %76 = vector.extract_strided_slice %75 {offsets = [0, 0], sizes = [8, 96], strides = [1, 1]} : vector<8x128xf32> to vector<8x96xf32>
    %cst_38 = arith.constant 5.000000e-01 : f32
    %77 = vector.broadcast %cst_38 : f32 to vector<8x96xf32>
    %78 = arith.mulf %77, %76 : vector<8x96xf32>
    %79 = math.tanh %78 : vector<8x96xf32>
    %cst_39 = arith.constant 5.000000e-01 : f32
    %80 = vector.broadcast %cst_39 : f32 to vector<8x96xf32>
    %81 = arith.mulf %80, %79 : vector<8x96xf32>
    %cst_40 = arith.constant 5.000000e-01 : f32
    %82 = vector.broadcast %cst_40 : f32 to vector<8x96xf32>
    %83 = arith.addf %81, %82 : vector<8x96xf32>
    %84 = vector.extract_strided_slice %75 {offsets = [0, 96], sizes = [8, 32], strides = [1, 1]} : vector<8x128xf32> to vector<8x32xf32>
    %85 = math.tanh %84 : vector<8x32xf32>
    %86 = vector.extract_strided_slice %83 {offsets = [0, 0], sizes = [8, 32], strides = [1, 1]} : vector<8x96xf32> to vector<8x32xf32>
    %87 = vector.extract_strided_slice %83 {offsets = [0, 32], sizes = [8, 32], strides = [1, 1]} : vector<8x96xf32> to vector<8x32xf32>
    %88 = vector.extract_strided_slice %83 {offsets = [0, 64], sizes = [8, 32], strides = [1, 1]} : vector<8x96xf32> to vector<8x32xf32>
    %89 = arith.mulf %87, %64 : vector<8x32xf32>
    %90 = arith.mulf %86, %85 : vector<8x32xf32>
    %91 = arith.addf %89, %90 : vector<8x32xf32>
    %92 = math.tanh %91 : vector<8x32xf32>
    %93 = arith.mulf %88, %92 : vector<8x32xf32>
    %94 = arith.index_cast %c2_i32 : i32 to index
    %c0_41 = arith.constant 0 : index
    %c0_42 = arith.constant 0 : index
    %95 = vector.load %arg17[%94, %c0_41, %c0_42] : memref<8x8x32xf32, #tpu.memory_space<vmem>>, vector<1x8x32xf32>
    %96 = vector.shape_cast %95 : vector<1x8x32xf32> to vector<8x32xf32>
    %97 = vector.shape_cast %93 : vector<8x32xf32> to vector<1x8x32xf32>
    tpu.vector_store %arg17[%94, %c0_41, %c0_42], %97 {strides = array<i32>} : memref<8x8x32xf32, #tpu.memory_space<vmem>>, vector<1x8x32xf32>,
    %c3_i32 = arith.constant 3 : i32
    %98 = arith.index_cast %c3_i32 : i32 to index
    %c0_43 = arith.constant 0 : index
    %c0_44 = arith.constant 0 : index
    %99 = vector.load %arg16[%98, %c0_43, %c0_44] : memref<8x8x128xf32, #tpu.memory_space<vmem>>, vector<1x8x128xf32>
    %100 = vector.shape_cast %99 : vector<1x8x128xf32> to vector<8x128xf32>
    %cst_45 = arith.constant dense<0.000000e+00> : vector<8x128xf32>
    %101 = tpu.matmul %93, %12, %cst_45 {dimension_numbers = #tpu.dot_dimension_numbers<[1], [0], [0], [1], [0, 0, 1, 1], [], []>} : vector<8x32xf32>, vector<32x128xf32>, vector<8x128xf32> -> vector<8x128xf32>
    %102 = arith.addf %100, %101 : vector<8x128xf32>
    %103 = vector.extract_strided_slice %102 {offsets = [0, 0], sizes = [8, 96], strides = [1, 1]} : vector<8x128xf32> to vector<8x96xf32>
    %cst_46 = arith.constant 5.000000e-01 : f32
    %104 = vector.broadcast %cst_46 : f32 to vector<8x96xf32>
    %105 = arith.mulf %104, %103 : vector<8x96xf32>
    %106 = math.tanh %105 : vector<8x96xf32>
    %cst_47 = arith.constant 5.000000e-01 : f32
    %107 = vector.broadcast %cst_47 : f32 to vector<8x96xf32>
    %108 = arith.mulf %107, %106 : vector<8x96xf32>
    %cst_48 = arith.constant 5.000000e-01 : f32
    %109 = vector.broadcast %cst_48 : f32 to vector<8x96xf32>
    %110 = arith.addf %108, %109 : vector<8x96xf32>
    %111 = vector.extract_strided_slice %102 {offsets = [0, 96], sizes = [8, 32], strides = [1, 1]} : vector<8x128xf32> to vector<8x32xf32>
    %112 = math.tanh %111 : vector<8x32xf32>
    %113 = vector.extract_strided_slice %110 {offsets = [0, 0], sizes = [8, 32], strides = [1, 1]} : vector<8x96xf32> to vector<8x32xf32>
    %114 = vector.extract_strided_slice %110 {offsets = [0, 32], sizes = [8, 32], strides = [1, 1]} : vector<8x96xf32> to vector<8x32xf32>
    %115 = vector.extract_strided_slice %110 {offsets = [0, 64], sizes = [8, 32], strides = [1, 1]} : vector<8x96xf32> to vector<8x32xf32>
    %116 = arith.mulf %114, %91 : vector<8x32xf32>
    %117 = arith.mulf %113, %112 : vector<8x32xf32>
    %118 = arith.addf %116, %117 : vector<8x32xf32>
    %119 = math.tanh %118 : vector<8x32xf32>
    %120 = arith.mulf %115, %119 : vector<8x32xf32>
    %121 = arith.index_cast %c3_i32 : i32 to index
    %c0_49 = arith.constant 0 : index
    %c0_50 = arith.constant 0 : index
    %122 = vector.load %arg17[%121, %c0_49, %c0_50] : memref<8x8x32xf32, #tpu.memory_space<vmem>>, vector<1x8x32xf32>
    %123 = vector.shape_cast %122 : vector<1x8x32xf32> to vector<8x32xf32>
    %124 = vector.shape_cast %120 : vector<8x32xf32> to vector<1x8x32xf32>
    tpu.vector_store %arg17[%121, %c0_49, %c0_50], %124 {strides = array<i32>} : memref<8x8x32xf32, #tpu.memory_space<vmem>>, vector<1x8x32xf32>,
    %c4_i32 = arith.constant 4 : i32
    %125 = arith.index_cast %c4_i32 : i32 to index
    %c0_51 = arith.constant 0 : index
    %c0_52 = arith.constant 0 : index
    %126 = vector.load %arg16[%125, %c0_51, %c0_52] : memref<8x8x128xf32, #tpu.memory_space<vmem>>, vector<1x8x128xf32>
    %127 = vector.shape_cast %126 : vector<1x8x128xf32> to vector<8x128xf32>
    %cst_53 = arith.constant dense<0.000000e+00> : vector<8x128xf32>
    %128 = tpu.matmul %120, %12, %cst_53 {dimension_numbers = #tpu.dot_dimension_numbers<[1], [0], [0], [1], [0, 0, 1, 1], [], []>} : vector<8x32xf32>, vector<32x128xf32>, vector<8x128xf32> -> vector<8x128xf32>
    %129 = arith.addf %127, %128 : vector<8x128xf32>
    %130 = vector.extract_strided_slice %129 {offsets = [0, 0], sizes = [8, 96], strides = [1, 1]} : vector<8x128xf32> to vector<8x96xf32>
    %cst_54 = arith.constant 5.000000e-01 : f32
    %131 = vector.broadcast %cst_54 : f32 to vector<8x96xf32>
    %132 = arith.mulf %131, %130 : vector<8x96xf32>
    %133 = math.tanh %132 : vector<8x96xf32>
    %cst_55 = arith.constant 5.000000e-01 : f32
    %134 = vector.broadcast %cst_55 : f32 to vector<8x96xf32>
    %135 = arith.mulf %134, %133 : vector<8x96xf32>
    %cst_56 = arith.constant 5.000000e-01 : f32
    %136 = vector.broadcast %cst_56 : f32 to vector<8x96xf32>
    %137 = arith.addf %135, %136 : vector<8x96xf32>
    %138 = vector.extract_strided_slice %129 {offsets = [0, 96], sizes = [8, 32], strides = [1, 1]} : vector<8x128xf32> to vector<8x32xf32>
    %139 = math.tanh %138 : vector<8x32xf32>
    %140 = vector.extract_strided_slice %137 {offsets = [0, 0], sizes = [8, 32], strides = [1, 1]} : vector<8x96xf32> to vector<8x32xf32>
    %141 = vector.extract_strided_slice %137 {offsets = [0, 32], sizes = [8, 32], strides = [1, 1]} : vector<8x96xf32> to vector<8x32xf32>
    %142 = vector.extract_strided_slice %137 {offsets = [0, 64], sizes = [8, 32], strides = [1, 1]} : vector<8x96xf32> to vector<8x32xf32>
    %143 = arith.mulf %141, %118 : vector<8x32xf32>
    %144 = arith.mulf %140, %139 : vector<8x32xf32>
    %145 = arith.addf %143, %144 : vector<8x32xf32>
    %146 = math.tanh %145 : vector<8x32xf32>
    %147 = arith.mulf %142, %146 : vector<8x32xf32>
    %148 = arith.index_cast %c4_i32 : i32 to index
    %c0_57 = arith.constant 0 : index
    %c0_58 = arith.constant 0 : index
    %149 = vector.load %arg17[%148, %c0_57, %c0_58] : memref<8x8x32xf32, #tpu.memory_space<vmem>>, vector<1x8x32xf32>
    %150 = vector.shape_cast %149 : vector<1x8x32xf32> to vector<8x32xf32>
    %151 = vector.shape_cast %147 : vector<8x32xf32> to vector<1x8x32xf32>
    tpu.vector_store %arg17[%148, %c0_57, %c0_58], %151 {strides = array<i32>} : memref<8x8x32xf32, #tpu.memory_space<vmem>>, vector<1x8x32xf32>,
    %c5_i32 = arith.constant 5 : i32
    %152 = arith.index_cast %c5_i32 : i32 to index
    %c0_59 = arith.constant 0 : index
    %c0_60 = arith.constant 0 : index
    %153 = vector.load %arg16[%152, %c0_59, %c0_60] : memref<8x8x128xf32, #tpu.memory_space<vmem>>, vector<1x8x128xf32>
    %154 = vector.shape_cast %153 : vector<1x8x128xf32> to vector<8x128xf32>
    %cst_61 = arith.constant dense<0.000000e+00> : vector<8x128xf32>
    %155 = tpu.matmul %147, %12, %cst_61 {dimension_numbers = #tpu.dot_dimension_numbers<[1], [0], [0], [1], [0, 0, 1, 1], [], []>} : vector<8x32xf32>, vector<32x128xf32>, vector<8x128xf32> -> vector<8x128xf32>
    %156 = arith.addf %154, %155 : vector<8x128xf32>
    %157 = vector.extract_strided_slice %156 {offsets = [0, 0], sizes = [8, 96], strides = [1, 1]} : vector<8x128xf32> to vector<8x96xf32>
    %cst_62 = arith.constant 5.000000e-01 : f32
    %158 = vector.broadcast %cst_62 : f32 to vector<8x96xf32>
    %159 = arith.mulf %158, %157 : vector<8x96xf32>
    %160 = math.tanh %159 : vector<8x96xf32>
    %cst_63 = arith.constant 5.000000e-01 : f32
    %161 = vector.broadcast %cst_63 : f32 to vector<8x96xf32>
    %162 = arith.mulf %161, %160 : vector<8x96xf32>
    %cst_64 = arith.constant 5.000000e-01 : f32
    %163 = vector.broadcast %cst_64 : f32 to vector<8x96xf32>
    %164 = arith.addf %162, %163 : vector<8x96xf32>
    %165 = vector.extract_strided_slice %156 {offsets = [0, 96], sizes = [8, 32], strides = [1, 1]} : vector<8x128xf32> to vector<8x32xf32>
    %166 = math.tanh %165 : vector<8x32xf32>
    %167 = vector.extract_strided_slice %164 {offsets = [0, 0], sizes = [8, 32], strides = [1, 1]} : vector<8x96xf32> to vector<8x32xf32>
    %168 = vector.extract_strided_slice %164 {offsets = [0, 32], sizes = [8, 32], strides = [1, 1]} : vector<8x96xf32> to vector<8x32xf32>
    %169 = vector.extract_strided_slice %164 {offsets = [0, 64], sizes = [8, 32], strides = [1, 1]} : vector<8x96xf32> to vector<8x32xf32>
    %170 = arith.mulf %168, %145 : vector<8x32xf32>
    %171 = arith.mulf %167, %166 : vector<8x32xf32>
    %172 = arith.addf %170, %171 : vector<8x32xf32>
    %173 = math.tanh %172 : vector<8x32xf32>
    %174 = arith.mulf %169, %173 : vector<8x32xf32>
    %175 = arith.index_cast %c5_i32 : i32 to index
    %c0_65 = arith.constant 0 : index
    %c0_66 = arith.constant 0 : index
    %176 = vector.load %arg17[%175, %c0_65, %c0_66] : memref<8x8x32xf32, #tpu.memory_space<vmem>>, vector<1x8x32xf32>
    %177 = vector.shape_cast %176 : vector<1x8x32xf32> to vector<8x32xf32>
    %178 = vector.shape_cast %174 : vector<8x32xf32> to vector<1x8x32xf32>
    tpu.vector_store %arg17[%175, %c0_65, %c0_66], %178 {strides = array<i32>} : memref<8x8x32xf32, #tpu.memory_space<vmem>>, vector<1x8x32xf32>,
    %c6_i32 = arith.constant 6 : i32
    %179 = arith.index_cast %c6_i32 : i32 to index
    %c0_67 = arith.constant 0 : index
    %c0_68 = arith.constant 0 : index
    %180 = vector.load %arg16[%179, %c0_67, %c0_68] : memref<8x8x128xf32, #tpu.memory_space<vmem>>, vector<1x8x128xf32>
    %181 = vector.shape_cast %180 : vector<1x8x128xf32> to vector<8x128xf32>
    %cst_69 = arith.constant dense<0.000000e+00> : vector<8x128xf32>
    %182 = tpu.matmul %174, %12, %cst_69 {dimension_numbers = #tpu.dot_dimension_numbers<[1], [0], [0], [1], [0, 0, 1, 1], [], []>} : vector<8x32xf32>, vector<32x128xf32>, vector<8x128xf32> -> vector<8x128xf32>
    %183 = arith.addf %181, %182 : vector<8x128xf32>
    %184 = vector.extract_strided_slice %183 {offsets = [0, 0], sizes = [8, 96], strides = [1, 1]} : vector<8x128xf32> to vector<8x96xf32>
    %cst_70 = arith.constant 5.000000e-01 : f32
    %185 = vector.broadcast %cst_70 : f32 to vector<8x96xf32>
    %186 = arith.mulf %185, %184 : vector<8x96xf32>
    %187 = math.tanh %186 : vector<8x96xf32>
    %cst_71 = arith.constant 5.000000e-01 : f32
    %188 = vector.broadcast %cst_71 : f32 to vector<8x96xf32>
    %189 = arith.mulf %188, %187 : vector<8x96xf32>
    %cst_72 = arith.constant 5.000000e-01 : f32
    %190 = vector.broadcast %cst_72 : f32 to vector<8x96xf32>
    %191 = arith.addf %189, %190 : vector<8x96xf32>
    %192 = vector.extract_strided_slice %183 {offsets = [0, 96], sizes = [8, 32], strides = [1, 1]} : vector<8x128xf32> to vector<8x32xf32>
    %193 = math.tanh %192 : vector<8x32xf32>
    %194 = vector.extract_strided_slice %191 {offsets = [0, 0], sizes = [8, 32], strides = [1, 1]} : vector<8x96xf32> to vector<8x32xf32>
    %195 = vector.extract_strided_slice %191 {offsets = [0, 32], sizes = [8, 32], strides = [1, 1]} : vector<8x96xf32> to vector<8x32xf32>
    %196 = vector.extract_strided_slice %191 {offsets = [0, 64], sizes = [8, 32], strides = [1, 1]} : vector<8x96xf32> to vector<8x32xf32>
    %197 = arith.mulf %195, %172 : vector<8x32xf32>
    %198 = arith.mulf %194, %193 : vector<8x32xf32>
    %199 = arith.addf %197, %198 : vector<8x32xf32>
    %200 = math.tanh %199 : vector<8x32xf32>
    %201 = arith.mulf %196, %200 : vector<8x32xf32>
    %202 = arith.index_cast %c6_i32 : i32 to index
    %c0_73 = arith.constant 0 : index
    %c0_74 = arith.constant 0 : index
    %203 = vector.load %arg17[%202, %c0_73, %c0_74] : memref<8x8x32xf32, #tpu.memory_space<vmem>>, vector<1x8x32xf32>
    %204 = vector.shape_cast %203 : vector<1x8x32xf32> to vector<8x32xf32>
    %205 = vector.shape_cast %201 : vector<8x32xf32> to vector<1x8x32xf32>
    tpu.vector_store %arg17[%202, %c0_73, %c0_74], %205 {strides = array<i32>} : memref<8x8x32xf32, #tpu.memory_space<vmem>>, vector<1x8x32xf32>,
    %c7_i32 = arith.constant 7 : i32
    %206 = arith.index_cast %c7_i32 : i32 to index
    %c0_75 = arith.constant 0 : index
    %c0_76 = arith.constant 0 : index
    %207 = vector.load %arg16[%206, %c0_75, %c0_76] : memref<8x8x128xf32, #tpu.memory_space<vmem>>, vector<1x8x128xf32>
    %208 = vector.shape_cast %207 : vector<1x8x128xf32> to vector<8x128xf32>
    %cst_77 = arith.constant dense<0.000000e+00> : vector<8x128xf32>
    %209 = tpu.matmul %201, %12, %cst_77 {dimension_numbers = #tpu.dot_dimension_numbers<[1], [0], [0], [1], [0, 0, 1, 1], [], []>} : vector<8x32xf32>, vector<32x128xf32>, vector<8x128xf32> -> vector<8x128xf32>
    %210 = arith.addf %208, %209 : vector<8x128xf32>
    %211 = vector.extract_strided_slice %210 {offsets = [0, 0], sizes = [8, 96], strides = [1, 1]} : vector<8x128xf32> to vector<8x96xf32>
    %cst_78 = arith.constant 5.000000e-01 : f32
    %212 = vector.broadcast %cst_78 : f32 to vector<8x96xf32>
    %213 = arith.mulf %212, %211 : vector<8x96xf32>
    %214 = math.tanh %213 : vector<8x96xf32>
    %cst_79 = arith.constant 5.000000e-01 : f32
    %215 = vector.broadcast %cst_79 : f32 to vector<8x96xf32>
    %216 = arith.mulf %215, %214 : vector<8x96xf32>
    %cst_80 = arith.constant 5.000000e-01 : f32
    %217 = vector.broadcast %cst_80 : f32 to vector<8x96xf32>
    %218 = arith.addf %216, %217 : vector<8x96xf32>
    %219 = vector.extract_strided_slice %210 {offsets = [0, 96], sizes = [8, 32], strides = [1, 1]} : vector<8x128xf32> to vector<8x32xf32>
    %220 = math.tanh %219 : vector<8x32xf32>
    %221 = vector.extract_strided_slice %218 {offsets = [0, 0], sizes = [8, 32], strides = [1, 1]} : vector<8x96xf32> to vector<8x32xf32>
    %222 = vector.extract_strided_slice %218 {offsets = [0, 32], sizes = [8, 32], strides = [1, 1]} : vector<8x96xf32> to vector<8x32xf32>
    %223 = vector.extract_strided_slice %218 {offsets = [0, 64], sizes = [8, 32], strides = [1, 1]} : vector<8x96xf32> to vector<8x32xf32>
    %224 = arith.mulf %222, %199 : vector<8x32xf32>
    %225 = arith.mulf %221, %220 : vector<8x32xf32>
    %226 = arith.addf %224, %225 : vector<8x32xf32>
    %227 = math.tanh %226 : vector<8x32xf32>
    %228 = arith.mulf %223, %227 : vector<8x32xf32>
    %229 = arith.index_cast %c7_i32 : i32 to index
    %c0_81 = arith.constant 0 : index
    %c0_82 = arith.constant 0 : index
    %230 = vector.load %arg17[%229, %c0_81, %c0_82] : memref<8x8x32xf32, #tpu.memory_space<vmem>>, vector<1x8x32xf32>
    %231 = vector.shape_cast %230 : vector<1x8x32xf32> to vector<8x32xf32>
    %232 = vector.shape_cast %228 : vector<8x32xf32> to vector<1x8x32xf32>
    tpu.vector_store %arg17[%229, %c0_81, %c0_82], %232 {strides = array<i32>} : memref<8x8x32xf32, #tpu.memory_space<vmem>>, vector<1x8x32xf32>,
    %c8_i32 = arith.constant 8 : i32
    %c0_83 = arith.constant 0 : index
    %c0_84 = arith.constant 0 : index
    %c0_85 = arith.constant 0 : index
    %233 = vector.load %arg14[%c0_83, %c0_84, %c0_85] : memref<2x8x32xf32, #tpu.memory_space<vmem>>, vector<1x8x32xf32>
    %234 = vector.shape_cast %233 : vector<1x8x32xf32> to vector<8x32xf32>
    %235 = vector.shape_cast %228 : vector<8x32xf32> to vector<1x8x32xf32>
    tpu.vector_store %arg14[%c0_83, %c0_84, %c0_85], %235 {strides = array<i32>} : memref<2x8x32xf32, #tpu.memory_space<vmem>>, vector<1x8x32xf32>,
    %c0_86 = arith.constant 0 : index
    %c0_87 = arith.constant 0 : index
    %c0_88 = arith.constant 0 : index
    %236 = vector.load %arg15[%c0_86, %c0_87, %c0_88] : memref<2x8x32xf32, #tpu.memory_space<vmem>>, vector<1x8x32xf32>
    %237 = vector.shape_cast %236 : vector<1x8x32xf32> to vector<8x32xf32>
    %238 = vector.shape_cast %226 : vector<8x32xf32> to vector<1x8x32xf32>
    tpu.vector_store %arg15[%c0_86, %c0_87, %c0_88], %238 {strides = array<i32>} : memref<2x8x32xf32, #tpu.memory_space<vmem>>, vector<1x8x32xf32>,
    %c0_89 = arith.constant 0 : index
    %c0_90 = arith.constant 0 : index
    %c0_91 = arith.constant 0 : index
    %239 = vector.load %arg17[%c0_89, %c0_90, %c0_91] : memref<8x8x32xf32, #tpu.memory_space<vmem>>, vector<8x8x32xf32>
    %240 = vector.shape_cast %239 : vector<8x8x32xf32> to vector<64x32xf32>
    %c0_92 = arith.constant 0 : index
    %c0_93 = arith.constant 0 : index
    %241 = vector.load %arg8[%c0_92, %c0_93] : memref<32x128xf32, #tpu.memory_space<vmem>>, vector<32x128xf32>
    %cst_94 = arith.constant dense<0.000000e+00> : vector<64x128xf32>
    %242 = tpu.matmul %240, %241, %cst_94 {dimension_numbers = #tpu.dot_dimension_numbers<[1], [0], [0], [1], [0, 0, 1, 1], [], []>} : vector<64x32xf32>, vector<32x128xf32>, vector<64x128xf32> -> vector<64x128xf32>
    %c0_95 = arith.constant 0 : index
    %c0_96 = arith.constant 0 : index
    %243 = vector.load %arg10[%c0_95, %c0_96] : memref<1x128xf32, #tpu.memory_space<vmem>>, vector<1x128xf32>
    %244 = vector.broadcast %243 : vector<1x128xf32> to vector<64x128xf32>
    %245 = arith.addf %242, %244 : vector<64x128xf32>
    %246 = vector.shape_cast %245 : vector<64x128xf32> to vector<8x8x128xf32>
    %c0_97 = arith.constant 0 : index
    %c0_98 = arith.constant 0 : index
    %c0_99 = arith.constant 0 : index
    %247 = vector.load %arg16[%c0_97, %c0_98, %c0_99] : memref<8x8x128xf32, #tpu.memory_space<vmem>>, vector<8x8x128xf32>
    tpu.vector_store %arg16[%c0_97, %c0_98, %c0_99], %246 {strides = array<i32>} : memref<8x8x128xf32, #tpu.memory_space<vmem>>, vector<8x8x128xf32>,
    %c0_100 = arith.constant 0 : index
    %c0_101 = arith.constant 0 : index
    %248 = vector.load %arg9[%c0_100, %c0_101] : memref<32x128xf32, #tpu.memory_space<vmem>>, vector<32x128xf32>
    %c1 = arith.constant 1 : index
    %c0_102 = arith.constant 0 : index
    %c0_103 = arith.constant 0 : index
    %249 = vector.load %arg14[%c1, %c0_102, %c0_103] : memref<2x8x32xf32, #tpu.memory_space<vmem>>, vector<1x8x32xf32>
    %250 = vector.shape_cast %249 : vector<1x8x32xf32> to vector<8x32xf32>
    %c1_104 = arith.constant 1 : index
    %c0_105 = arith.constant 0 : index
    %c0_106 = arith.constant 0 : index
    %251 = vector.load %arg15[%c1_104, %c0_105, %c0_106] : memref<2x8x32xf32, #tpu.memory_space<vmem>>, vector<1x8x32xf32>
    %252 = vector.shape_cast %251 : vector<1x8x32xf32> to vector<8x32xf32>
    %c0_i32_107 = arith.constant 0 : i32
    %253 = arith.index_cast %c0_i32_107 : i32 to index
    %c0_108 = arith.constant 0 : index
    %c0_109 = arith.constant 0 : index
    %254 = vector.load %arg16[%253, %c0_108, %c0_109] : memref<8x8x128xf32, #tpu.memory_space<vmem>>, vector<1x8x128xf32>
    %255 = vector.shape_cast %254 : vector<1x8x128xf32> to vector<8x128xf32>
    %cst_110 = arith.constant dense<0.000000e+00> : vector<8x128xf32>
    %256 = tpu.matmul %250, %248, %cst_110 {dimension_numbers = #tpu.dot_dimension_numbers<[1], [0], [0], [1], [0, 0, 1, 1], [], []>} : vector<8x32xf32>, vector<32x128xf32>, vector<8x128xf32> -> vector<8x128xf32>
    %257 = arith.addf %255, %256 : vector<8x128xf32>
    %258 = vector.extract_strided_slice %257 {offsets = [0, 0], sizes = [8, 96], strides = [1, 1]} : vector<8x128xf32> to vector<8x96xf32>
    %cst_111 = arith.constant 5.000000e-01 : f32
    %259 = vector.broadcast %cst_111 : f32 to vector<8x96xf32>
    %260 = arith.mulf %259, %258 : vector<8x96xf32>
    %261 = math.tanh %260 : vector<8x96xf32>
    %cst_112 = arith.constant 5.000000e-01 : f32
    %262 = vector.broadcast %cst_112 : f32 to vector<8x96xf32>
    %263 = arith.mulf %262, %261 : vector<8x96xf32>
    %cst_113 = arith.constant 5.000000e-01 : f32
    %264 = vector.broadcast %cst_113 : f32 to vector<8x96xf32>
    %265 = arith.addf %263, %264 : vector<8x96xf32>
    %266 = vector.extract_strided_slice %257 {offsets = [0, 96], sizes = [8, 32], strides = [1, 1]} : vector<8x128xf32> to vector<8x32xf32>
    %267 = math.tanh %266 : vector<8x32xf32>
    %268 = vector.extract_strided_slice %265 {offsets = [0, 0], sizes = [8, 32], strides = [1, 1]} : vector<8x96xf32> to vector<8x32xf32>
    %269 = vector.extract_strided_slice %265 {offsets = [0, 32], sizes = [8, 32], strides = [1, 1]} : vector<8x96xf32> to vector<8x32xf32>
    %270 = vector.extract_strided_slice %265 {offsets = [0, 64], sizes = [8, 32], strides = [1, 1]} : vector<8x96xf32> to vector<8x32xf32>
    %271 = arith.mulf %269, %252 : vector<8x32xf32>
    %272 = arith.mulf %268, %267 : vector<8x32xf32>
    %273 = arith.addf %271, %272 : vector<8x32xf32>
    %274 = math.tanh %273 : vector<8x32xf32>
    %275 = arith.mulf %270, %274 : vector<8x32xf32>
    %276 = arith.index_cast %c0_i32_107 : i32 to index
    %c0_114 = arith.constant 0 : index
    %c0_115 = arith.constant 0 : index
    %277 = vector.load %arg17[%276, %c0_114, %c0_115] : memref<8x8x32xf32, #tpu.memory_space<vmem>>, vector<1x8x32xf32>
    %278 = vector.shape_cast %277 : vector<1x8x32xf32> to vector<8x32xf32>
    %279 = vector.shape_cast %275 : vector<8x32xf32> to vector<1x8x32xf32>
    tpu.vector_store %arg17[%276, %c0_114, %c0_115], %279 {strides = array<i32>} : memref<8x8x32xf32, #tpu.memory_space<vmem>>, vector<1x8x32xf32>,
    %c1_i32_116 = arith.constant 1 : i32
    %280 = arith.index_cast %c1_i32_116 : i32 to index
    %c0_117 = arith.constant 0 : index
    %c0_118 = arith.constant 0 : index
    %281 = vector.load %arg16[%280, %c0_117, %c0_118] : memref<8x8x128xf32, #tpu.memory_space<vmem>>, vector<1x8x128xf32>
    %282 = vector.shape_cast %281 : vector<1x8x128xf32> to vector<8x128xf32>
    %cst_119 = arith.constant dense<0.000000e+00> : vector<8x128xf32>
    %283 = tpu.matmul %275, %248, %cst_119 {dimension_numbers = #tpu.dot_dimension_numbers<[1], [0], [0], [1], [0, 0, 1, 1], [], []>} : vector<8x32xf32>, vector<32x128xf32>, vector<8x128xf32> -> vector<8x128xf32>
    %284 = arith.addf %282, %283 : vector<8x128xf32>
    %285 = vector.extract_strided_slice %284 {offsets = [0, 0], sizes = [8, 96], strides = [1, 1]} : vector<8x128xf32> to vector<8x96xf32>
    %cst_120 = arith.constant 5.000000e-01 : f32
    %286 = vector.broadcast %cst_120 : f32 to vector<8x96xf32>
    %287 = arith.mulf %286, %285 : vector<8x96xf32>
    %288 = math.tanh %287 : vector<8x96xf32>
    %cst_121 = arith.constant 5.000000e-01 : f32
    %289 = vector.broadcast %cst_121 : f32 to vector<8x96xf32>
    %290 = arith.mulf %289, %288 : vector<8x96xf32>
    %cst_122 = arith.constant 5.000000e-01 : f32
    %291 = vector.broadcast %cst_122 : f32 to vector<8x96xf32>
    %292 = arith.addf %290, %291 : vector<8x96xf32>
    %293 = vector.extract_strided_slice %284 {offsets = [0, 96], sizes = [8, 32], strides = [1, 1]} : vector<8x128xf32> to vector<8x32xf32>
    %294 = math.tanh %293 : vector<8x32xf32>
    %295 = vector.extract_strided_slice %292 {offsets = [0, 0], sizes = [8, 32], strides = [1, 1]} : vector<8x96xf32> to vector<8x32xf32>
    %296 = vector.extract_strided_slice %292 {offsets = [0, 32], sizes = [8, 32], strides = [1, 1]} : vector<8x96xf32> to vector<8x32xf32>
    %297 = vector.extract_strided_slice %292 {offsets = [0, 64], sizes = [8, 32], strides = [1, 1]} : vector<8x96xf32> to vector<8x32xf32>
    %298 = arith.mulf %296, %273 : vector<8x32xf32>
    %299 = arith.mulf %295, %294 : vector<8x32xf32>
    %300 = arith.addf %298, %299 : vector<8x32xf32>
    %301 = math.tanh %300 : vector<8x32xf32>
    %302 = arith.mulf %297, %301 : vector<8x32xf32>
    %303 = arith.index_cast %c1_i32_116 : i32 to index
    %c0_123 = arith.constant 0 : index
    %c0_124 = arith.constant 0 : index
    %304 = vector.load %arg17[%303, %c0_123, %c0_124] : memref<8x8x32xf32, #tpu.memory_space<vmem>>, vector<1x8x32xf32>
    %305 = vector.shape_cast %304 : vector<1x8x32xf32> to vector<8x32xf32>
    %306 = vector.shape_cast %302 : vector<8x32xf32> to vector<1x8x32xf32>
    tpu.vector_store %arg17[%303, %c0_123, %c0_124], %306 {strides = array<i32>} : memref<8x8x32xf32, #tpu.memory_space<vmem>>, vector<1x8x32xf32>,
    %c2_i32_125 = arith.constant 2 : i32
    %307 = arith.index_cast %c2_i32_125 : i32 to index
    %c0_126 = arith.constant 0 : index
    %c0_127 = arith.constant 0 : index
    %308 = vector.load %arg16[%307, %c0_126, %c0_127] : memref<8x8x128xf32, #tpu.memory_space<vmem>>, vector<1x8x128xf32>
    %309 = vector.shape_cast %308 : vector<1x8x128xf32> to vector<8x128xf32>
    %cst_128 = arith.constant dense<0.000000e+00> : vector<8x128xf32>
    %310 = tpu.matmul %302, %248, %cst_128 {dimension_numbers = #tpu.dot_dimension_numbers<[1], [0], [0], [1], [0, 0, 1, 1], [], []>} : vector<8x32xf32>, vector<32x128xf32>, vector<8x128xf32> -> vector<8x128xf32>
    %311 = arith.addf %309, %310 : vector<8x128xf32>
    %312 = vector.extract_strided_slice %311 {offsets = [0, 0], sizes = [8, 96], strides = [1, 1]} : vector<8x128xf32> to vector<8x96xf32>
    %cst_129 = arith.constant 5.000000e-01 : f32
    %313 = vector.broadcast %cst_129 : f32 to vector<8x96xf32>
    %314 = arith.mulf %313, %312 : vector<8x96xf32>
    %315 = math.tanh %314 : vector<8x96xf32>
    %cst_130 = arith.constant 5.000000e-01 : f32
    %316 = vector.broadcast %cst_130 : f32 to vector<8x96xf32>
    %317 = arith.mulf %316, %315 : vector<8x96xf32>
    %cst_131 = arith.constant 5.000000e-01 : f32
    %318 = vector.broadcast %cst_131 : f32 to vector<8x96xf32>
    %319 = arith.addf %317, %318 : vector<8x96xf32>
    %320 = vector.extract_strided_slice %311 {offsets = [0, 96], sizes = [8, 32], strides = [1, 1]} : vector<8x128xf32> to vector<8x32xf32>
    %321 = math.tanh %320 : vector<8x32xf32>
    %322 = vector.extract_strided_slice %319 {offsets = [0, 0], sizes = [8, 32], strides = [1, 1]} : vector<8x96xf32> to vector<8x32xf32>
    %323 = vector.extract_strided_slice %319 {offsets = [0, 32], sizes = [8, 32], strides = [1, 1]} : vector<8x96xf32> to vector<8x32xf32>
    %324 = vector.extract_strided_slice %319 {offsets = [0, 64], sizes = [8, 32], strides = [1, 1]} : vector<8x96xf32> to vector<8x32xf32>
    %325 = arith.mulf %323, %300 : vector<8x32xf32>
    %326 = arith.mulf %322, %321 : vector<8x32xf32>
    %327 = arith.addf %325, %326 : vector<8x32xf32>
    %328 = math.tanh %327 : vector<8x32xf32>
    %329 = arith.mulf %324, %328 : vector<8x32xf32>
    %330 = arith.index_cast %c2_i32_125 : i32 to index
    %c0_132 = arith.constant 0 : index
    %c0_133 = arith.constant 0 : index
    %331 = vector.load %arg17[%330, %c0_132, %c0_133] : memref<8x8x32xf32, #tpu.memory_space<vmem>>, vector<1x8x32xf32>
    %332 = vector.shape_cast %331 : vector<1x8x32xf32> to vector<8x32xf32>
    %333 = vector.shape_cast %329 : vector<8x32xf32> to vector<1x8x32xf32>
    tpu.vector_store %arg17[%330, %c0_132, %c0_133], %333 {strides = array<i32>} : memref<8x8x32xf32, #tpu.memory_space<vmem>>, vector<1x8x32xf32>,
    %c3_i32_134 = arith.constant 3 : i32
    %334 = arith.index_cast %c3_i32_134 : i32 to index
    %c0_135 = arith.constant 0 : index
    %c0_136 = arith.constant 0 : index
    %335 = vector.load %arg16[%334, %c0_135, %c0_136] : memref<8x8x128xf32, #tpu.memory_space<vmem>>, vector<1x8x128xf32>
    %336 = vector.shape_cast %335 : vector<1x8x128xf32> to vector<8x128xf32>
    %cst_137 = arith.constant dense<0.000000e+00> : vector<8x128xf32>
    %337 = tpu.matmul %329, %248, %cst_137 {dimension_numbers = #tpu.dot_dimension_numbers<[1], [0], [0], [1], [0, 0, 1, 1], [], []>} : vector<8x32xf32>, vector<32x128xf32>, vector<8x128xf32> -> vector<8x128xf32>
    %338 = arith.addf %336, %337 : vector<8x128xf32>
    %339 = vector.extract_strided_slice %338 {offsets = [0, 0], sizes = [8, 96], strides = [1, 1]} : vector<8x128xf32> to vector<8x96xf32>
    %cst_138 = arith.constant 5.000000e-01 : f32
    %340 = vector.broadcast %cst_138 : f32 to vector<8x96xf32>
    %341 = arith.mulf %340, %339 : vector<8x96xf32>
    %342 = math.tanh %341 : vector<8x96xf32>
    %cst_139 = arith.constant 5.000000e-01 : f32
    %343 = vector.broadcast %cst_139 : f32 to vector<8x96xf32>
    %344 = arith.mulf %343, %342 : vector<8x96xf32>
    %cst_140 = arith.constant 5.000000e-01 : f32
    %345 = vector.broadcast %cst_140 : f32 to vector<8x96xf32>
    %346 = arith.addf %344, %345 : vector<8x96xf32>
    %347 = vector.extract_strided_slice %338 {offsets = [0, 96], sizes = [8, 32], strides = [1, 1]} : vector<8x128xf32> to vector<8x32xf32>
    %348 = math.tanh %347 : vector<8x32xf32>
    %349 = vector.extract_strided_slice %346 {offsets = [0, 0], sizes = [8, 32], strides = [1, 1]} : vector<8x96xf32> to vector<8x32xf32>
    %350 = vector.extract_strided_slice %346 {offsets = [0, 32], sizes = [8, 32], strides = [1, 1]} : vector<8x96xf32> to vector<8x32xf32>
    %351 = vector.extract_strided_slice %346 {offsets = [0, 64], sizes = [8, 32], strides = [1, 1]} : vector<8x96xf32> to vector<8x32xf32>
    %352 = arith.mulf %350, %327 : vector<8x32xf32>
    %353 = arith.mulf %349, %348 : vector<8x32xf32>
    %354 = arith.addf %352, %353 : vector<8x32xf32>
    %355 = math.tanh %354 : vector<8x32xf32>
    %356 = arith.mulf %351, %355 : vector<8x32xf32>
    %357 = arith.index_cast %c3_i32_134 : i32 to index
    %c0_141 = arith.constant 0 : index
    %c0_142 = arith.constant 0 : index
    %358 = vector.load %arg17[%357, %c0_141, %c0_142] : memref<8x8x32xf32, #tpu.memory_space<vmem>>, vector<1x8x32xf32>
    %359 = vector.shape_cast %358 : vector<1x8x32xf32> to vector<8x32xf32>
    %360 = vector.shape_cast %356 : vector<8x32xf32> to vector<1x8x32xf32>
    tpu.vector_store %arg17[%357, %c0_141, %c0_142], %360 {strides = array<i32>} : memref<8x8x32xf32, #tpu.memory_space<vmem>>, vector<1x8x32xf32>,
    %c4_i32_143 = arith.constant 4 : i32
    %361 = arith.index_cast %c4_i32_143 : i32 to index
    %c0_144 = arith.constant 0 : index
    %c0_145 = arith.constant 0 : index
    %362 = vector.load %arg16[%361, %c0_144, %c0_145] : memref<8x8x128xf32, #tpu.memory_space<vmem>>, vector<1x8x128xf32>
    %363 = vector.shape_cast %362 : vector<1x8x128xf32> to vector<8x128xf32>
    %cst_146 = arith.constant dense<0.000000e+00> : vector<8x128xf32>
    %364 = tpu.matmul %356, %248, %cst_146 {dimension_numbers = #tpu.dot_dimension_numbers<[1], [0], [0], [1], [0, 0, 1, 1], [], []>} : vector<8x32xf32>, vector<32x128xf32>, vector<8x128xf32> -> vector<8x128xf32>
    %365 = arith.addf %363, %364 : vector<8x128xf32>
    %366 = vector.extract_strided_slice %365 {offsets = [0, 0], sizes = [8, 96], strides = [1, 1]} : vector<8x128xf32> to vector<8x96xf32>
    %cst_147 = arith.constant 5.000000e-01 : f32
    %367 = vector.broadcast %cst_147 : f32 to vector<8x96xf32>
    %368 = arith.mulf %367, %366 : vector<8x96xf32>
    %369 = math.tanh %368 : vector<8x96xf32>
    %cst_148 = arith.constant 5.000000e-01 : f32
    %370 = vector.broadcast %cst_148 : f32 to vector<8x96xf32>
    %371 = arith.mulf %370, %369 : vector<8x96xf32>
    %cst_149 = arith.constant 5.000000e-01 : f32
    %372 = vector.broadcast %cst_149 : f32 to vector<8x96xf32>
    %373 = arith.addf %371, %372 : vector<8x96xf32>
    %374 = vector.extract_strided_slice %365 {offsets = [0, 96], sizes = [8, 32], strides = [1, 1]} : vector<8x128xf32> to vector<8x32xf32>
    %375 = math.tanh %374 : vector<8x32xf32>
    %376 = vector.extract_strided_slice %373 {offsets = [0, 0], sizes = [8, 32], strides = [1, 1]} : vector<8x96xf32> to vector<8x32xf32>
    %377 = vector.extract_strided_slice %373 {offsets = [0, 32], sizes = [8, 32], strides = [1, 1]} : vector<8x96xf32> to vector<8x32xf32>
    %378 = vector.extract_strided_slice %373 {offsets = [0, 64], sizes = [8, 32], strides = [1, 1]} : vector<8x96xf32> to vector<8x32xf32>
    %379 = arith.mulf %377, %354 : vector<8x32xf32>
    %380 = arith.mulf %376, %375 : vector<8x32xf32>
    %381 = arith.addf %379, %380 : vector<8x32xf32>
    %382 = math.tanh %381 : vector<8x32xf32>
    %383 = arith.mulf %378, %382 : vector<8x32xf32>
    %384 = arith.index_cast %c4_i32_143 : i32 to index
    %c0_150 = arith.constant 0 : index
    %c0_151 = arith.constant 0 : index
    %385 = vector.load %arg17[%384, %c0_150, %c0_151] : memref<8x8x32xf32, #tpu.memory_space<vmem>>, vector<1x8x32xf32>
    %386 = vector.shape_cast %385 : vector<1x8x32xf32> to vector<8x32xf32>
    %387 = vector.shape_cast %383 : vector<8x32xf32> to vector<1x8x32xf32>
    tpu.vector_store %arg17[%384, %c0_150, %c0_151], %387 {strides = array<i32>} : memref<8x8x32xf32, #tpu.memory_space<vmem>>, vector<1x8x32xf32>,
    %c5_i32_152 = arith.constant 5 : i32
    %388 = arith.index_cast %c5_i32_152 : i32 to index
    %c0_153 = arith.constant 0 : index
    %c0_154 = arith.constant 0 : index
    %389 = vector.load %arg16[%388, %c0_153, %c0_154] : memref<8x8x128xf32, #tpu.memory_space<vmem>>, vector<1x8x128xf32>
    %390 = vector.shape_cast %389 : vector<1x8x128xf32> to vector<8x128xf32>
    %cst_155 = arith.constant dense<0.000000e+00> : vector<8x128xf32>
    %391 = tpu.matmul %383, %248, %cst_155 {dimension_numbers = #tpu.dot_dimension_numbers<[1], [0], [0], [1], [0, 0, 1, 1], [], []>} : vector<8x32xf32>, vector<32x128xf32>, vector<8x128xf32> -> vector<8x128xf32>
    %392 = arith.addf %390, %391 : vector<8x128xf32>
    %393 = vector.extract_strided_slice %392 {offsets = [0, 0], sizes = [8, 96], strides = [1, 1]} : vector<8x128xf32> to vector<8x96xf32>
    %cst_156 = arith.constant 5.000000e-01 : f32
    %394 = vector.broadcast %cst_156 : f32 to vector<8x96xf32>
    %395 = arith.mulf %394, %393 : vector<8x96xf32>
    %396 = math.tanh %395 : vector<8x96xf32>
    %cst_157 = arith.constant 5.000000e-01 : f32
    %397 = vector.broadcast %cst_157 : f32 to vector<8x96xf32>
    %398 = arith.mulf %397, %396 : vector<8x96xf32>
    %cst_158 = arith.constant 5.000000e-01 : f32
    %399 = vector.broadcast %cst_158 : f32 to vector<8x96xf32>
    %400 = arith.addf %398, %399 : vector<8x96xf32>
    %401 = vector.extract_strided_slice %392 {offsets = [0, 96], sizes = [8, 32], strides = [1, 1]} : vector<8x128xf32> to vector<8x32xf32>
    %402 = math.tanh %401 : vector<8x32xf32>
    %403 = vector.extract_strided_slice %400 {offsets = [0, 0], sizes = [8, 32], strides = [1, 1]} : vector<8x96xf32> to vector<8x32xf32>
    %404 = vector.extract_strided_slice %400 {offsets = [0, 32], sizes = [8, 32], strides = [1, 1]} : vector<8x96xf32> to vector<8x32xf32>
    %405 = vector.extract_strided_slice %400 {offsets = [0, 64], sizes = [8, 32], strides = [1, 1]} : vector<8x96xf32> to vector<8x32xf32>
    %406 = arith.mulf %404, %381 : vector<8x32xf32>
    %407 = arith.mulf %403, %402 : vector<8x32xf32>
    %408 = arith.addf %406, %407 : vector<8x32xf32>
    %409 = math.tanh %408 : vector<8x32xf32>
    %410 = arith.mulf %405, %409 : vector<8x32xf32>
    %411 = arith.index_cast %c5_i32_152 : i32 to index
    %c0_159 = arith.constant 0 : index
    %c0_160 = arith.constant 0 : index
    %412 = vector.load %arg17[%411, %c0_159, %c0_160] : memref<8x8x32xf32, #tpu.memory_space<vmem>>, vector<1x8x32xf32>
    %413 = vector.shape_cast %412 : vector<1x8x32xf32> to vector<8x32xf32>
    %414 = vector.shape_cast %410 : vector<8x32xf32> to vector<1x8x32xf32>
    tpu.vector_store %arg17[%411, %c0_159, %c0_160], %414 {strides = array<i32>} : memref<8x8x32xf32, #tpu.memory_space<vmem>>, vector<1x8x32xf32>,
    %c6_i32_161 = arith.constant 6 : i32
    %415 = arith.index_cast %c6_i32_161 : i32 to index
    %c0_162 = arith.constant 0 : index
    %c0_163 = arith.constant 0 : index
    %416 = vector.load %arg16[%415, %c0_162, %c0_163] : memref<8x8x128xf32, #tpu.memory_space<vmem>>, vector<1x8x128xf32>
    %417 = vector.shape_cast %416 : vector<1x8x128xf32> to vector<8x128xf32>
    %cst_164 = arith.constant dense<0.000000e+00> : vector<8x128xf32>
    %418 = tpu.matmul %410, %248, %cst_164 {dimension_numbers = #tpu.dot_dimension_numbers<[1], [0], [0], [1], [0, 0, 1, 1], [], []>} : vector<8x32xf32>, vector<32x128xf32>, vector<8x128xf32> -> vector<8x128xf32>
    %419 = arith.addf %417, %418 : vector<8x128xf32>
    %420 = vector.extract_strided_slice %419 {offsets = [0, 0], sizes = [8, 96], strides = [1, 1]} : vector<8x128xf32> to vector<8x96xf32>
    %cst_165 = arith.constant 5.000000e-01 : f32
    %421 = vector.broadcast %cst_165 : f32 to vector<8x96xf32>
    %422 = arith.mulf %421, %420 : vector<8x96xf32>
    %423 = math.tanh %422 : vector<8x96xf32>
    %cst_166 = arith.constant 5.000000e-01 : f32
    %424 = vector.broadcast %cst_166 : f32 to vector<8x96xf32>
    %425 = arith.mulf %424, %423 : vector<8x96xf32>
    %cst_167 = arith.constant 5.000000e-01 : f32
    %426 = vector.broadcast %cst_167 : f32 to vector<8x96xf32>
    %427 = arith.addf %425, %426 : vector<8x96xf32>
    %428 = vector.extract_strided_slice %419 {offsets = [0, 96], sizes = [8, 32], strides = [1, 1]} : vector<8x128xf32> to vector<8x32xf32>
    %429 = math.tanh %428 : vector<8x32xf32>
    %430 = vector.extract_strided_slice %427 {offsets = [0, 0], sizes = [8, 32], strides = [1, 1]} : vector<8x96xf32> to vector<8x32xf32>
    %431 = vector.extract_strided_slice %427 {offsets = [0, 32], sizes = [8, 32], strides = [1, 1]} : vector<8x96xf32> to vector<8x32xf32>
    %432 = vector.extract_strided_slice %427 {offsets = [0, 64], sizes = [8, 32], strides = [1, 1]} : vector<8x96xf32> to vector<8x32xf32>
    %433 = arith.mulf %431, %408 : vector<8x32xf32>
    %434 = arith.mulf %430, %429 : vector<8x32xf32>
    %435 = arith.addf %433, %434 : vector<8x32xf32>
    %436 = math.tanh %435 : vector<8x32xf32>
    %437 = arith.mulf %432, %436 : vector<8x32xf32>
    %438 = arith.index_cast %c6_i32_161 : i32 to index
    %c0_168 = arith.constant 0 : index
    %c0_169 = arith.constant 0 : index
    %439 = vector.load %arg17[%438, %c0_168, %c0_169] : memref<8x8x32xf32, #tpu.memory_space<vmem>>, vector<1x8x32xf32>
    %440 = vector.shape_cast %439 : vector<1x8x32xf32> to vector<8x32xf32>
    %441 = vector.shape_cast %437 : vector<8x32xf32> to vector<1x8x32xf32>
    tpu.vector_store %arg17[%438, %c0_168, %c0_169], %441 {strides = array<i32>} : memref<8x8x32xf32, #tpu.memory_space<vmem>>, vector<1x8x32xf32>,
    %c7_i32_170 = arith.constant 7 : i32
    %442 = arith.index_cast %c7_i32_170 : i32 to index
    %c0_171 = arith.constant 0 : index
    %c0_172 = arith.constant 0 : index
    %443 = vector.load %arg16[%442, %c0_171, %c0_172] : memref<8x8x128xf32, #tpu.memory_space<vmem>>, vector<1x8x128xf32>
    %444 = vector.shape_cast %443 : vector<1x8x128xf32> to vector<8x128xf32>
    %cst_173 = arith.constant dense<0.000000e+00> : vector<8x128xf32>
    %445 = tpu.matmul %437, %248, %cst_173 {dimension_numbers = #tpu.dot_dimension_numbers<[1], [0], [0], [1], [0, 0, 1, 1], [], []>} : vector<8x32xf32>, vector<32x128xf32>, vector<8x128xf32> -> vector<8x128xf32>
    %446 = arith.addf %444, %445 : vector<8x128xf32>
    %447 = vector.extract_strided_slice %446 {offsets = [0, 0], sizes = [8, 96], strides = [1, 1]} : vector<8x128xf32> to vector<8x96xf32>
    %cst_174 = arith.constant 5.000000e-01 : f32
    %448 = vector.broadcast %cst_174 : f32 to vector<8x96xf32>
    %449 = arith.mulf %448, %447 : vector<8x96xf32>
    %450 = math.tanh %449 : vector<8x96xf32>
    %cst_175 = arith.constant 5.000000e-01 : f32
    %451 = vector.broadcast %cst_175 : f32 to vector<8x96xf32>
    %452 = arith.mulf %451, %450 : vector<8x96xf32>
    %cst_176 = arith.constant 5.000000e-01 : f32
    %453 = vector.broadcast %cst_176 : f32 to vector<8x96xf32>
    %454 = arith.addf %452, %453 : vector<8x96xf32>
    %455 = vector.extract_strided_slice %446 {offsets = [0, 96], sizes = [8, 32], strides = [1, 1]} : vector<8x128xf32> to vector<8x32xf32>
    %456 = math.tanh %455 : vector<8x32xf32>
    %457 = vector.extract_strided_slice %454 {offsets = [0, 0], sizes = [8, 32], strides = [1, 1]} : vector<8x96xf32> to vector<8x32xf32>
    %458 = vector.extract_strided_slice %454 {offsets = [0, 32], sizes = [8, 32], strides = [1, 1]} : vector<8x96xf32> to vector<8x32xf32>
    %459 = vector.extract_strided_slice %454 {offsets = [0, 64], sizes = [8, 32], strides = [1, 1]} : vector<8x96xf32> to vector<8x32xf32>
    %460 = arith.mulf %458, %435 : vector<8x32xf32>
    %461 = arith.mulf %457, %456 : vector<8x32xf32>
    %462 = arith.addf %460, %461 : vector<8x32xf32>
    %463 = math.tanh %462 : vector<8x32xf32>
    %464 = arith.mulf %459, %463 : vector<8x32xf32>
    %465 = arith.index_cast %c7_i32_170 : i32 to index
    %c0_177 = arith.constant 0 : index
    %c0_178 = arith.constant 0 : index
    %466 = vector.load %arg17[%465, %c0_177, %c0_178] : memref<8x8x32xf32, #tpu.memory_space<vmem>>, vector<1x8x32xf32>
    %467 = vector.shape_cast %466 : vector<1x8x32xf32> to vector<8x32xf32>
    %468 = vector.shape_cast %464 : vector<8x32xf32> to vector<1x8x32xf32>
    tpu.vector_store %arg17[%465, %c0_177, %c0_178], %468 {strides = array<i32>} : memref<8x8x32xf32, #tpu.memory_space<vmem>>, vector<1x8x32xf32>,
    %c8_i32_179 = arith.constant 8 : i32
    %c1_180 = arith.constant 1 : index
    %c0_181 = arith.constant 0 : index
    %c0_182 = arith.constant 0 : index
    %469 = vector.load %arg14[%c1_180, %c0_181, %c0_182] : memref<2x8x32xf32, #tpu.memory_space<vmem>>, vector<1x8x32xf32>
    %470 = vector.shape_cast %469 : vector<1x8x32xf32> to vector<8x32xf32>
    %471 = vector.shape_cast %464 : vector<8x32xf32> to vector<1x8x32xf32>
    tpu.vector_store %arg14[%c1_180, %c0_181, %c0_182], %471 {strides = array<i32>} : memref<2x8x32xf32, #tpu.memory_space<vmem>>, vector<1x8x32xf32>,
    %c1_183 = arith.constant 1 : index
    %c0_184 = arith.constant 0 : index
    %c0_185 = arith.constant 0 : index
    %472 = vector.load %arg15[%c1_183, %c0_184, %c0_185] : memref<2x8x32xf32, #tpu.memory_space<vmem>>, vector<1x8x32xf32>
    %473 = vector.shape_cast %472 : vector<1x8x32xf32> to vector<8x32xf32>
    %474 = vector.shape_cast %462 : vector<8x32xf32> to vector<1x8x32xf32>
    tpu.vector_store %arg15[%c1_183, %c0_184, %c0_185], %474 {strides = array<i32>} : memref<2x8x32xf32, #tpu.memory_space<vmem>>, vector<1x8x32xf32>,
    %c0_186 = arith.constant 0 : index
    %c0_187 = arith.constant 0 : index
    %c0_188 = arith.constant 0 : index
    %475 = vector.load %arg17[%c0_186, %c0_187, %c0_188] : memref<8x8x32xf32, #tpu.memory_space<vmem>>, vector<8x8x32xf32>
    %476 = vector.shape_cast %475 : vector<8x8x32xf32> to vector<64x32xf32>
    %c0_189 = arith.constant 0 : index
    %c0_190 = arith.constant 0 : index
    %477 = vector.load %arg11[%c0_189, %c0_190] : memref<32x128xf32, #tpu.memory_space<vmem>>, vector<32x128xf32>
    %cst_191 = arith.constant dense<0.000000e+00> : vector<64x128xf32>
    %478 = tpu.matmul %476, %477, %cst_191 {dimension_numbers = #tpu.dot_dimension_numbers<[1], [0], [0], [1], [0, 0, 1, 1], [], []>} : vector<64x32xf32>, vector<32x128xf32>, vector<64x128xf32> -> vector<64x128xf32>
    %c0_192 = arith.constant 0 : index
    %c0_193 = arith.constant 0 : index
    %479 = vector.load %arg12[%c0_192, %c0_193] : memref<1x128xf32, #tpu.memory_space<vmem>>, vector<1x128xf32>
    %480 = vector.broadcast %479 : vector<1x128xf32> to vector<64x128xf32>
    %481 = arith.addf %478, %480 : vector<64x128xf32>
    %482 = vector.shape_cast %481 : vector<64x128xf32> to vector<8x8x128xf32>
    %c0_194 = arith.constant 0 : index
    %c0_195 = arith.constant 0 : index
    %c0_196 = arith.constant 0 : index
    %483 = vector.load %arg13[%c0_194, %c0_195, %c0_196] : memref<8x8x128xf32, #tpu.memory_space<vmem>>, vector<8x8x128xf32>
    tpu.vector_store %arg13[%c0_194, %c0_195, %c0_196], %482 {strides = array<i32>} : memref<8x8x128xf32, #tpu.memory_space<vmem>>, vector<8x8x128xf32>,
    return
  }
  func.func @transform_0(%arg0: i32, %arg1: i32) -> (i32, i32, i32) {
    %c0_i32 = arith.constant 0 : i32
    %c0_i32_0 = arith.constant 0 : i32
    return %arg1, %arg0, %c0_i32 : i32, i32, i32
  }
  func.func @transform_1(%arg0: i32, %arg1: i32) -> (i32, i32, i32) {
    %c0_i32 = arith.constant 0 : i32
    %c0_i32_0 = arith.constant 0 : i32
    %c0_i32_1 = arith.constant 0 : i32
    return %c0_i32, %arg0, %c0_i32_0 : i32, i32, i32
  }
  func.func @transform_2(%arg0: i32, %arg1: i32) -> (i32, i32, i32) {
    %c0_i32 = arith.constant 0 : i32
    %c0_i32_0 = arith.constant 0 : i32
    %c0_i32_1 = arith.constant 0 : i32
    return %c0_i32, %arg0, %c0_i32_0 : i32, i32, i32
  }
  func.func @transform_3(%arg0: i32, %arg1: i32) -> (i32, i32) {
    %c0_i32 = arith.constant 0 : i32
    %c0_i32_0 = arith.constant 0 : i32
    %c0_i32_1 = arith.constant 0 : i32
    return %c0_i32, %c0_i32_0 : i32, i32
  }
  func.func @transform_4(%arg0: i32, %arg1: i32) -> (i32, i32) {
    %c0_i32 = arith.constant 0 : i32
    %c0_i32_0 = arith.constant 0 : i32
    %c0_i32_1 = arith.constant 0 : i32
    return %c0_i32, %c0_i32_0 : i32, i32
  }
  func.func @transform_5(%arg0: i32, %arg1: i32) -> (i32, i32) {
    %c0_i32 = arith.constant 0 : i32
    %c0_i32_0 = arith.constant 0 : i32
    %c0_i32_1 = arith.constant 0 : i32
    return %c0_i32, %c0_i32_0 : i32, i32
  }
  func.func @transform_6(%arg0: i32, %arg1: i32) -> (i32, i32) {
    %c0_i32 = arith.constant 0 : i32
    %c0_i32_0 = arith.constant 0 : i32
    %c0_i32_1 = arith.constant 0 : i32
    return %c0_i32, %c0_i32_0 : i32, i32
  }
  func.func @transform_7(%arg0: i32, %arg1: i32) -> (i32, i32) {
    %c0_i32 = arith.constant 0 : i32
    %c0_i32_0 = arith.constant 0 : i32
    %c0_i32_1 = arith.constant 0 : i32
    return %c0_i32, %c0_i32_0 : i32, i32
  }
  func.func @transform_8(%arg0: i32, %arg1: i32) -> (i32, i32) {
    %c0_i32 = arith.constant 0 : i32
    %c0_i32_0 = arith.constant 0 : i32
    %c0_i32_1 = arith.constant 0 : i32
    return %c0_i32, %c0_i32_0 : i32, i32
  }
  func.func @transform_9(%arg0: i32, %arg1: i32) -> (i32, i32) {
    %c0_i32 = arith.constant 0 : i32
    %c0_i32_0 = arith.constant 0 : i32
    %c0_i32_1 = arith.constant 0 : i32
    return %c0_i32, %c0_i32_0 : i32, i32
  }
  func.func @transform_10(%arg0: i32, %arg1: i32) -> (i32, i32) {
    %c0_i32 = arith.constant 0 : i32
    %c0_i32_0 = arith.constant 0 : i32
    %c0_i32_1 = arith.constant 0 : i32
    return %c0_i32, %c0_i32_0 : i32, i32
  }
  func.func @transform_11(%arg0: i32, %arg1: i32) -> (i32, i32, i32) {
    %c0_i32 = arith.constant 0 : i32
    %c0_i32_0 = arith.constant 0 : i32
    return %arg1, %arg0, %c0_i32 : i32, i32, i32
  }
  func.func @transform_12(%arg0: i32, %arg1: i32) -> (i32, i32, i32) {
    %c0_i32 = arith.constant 0 : i32
    %c0_i32_0 = arith.constant 0 : i32
    %c0_i32_1 = arith.constant 0 : i32
    return %c0_i32, %arg0, %c0_i32_0 : i32, i32, i32
  }
  func.func @transform_13(%arg0: i32, %arg1: i32) -> (i32, i32, i32) {
    %c0_i32 = arith.constant 0 : i32
    %c0_i32_0 = arith.constant 0 : i32
    %c0_i32_1 = arith.constant 0 : i32
    return %c0_i32, %arg0, %c0_i32_0 : i32, i32, i32
  }
}

</mosaic_0001>

<llo_original>
// kernel: lstm_forward.1
$region0: #{lstm_forward.1}
  #allocation0 [shape = 'u32[]', space=smem, size = 0x4, offset = 0x4, fixed_abs, tag = 'smem constant byte address 0x4 - core index']
  #allocation1 [shape = 'u32[144,128]{1,0:T(1,128)}', space=vmem, size = 0x12000, scoped, tag = 'internal scratch']
  #allocation2 [shape = 'f32[8,8,128]{2,1,0:T(8,128)}', space=vmem, size = 0x8000, scoped, tag = 'scratch operand']
  #allocation3 [shape = 'f32[8,8,32]{2,1,0:T(8,128)}', space=vmem, size = 0x8000, scoped, tag = 'scratch operand']
  %s0 = inlined_call_operand.vmem [shape: f32[8,8,8], index: 0, kind: input, shape index: {}]
  %s1 = inlined_call_operand.vmem [shape: f32[2,8,32], index: 1, kind: input, shape index: {}]
  %s2 = inlined_call_operand.vmem [shape: f32[2,8,32], index: 2, kind: input, shape index: {}]
  %s3 = inlined_call_operand.vmem [shape: f32[8,128], index: 3, kind: input, shape index: {}]
  %s4 = inlined_call_operand.vmem [shape: f32[32,128], index: 4, kind: input, shape index: {}]
  %s5 = inlined_call_operand.vmem [shape: f32[1,128], index: 5, kind: input, shape index: {}]
  %s6 = inlined_call_operand.vmem [shape: f32[32,128], index: 6, kind: input, shape index: {}]
  %s7 = inlined_call_operand.vmem [shape: f32[32,128], index: 7, kind: input, shape index: {}]
  %s8 = inlined_call_operand.vmem [shape: f32[1,128], index: 8, kind: input, shape index: {}]
  %s9 = inlined_call_operand.vmem [shape: f32[32,128], index: 9, kind: input, shape index: {}]
  %s10 = inlined_call_operand.vmem [shape: f32[1,128], index: 10, kind: input, shape index: {}]
  %s11 = inlined_call_operand.vmem [shape: f32[8,8,128], index: 11, kind: output, shape index: {0}]
  %s12 = inlined_call_operand.vmem [shape: f32[2,8,32], index: 12, kind: output, shape index: {1}]
  %s13 = inlined_call_operand.vmem [shape: f32[2,8,32], index: 13, kind: output, shape index: {2}]
  %14 = xla_tuple %s11, %s12, %s13
  %s15 = sld [smem:[#allocation0]]
  $region74: #{lstm_forward.1} parent=0
    _
  %s17 = ssub.s32 1, %s15
  %s18 = scalar_select 0, %s17, %s15
  // Predicated region
  $region2: #{lstm_forward.1} parent=0 // pred_check
    _
  $region3: #{lstm_forward.1} parent=0 // pred_check_branch
    %20 = sbr.rel (0) target = $region5
  $region4: #{lstm_forward.1} parent=0 // pred_region
    _
  $region5: #{lstm_forward.1} parent=0 // pred_fallthru
    _
  // Predicated region
  $region6: #{lstm_forward.1} parent=0 // pred_check
    _
  $region7: #{lstm_forward.1} parent=0 // pred_check_branch
    %22 = sbr.rel (0) target = $region9
  $region8: #{lstm_forward.1} parent=0 // pred_region
    _
  $region9: #{lstm_forward.1} parent=0 // pred_fallthru
    _
  // Predicated region
  $region10: #{lstm_forward.1} parent=0 // pred_check
    _
  $region11: #{lstm_forward.1} parent=0 // pred_check_branch
    %24 = sbr.rel (0) target = $region13
  $region12: #{lstm_forward.1} parent=0 // pred_region
    _
  $region13: #{lstm_forward.1} parent=0 // pred_fallthru
    _
  // Predicated region
  $region14: #{lstm_forward.1} parent=0 // pred_check
    _
  $region15: #{lstm_forward.1} parent=0 // pred_check_branch
    %26 = sbr.rel (0) target = $region17
  $region16: #{lstm_forward.1} parent=0 // pred_region
    _
  $region17: #{lstm_forward.1} parent=0 // pred_fallthru
    _
  // Predicated region
  $region18: #{lstm_forward.1} parent=0 // pred_check
    _
  $region19: #{lstm_forward.1} parent=0 // pred_check_branch
    %28 = sbr.rel (0) target = $region21
  $region20: #{lstm_forward.1} parent=0 // pred_region
    _
  $region21: #{lstm_forward.1} parent=0 // pred_fallthru
    _
  // Predicated region
  $region22: #{lstm_forward.1} parent=0 // pred_check
    _
  $region23: #{lstm_forward.1} parent=0 // pred_check_branch
    %30 = sbr.rel (0) target = $region25
  $region24: #{lstm_forward.1} parent=0 // pred_region
    _
  $region25: #{lstm_forward.1} parent=0 // pred_fallthru
    _
  // Predicated region
  $region26: #{lstm_forward.1} parent=0 // pred_check
    _
  $region27: #{lstm_forward.1} parent=0 // pred_check_branch
    %32 = sbr.rel (0) target = $region29
  $region28: #{lstm_forward.1} parent=0 // pred_region
    _
  $region29: #{lstm_forward.1} parent=0 // pred_fallthru
    _
  // Predicated region
  $region30: #{lstm_forward.1} parent=0 // pred_check
    _
  $region31: #{lstm_forward.1} parent=0 // pred_check_branch
    %34 = sbr.rel (0) target = $region33
  $region32: #{lstm_forward.1} parent=0 // pred_region
    _
  $region33: #{lstm_forward.1} parent=0 // pred_fallthru
    _
  // Predicated region
  $region34: #{lstm_forward.1} parent=0 // pred_check
    _
  $region35: #{lstm_forward.1} parent=0 // pred_check_branch
    %36 = sbr.rel (0) target = $region37
  $region36: #{lstm_forward.1} parent=0 // pred_region
    _
  $region37: #{lstm_forward.1} parent=0 // pred_fallthru
    _
  // Predicated region
  $region38: #{lstm_forward.1} parent=0 // pred_check
    _
  $region39: #{lstm_forward.1} parent=0 // pred_check_branch
    %38 = sbr.rel (0) target = $region41
  $region40: #{lstm_forward.1} parent=0 // pred_region
    _
  $region41: #{lstm_forward.1} parent=0 // pred_fallthru
    _
  // Predicated region
  $region42: #{lstm_forward.1} parent=0 // pred_check
    _
  $region43: #{lstm_forward.1} parent=0 // pred_check_branch
    %40 = sbr.rel (0) target = $region45
  $region44: #{lstm_forward.1} parent=0 // pred_region
    _
  $region45: #{lstm_forward.1} parent=0 // pred_fallthru
    _
  %p41 = scmp.eq.s32.totalorder 0, 0
  // Predicated region
  $region46: #{lstm_forward.1} parent=0 // pred_check
    %p42 = pneg %p41
  $region47: #{lstm_forward.1} parent=0 // pred_check_branch
    %44 = sbr.rel (%p42) target = $region49
  $region48: #{lstm_forward.1} parent=0 // pred_region
    %v45 = vld [vmem:[%s1] sm:$0xff]
    %v46 = vld [vmem:[%s1 + $0x8] sm:$0xff]
    %vm47 = vcmask 261120
    %48 = vst.msk [vmem:[%s12] sm:$0xff] %vm47, %v45
    %49 = vst.msk [vmem:[%s12 + $0x8] sm:$0xff] %vm47, %v46
    %v50 = vld [vmem:[%s2] sm:$0xff]
    %v51 = vld [vmem:[%s2 + $0x8] sm:$0xff]
    %52 = vst.msk [vmem:[%s13] sm:$0xff] %vm47, %v50
    %53 = vst.msk [vmem:[%s13 + $0x8] sm:$0xff] %vm47, %v51
  $region49: #{lstm_forward.1} parent=0 // pred_fallthru
    _
  %v54 = vld [vmem:[%s0] sm:$0xff]
  %v55 = vld [vmem:[%s0 + $0x8] sm:$0xff]
  %v56 = vld [vmem:[%s0 + $0x10] sm:$0xff]
  %v57 = vld [vmem:[%s0 + $0x18] sm:$0xff]
  %v58 = vld [vmem:[%s0 + $0x20] sm:$0xff]
  %v59 = vld [vmem:[%s0 + $0x28] sm:$0xff]
  %v60 = vld [vmem:[%s0 + $0x30] sm:$0xff]
  %v61 = vld [vmem:[%s0 + $0x38] sm:$0xff]
  %v62 = vld [vmem:[%s3] sm:$0xff]
  %v63 = vld [vmem:[%s5] sm:$0x1]
  %v65 = vlaneseq
  %v66 = vshrl.u32 %v65, 7
  %v67 = vsub.s32 0, %v66
  %v68 = vrot.slane %v63, %v67
  %vm70 = vcmask 64512
  %v72 = vsel %vm70, %v54, 0
  %v75 = vsel %vm70, %v55, 0
  %v78 = vsel %vm70, %v56, 0
  %v81 = vsel %vm70, %v57, 0
  %v84 = vsel %vm70, %v58, 0
  %v87 = vsel %vm70, %v59, 0
  %v90 = vsel %vm70, %v60, 0
  %v93 = vsel %vm70, %v61, 0
  %95 = vmatprep.subr.mxu0 0.0
  %96 = vmatpush1.msra.mxu0 0.0
  %97 = vmatprep.subr.mxu0 0.0
  %98 = vmatpush1.msra.mxu0 0.0
  %99 = vmatprep.subr.mxu0 0.0
  %100 = vmatpush1.msra.mxu0 0.0
  %101 = vmatprep.subr.mxu0 0.0
  %102 = vmatpush1.msra.mxu0 0.0
  %103 = vmatprep.subr.mxu0 0.0
  %104 = vmatpush1.msra.mxu0 0.0
  %105 = vmatprep.subr.mxu0 0.0
  %106 = vmatpush1.msra.mxu0 0.0
  %107 = vmatprep.subr.mxu0 0.0
  %108 = vmatpush1.msra.mxu0 0.0
  %109 = vmatprep.subr.mxu0 0.0
  %110 = vmatpush1.msra.mxu0 0.0
  %111 = vmatprep.subr.mxu0 0.0
  %112 = vmatpush1.msra.mxu0 0.0
  %113 = vmatprep.subr.mxu0 0.0
  %114 = vmatpush1.msra.mxu0 0.0
  %115 = vmatprep.subr.mxu0 0.0
  %116 = vmatpush1.msra.mxu0 0.0
  %117 = vmatprep.subr.mxu0 0.0
  %118 = vmatpush1.msra.mxu0 0.0
  %119 = vmatprep.subr.mxu0 0.0
  %120 = vmatpush1.msra.mxu0 0.0
  %121 = vmatprep.subr.mxu0 0.0
  %122 = vmatpush1.msra.mxu0 0.0
  %123 = vmatprep.subr.mxu0 0.0
  %124 = vmatpush1.msra.mxu0 0.0
  %125 = vmatprep.subr.mxu0 0.0
  %126 = vmatpush1.msra.mxu0 %v62
  %127 = vmatprep.subr.mxu0 0.0
  %128 = vmatpush2.msra.mxu0 0.0
  %129 = vmatprep.subr.mxu0 0.0
  %130 = vmatpush2.msra.mxu0 0.0
  %131 = vmatprep.subr.mxu0 0.0
  %132 = vmatpush2.msra.mxu0 0.0
  %133 = vmatprep.subr.mxu0 0.0
  %134 = vmatpush2.msra.mxu0 0.0
  %135 = vmatprep.subr.mxu0 0.0
  %136 = vmatpush2.msra.mxu0 0.0
  %137 = vmatprep.subr.mxu0 0.0
  %138 = vmatpush2.msra.mxu0 0.0
  %139 = vmatprep.subr.mxu0 0.0
  %140 = vmatpush2.msra.mxu0 0.0
  %141 = vmatprep.subr.mxu0 0.0
  %142 = vmatpush2.msra.mxu0 0.0
  %143 = vmatprep.subr.mxu0 0.0
  %144 = vmatpush2.msra.mxu0 0.0
  %145 = vmatprep.subr.mxu0 0.0
  %146 = vmatpush2.msra.mxu0 0.0
  %147 = vmatprep.subr.mxu0 0.0
  %148 = vmatpush2.msra.mxu0 0.0
  %149 = vmatprep.subr.mxu0 0.0
  %150 = vmatpush2.msra.mxu0 0.0
  %151 = vmatprep.subr.mxu0 0.0
  %152 = vmatpush2.msra.mxu0 0.0
  %153 = vmatprep.subr.mxu0 0.0
  %154 = vmatpush2.msra.mxu0 0.0
  %155 = vmatprep.subr.mxu0 0.0
  %156 = vmatpush2.msra.mxu0 0.0
  %157 = vmatprep.subr.mxu0 0.0
  %158 = vmatpush2.msra.mxu0 0.0
  %159 = vmatprep.mubr.f32.mxu0 0.0
  %160 = vmatmul.mubr.f32.gmra.mxu0 %v72
  %v161 = vpop.f32.mrf.mxu0
  %v162 = vadd.f32 %v68, %v161
  %v163 = vpop.f32.mrf.mxu0
  %164 = vmatprep.mubr.f32.mxu0 0.0
  %165 = vmatmul.mubr.f32.gmra.mxu0 %v75
  %v166 = vpop.f32.mrf.mxu0
  %v167 = vadd.f32 %v68, %v166
  %v168 = vpop.f32.mrf.mxu0
  %169 = vmatprep.mubr.f32.mxu0 0.0
  %170 = vmatmul.mubr.f32.gmra.mxu0 %v78
  %v171 = vpop.f32.mrf.mxu0
  %v172 = vadd.f32 %v68, %v171
  %v173 = vpop.f32.mrf.mxu0
  %174 = vmatprep.mubr.f32.mxu0 0.0
  %175 = vmatmul.mubr.f32.gmra.mxu0 %v81
  %v176 = vpop.f32.mrf.mxu0
  %v177 = vadd.f32 %v68, %v176
  %v178 = vpop.f32.mrf.mxu0
  %179 = vmatprep.mubr.f32.mxu0 0.0
  %180 = vmatmul.mubr.f32.gmra.mxu0 %v84
  %v181 = vpop.f32.mrf.mxu0
  %v182 = vadd.f32 %v68, %v181
  %v183 = vpop.f32.mrf.mxu0
  %184 = vmatprep.mubr.f32.mxu0 0.0
  %185 = vmatmul.mubr.f32.gmra.mxu0 %v87
  %v186 = vpop.f32.mrf.mxu0
  %v187 = vadd.f32 %v68, %v186
  %v188 = vpop.f32.mrf.mxu0
  %189 = vmatprep.mubr.f32.mxu0 0.0
  %190 = vmatmul.mubr.f32.gmra.mxu0 %v90
  %v191 = vpop.f32.mrf.mxu0
  %v192 = vadd.f32 %v68, %v191
  %v193 = vpop.f32.mrf.mxu0
  %194 = vmatprep.mubr.f32.mxu0 0.0
  %195 = vmatmul.mubr.f32.gmra.mxu0 %v93
  %v196 = vpop.f32.mrf.mxu0
  %v197 = vadd.f32 %v68, %v196
  %v198 = vpop.f32.mrf.mxu0
  %199 = vdwg.mxu0
  %200 = vst [vmem:[#allocation2] sm:$0xff] %v162
  %201 = vst [vmem:[#allocation2 + $0x8] sm:$0xff] %v167
  %202 = vst [vmem:[#allocation2 + $0x10] sm:$0xff] %v172
  %203 = vst [vmem:[#allocation2 + $0x18] sm:$0xff] %v177
  %204 = vst [vmem:[#allocation2 + $0x20] sm:$0xff] %v182
  %205 = vst [vmem:[#allocation2 + $0x28] sm:$0xff] %v187
  %206 = vst [vmem:[#allocation2 + $0x30] sm:$0xff] %v192
  %207 = vst [vmem:[#allocation2 + $0x38] sm:$0xff] %v197
  %v208 = vld [vmem:[%s4] sm:$0xff]
  %v209 = vld [vmem:[%s4 + $0x8] sm:$0xff]
  %v210 = vld [vmem:[%s4 + $0x10] sm:$0xff]
  %v211 = vld [vmem:[%s4 + $0x18] sm:$0xff]
  %v212 = vld [vmem:[%s12] sm:$0xff]
  %v213 = vld [vmem:[%s13] sm:$0xff]
  %v214 = vld [vmem:[#allocation2] sm:$0xff]
  %vm215 = vcmask 261120
  %v217 = vsel %vm215, %v212, 0
  %219 = vmatprep.subr.mxu0 0.0
  %220 = vmatpush1.msra.mxu0 0.0
  %221 = vmatprep.subr.mxu0 0.0
  %222 = vmatpush1.msra.mxu0 0.0
  %223 = vmatprep.subr.mxu0 0.0
  %224 = vmatpush1.msra.mxu0 0.0
  %225 = vmatprep.subr.mxu0 0.0
  %226 = vmatpush1.msra.mxu0 0.0
  %227 = vmatprep.subr.mxu0 0.0
  %228 = vmatpush1.msra.mxu0 0.0
  %229 = vmatprep.subr.mxu0 0.0
  %230 = vmatpush1.msra.mxu0 0.0
  %231 = vmatprep.subr.mxu0 0.0
  %232 = vmatpush1.msra.mxu0 0.0
  %233 = vmatprep.subr.mxu0 0.0
  %234 = vmatpush1.msra.mxu0 0.0
  %235 = vmatprep.subr.mxu0 0.0
  %236 = vmatpush1.msra.mxu0 0.0
  %237 = vmatprep.subr.mxu0 0.0
  %238 = vmatpush1.msra.mxu0 0.0
  %239 = vmatprep.subr.mxu0 0.0
  %240 = vmatpush1.msra.mxu0 0.0
  %241 = vmatprep.subr.mxu0 0.0
  %242 = vmatpush1.msra.mxu0 0.0
  %243 = vmatprep.subr.mxu0 0.0
  %244 = vmatpush1.msra.mxu0 %v211
  %245 = vmatprep.subr.mxu0 0.0
  %246 = vmatpush1.msra.mxu0 %v210
  %247 = vmatprep.subr.mxu0 0.0
  %248 = vmatpush1.msra.mxu0 %v209
  %249 = vmatprep.subr.mxu0 0.0
  %250 = vmatpush1.msra.mxu0 %v208
  %251 = vmatprep.subr.mxu0 0.0
  %252 = vmatpush2.msra.mxu0 0.0
  %253 = vmatprep.subr.mxu0 0.0
  %254 = vmatpush2.msra.mxu0 0.0
  %255 = vmatprep.subr.mxu0 0.0
  %256 = vmatpush2.msra.mxu0 0.0
  %257 = vmatprep.subr.mxu0 0.0
  %258 = vmatpush2.msra.mxu0 0.0
  %259 = vmatprep.subr.mxu0 0.0
  %260 = vmatpush2.msra.mxu0 0.0
  %261 = vmatprep.subr.mxu0 0.0
  %262 = vmatpush2.msra.mxu0 0.0
  %263 = vmatprep.subr.mxu0 0.0
  %264 = vmatpush2.msra.mxu0 0.0
  %265 = vmatprep.subr.mxu0 0.0
  %266 = vmatpush2.msra.mxu0 0.0
  %267 = vmatprep.subr.mxu0 0.0
  %268 = vmatpush2.msra.mxu0 0.0
  %269 = vmatprep.subr.mxu0 0.0
  %270 = vmatpush2.msra.mxu0 0.0
  %271 = vmatprep.subr.mxu0 0.0
  %272 = vmatpush2.msra.mxu0 0.0
  %273 = vmatprep.subr.mxu0 0.0
  %274 = vmatpush2.msra.mxu0 0.0
  %275 = vmatprep.subr.mxu0 0.0
  %276 = vmatpush2.msra.mxu0 0.0
  %277 = vmatprep.subr.mxu0 0.0
  %278 = vmatpush2.msra.mxu0 0.0
  %279 = vmatprep.subr.mxu0 0.0
  %280 = vmatpush2.msra.mxu0 0.0
  %281 = vmatprep.subr.mxu0 0.0
  %282 = vmatpush2.msra.mxu0 0.0
  %283 = vmatprep.mubr.f32.mxu0 0.0
  %284 = vmatmul.mubr.f32.gmra.mxu0 %v217
  %v285 = vpop.f32.mrf.mxu0
  %v286 = vadd.f32 0.0, %v285
  %v287 = vpop.f32.mrf.mxu0
  %288 = vdwg.mxu0
  %v289 = vadd.f32 %v214, %v286
  %v290 = vmul.f32 %v289, 0.5
  %v291 = vtanh.pop %v290
  %v292 = vmul.f32 %v291, 0.5
  %v293 = vadd.f32 %v292, 0.5
  %v294 = vtanh.pop %v289
  %296 = vrot.lane.b32.xlu0 %v213, 32
  %v297 = vpop.permute.xlu0 %296
  %v299 = vmul.f32 %v293, %v297
  %301 = vrot.lane.b32.xlu0 %v294, 32
  %v302 = vpop.permute.xlu0 %301
  %v304 = vmul.f32 %v293, %v302
  %306 = vrot.lane.b32.xlu0 %v304, 32
  %v307 = vpop.permute.xlu0 %306
  %v309 = vadd.f32 %v299, %v307
  %v310 = vtanh.pop %v309
  %312 = vrot.lane.b32.xlu0 %v310, 32
  %v313 = vpop.permute.xlu0 %312
  %v315 = vmul.f32 %v293, %v313
  %317 = vrot.lane.b32.xlu0 %v315, 64
  %v318 = vpop.permute.xlu0 %317
  %320 = vst.msk [vmem:[#allocation3] sm:$0xff] %vm215, %v318
  %s321 = scalar_lea.vmem [#allocation2], 8
  %v322 = vld [vmem:[%s321] sm:$0xff]
  %v323 = vsel %vm215, %v318, 0
  %325 = vmatprep.subr.mxu0 0.0
  %326 = vmatpush1.msra.mxu0 0.0
  %327 = vmatprep.subr.mxu0 0.0
  %328 = vmatpush1.msra.mxu0 0.0
  %329 = vmatprep.subr.mxu0 0.0
  %330 = vmatpush1.msra.mxu0 0.0
  %331 = vmatprep.subr.mxu0 0.0
  %332 = vmatpush1.msra.mxu0 0.0
  %333 = vmatprep.subr.mxu0 0.0
  %334 = vmatpush1.msra.mxu0 0.0
  %335 = vmatprep.subr.mxu0 0.0
  %336 = vmatpush1.msra.mxu0 0.0
  %337 = vmatprep.subr.mxu0 0.0
  %338 = vmatpush1.msra.mxu0 0.0
  %339 = vmatprep.subr.mxu0 0.0
  %340 = vmatpush1.msra.mxu0 0.0
  %341 = vmatprep.subr.mxu0 0.0
  %342 = vmatpush1.msra.mxu0 0.0
  %343 = vmatprep.subr.mxu0 0.0
  %344 = vmatpush1.msra.mxu0 0.0
  %345 = vmatprep.subr.mxu0 0.0
  %346 = vmatpush1.msra.mxu0 0.0
  %347 = vmatprep.subr.mxu0 0.0
  %348 = vmatpush1.msra.mxu0 0.0
  %349 = vmatprep.subr.mxu0 0.0
  %350 = vmatpush1.msra.mxu0 %v211
  %351 = vmatprep.subr.mxu0 0.0
  %352 = vmatpush1.msra.mxu0 %v210
  %353 = vmatprep.subr.mxu0 0.0
  %354 = vmatpush1.msra.mxu0 %v209
  %355 = vmatprep.subr.mxu0 0.0
  %356 = vmatpush1.msra.mxu0 %v208
  %357 = vmatprep.subr.mxu0 0.0
  %358 = vmatpush2.msra.mxu0 0.0
  %359 = vmatprep.subr.mxu0 0.0
  %360 = vmatpush2.msra.mxu0 0.0
  %361 = vmatprep.subr.mxu0 0.0
  %362 = vmatpush2.msra.mxu0 0.0
  %363 = vmatprep.subr.mxu0 0.0
  %364 = vmatpush2.msra.mxu0 0.0
  %365 = vmatprep.subr.mxu0 0.0
  %366 = vmatpush2.msra.mxu0 0.0
  %367 = vmatprep.subr.mxu0 0.0
  %368 = vmatpush2.msra.mxu0 0.0
  %369 = vmatprep.subr.mxu0 0.0
  %370 = vmatpush2.msra.mxu0 0.0
  %371 = vmatprep.subr.mxu0 0.0
  %372 = vmatpush2.msra.mxu0 0.0
  %373 = vmatprep.subr.mxu0 0.0
  %374 = vmatpush2.msra.mxu0 0.0
  %375 = vmatprep.subr.mxu0 0.0
  %376 = vmatpush2.msra.mxu0 0.0
  %377 = vmatprep.subr.mxu0 0.0
  %378 = vmatpush2.msra.mxu0 0.0
  %379 = vmatprep.subr.mxu0 0.0
  %380 = vmatpush2.msra.mxu0 0.0
  %381 = vmatprep.subr.mxu0 0.0
  %382 = vmatpush2.msra.mxu0 0.0
  %383 = vmatprep.subr.mxu0 0.0
  %384 = vmatpush2.msra.mxu0 0.0
  %385 = vmatprep.subr.mxu0 0.0
  %386 = vmatpush2.msra.mxu0 0.0
  %387 = vmatprep.subr.mxu0 0.0
  %388 = vmatpush2.msra.mxu0 0.0
  %389 = vmatprep.mubr.f32.mxu0 0.0
  %390 = vmatmul.mubr.f32.gmra.mxu0 %v323
  %v391 = vpop.f32.mrf.mxu0
  %v392 = vadd.f32 0.0, %v391
  %v393 = vpop.f32.mrf.mxu0
  %394 = vdwg.mxu0
  %v395 = vadd.f32 %v322, %v392
  %v396 = vmul.f32 %v395, 0.5
  %v397 = vtanh.pop %v396
  %v398 = vmul.f32 %v397, 0.5
  %v399 = vadd.f32 %v398, 0.5
  %v400 = vtanh.pop %v395
  %v401 = vmul.f32 %v399, %v309
  %403 = vrot.lane.b32.xlu0 %v400, 32
  %v404 = vpop.permute.xlu0 %403
  %v406 = vmul.f32 %v399, %v404
  %408 = vrot.lane.b32.xlu0 %v406, 32
  %v409 = vpop.permute.xlu0 %408
  %v411 = vadd.f32 %v401, %v409
  %v412 = vtanh.pop %v411
  %414 = vrot.lane.b32.xlu0 %v412, 32
  %v415 = vpop.permute.xlu0 %414
  %v417 = vmul.f32 %v399, %v415
  %419 = vrot.lane.b32.xlu0 %v417, 64
  %v420 = vpop.permute.xlu0 %419
  %s422 = scalar_lea.vmem [#allocation3], 8
  %423 = vst.msk [vmem:[%s422] sm:$0xff] %vm215, %v420
  %s424 = scalar_lea.vmem [#allocation2], 16
  %v425 = vld [vmem:[%s424] sm:$0xff]
  %v426 = vsel %vm215, %v420, 0
  %428 = vmatprep.subr.mxu0 0.0
  %429 = vmatpush1.msra.mxu0 0.0
  %430 = vmatprep.subr.mxu0 0.0
  %431 = vmatpush1.msra.mxu0 0.0
  %432 = vmatprep.subr.mxu0 0.0
  %433 = vmatpush1.msra.mxu0 0.0
  %434 = vmatprep.subr.mxu0 0.0
  %435 = vmatpush1.msra.mxu0 0.0
  %436 = vmatprep.subr.mxu0 0.0
  %437 = vmatpush1.msra.mxu0 0.0
  %438 = vmatprep.subr.mxu0 0.0
  %439 = vmatpush1.msra.mxu0 0.0
  %440 = vmatprep.subr.mxu0 0.0
  %441 = vmatpush1.msra.mxu0 0.0
  %442 = vmatprep.subr.mxu0 0.0
  %443 = vmatpush1.msra.mxu0 0.0
  %444 = vmatprep.subr.mxu0 0.0
  %445 = vmatpush1.msra.mxu0 0.0
  %446 = vmatprep.subr.mxu0 0.0
  %447 = vmatpush1.msra.mxu0 0.0
  %448 = vmatprep.subr.mxu0 0.0
  %449 = vmatpush1.msra.mxu0 0.0
  %450 = vmatprep.subr.mxu0 0.0
  %451 = vmatpush1.msra.mxu0 0.0
  %452 = vmatprep.subr.mxu0 0.0
  %453 = vmatpush1.msra.mxu0 %v211
  %454 = vmatprep.subr.mxu0 0.0
  %455 = vmatpush1.msra.mxu0 %v210
  %456 = vmatprep.subr.mxu0 0.0
  %457 = vmatpush1.msra.mxu0 %v209
  %458 = vmatprep.subr.mxu0 0.0
  %459 = vmatpush1.msra.mxu0 %v208
  %460 = vmatprep.subr.mxu0 0.0
  %461 = vmatpush2.msra.mxu0 0.0
  %462 = vmatprep.subr.mxu0 0.0
  %463 = vmatpush2.msra.mxu0 0.0
  %464 = vmatprep.subr.mxu0 0.0
  %465 = vmatpush2.msra.mxu0 0.0
  %466 = vmatprep.subr.mxu0 0.0
  %467 = vmatpush2.msra.mxu0 0.0
  %468 = vmatprep.subr.mxu0 0.0
  %469 = vmatpush2.msra.mxu0 0.0
  %470 = vmatprep.subr.mxu0 0.0
  %471 = vmatpush2.msra.mxu0 0.0
  %472 = vmatprep.subr.mxu0 0.0
  %473 = vmatpush2.msra.mxu0 0.0
  %474 = vmatprep.subr.mxu0 0.0
  %475 = vmatpush2.msra.mxu0 0.0
  %476 = vmatprep.subr.mxu0 0.0
  %477 = vmatpush2.msra.mxu0 0.0
  %478 = vmatprep.subr.mxu0 0.0
  %479 = vmatpush2.msra.mxu0 0.0
  %480 = vmatprep.subr.mxu0 0.0
  %481 = vmatpush2.msra.mxu0 0.0
  %482 = vmatprep.subr.mxu0 0.0
  %483 = vmatpush2.msra.mxu0 0.0
  %484 = vmatprep.subr.mxu0 0.0
  %485 = vmatpush2.msra.mxu0 0.0
  %486 = vmatprep.subr.mxu0 0.0
  %487 = vmatpush2.msra.mxu0 0.0
  %488 = vmatprep.subr.mxu0 0.0
  %489 = vmatpush2.msra.mxu0 0.0
  %490 = vmatprep.subr.mxu0 0.0
  %491 = vmatpush2.msra.mxu0 0.0
  %492 = vmatprep.mubr.f32.mxu0 0.0
  %493 = vmatmul.mubr.f32.gmra.mxu0 %v426
  %v494 = vpop.f32.mrf.mxu0
  %v495 = vadd.f32 0.0, %v494
  %v496 = vpop.f32.mrf.mxu0
  %497 = vdwg.mxu0
  %v498 = vadd.f32 %v425, %v495
  %v499 = vmul.f32 %v498, 0.5
  %v500 = vtanh.pop %v499
  %v501 = vmul.f32 %v500, 0.5
  %v502 = vadd.f32 %v501, 0.5
  %v503 = vtanh.pop %v498
  %v504 = vmul.f32 %v502, %v411
  %506 = vrot.lane.b32.xlu0 %v503, 32
  %v507 = vpop.permute.xlu0 %506
  %v509 = vmul.f32 %v502, %v507
  %511 = vrot.lane.b32.xlu0 %v509, 32
  %v512 = vpop.permute.xlu0 %511
  %v514 = vadd.f32 %v504, %v512
  %v515 = vtanh.pop %v514
  %517 = vrot.lane.b32.xlu0 %v515, 32
  %v518 = vpop.permute.xlu0 %517
  %v520 = vmul.f32 %v502, %v518
  %522 = vrot.lane.b32.xlu0 %v520, 64
  %v523 = vpop.permute.xlu0 %522
  %s525 = scalar_lea.vmem [#allocation3], 16
  %526 = vst.msk [vmem:[%s525] sm:$0xff] %vm215, %v523
  %s527 = scalar_lea.vmem [#allocation2], 24
  %v528 = vld [vmem:[%s527] sm:$0xff]
  %v529 = vsel %vm215, %v523, 0
  %531 = vmatprep.subr.mxu0 0.0
  %532 = vmatpush1.msra.mxu0 0.0
  %533 = vmatprep.subr.mxu0 0.0
  %534 = vmatpush1.msra.mxu0 0.0
  %535 = vmatprep.subr.mxu0 0.0
  %536 = vmatpush1.msra.mxu0 0.0
  %537 = vmatprep.subr.mxu0 0.0
  %538 = vmatpush1.msra.mxu0 0.0
  %539 = vmatprep.subr.mxu0 0.0
  %540 = vmatpush1.msra.mxu0 0.0
  %541 = vmatprep.subr.mxu0 0.0
  %542 = vmatpush1.msra.mxu0 0.0
  %543 = vmatprep.subr.mxu0 0.0
  %544 = vmatpush1.msra.mxu0 0.0
  %545 = vmatprep.subr.mxu0 0.0
  %546 = vmatpush1.msra.mxu0 0.0
  %547 = vmatprep.subr.mxu0 0.0
  %548 = vmatpush1.msra.mxu0 0.0
  %549 = vmatprep.subr.mxu0 0.0
  %550 = vmatpush1.msra.mxu0 0.0
  %551 = vmatprep.subr.mxu0 0.0
  %552 = vmatpush1.msra.mxu0 0.0
  %553 = vmatprep.subr.mxu0 0.0
  %554 = vmatpush1.msra.mxu0 0.0
  %555 = vmatprep.subr.mxu0 0.0
  %556 = vmatpush1.msra.mxu0 %v211
  %557 = vmatprep.subr.mxu0 0.0
  %558 = vmatpush1.msra.mxu0 %v210
  %559 = vmatprep.subr.mxu0 0.0
  %560 = vmatpush1.msra.mxu0 %v209
  %561 = vmatprep.subr.mxu0 0.0
  %562 = vmatpush1.msra.mxu0 %v208
  %563 = vmatprep.subr.mxu0 0.0
  %564 = vmatpush2.msra.mxu0 0.0
  %565 = vmatprep.subr.mxu0 0.0
  %566 = vmatpush2.msra.mxu0 0.0
  %567 = vmatprep.subr.mxu0 0.0
  %568 = vmatpush2.msra.mxu0 0.0
  %569 = vmatprep.subr.mxu0 0.0
  %570 = vmatpush2.msra.mxu0 0.0
  %571 = vmatprep.subr.mxu0 0.0
  %572 = vmatpush2.msra.mxu0 0.0
  %573 = vmatprep.subr.mxu0 0.0
  %574 = vmatpush2.msra.mxu0 0.0
  %575 = vmatprep.subr.mxu0 0.0
  %576 = vmatpush2.msra.mxu0 0.0
  %577 = vmatprep.subr.mxu0 0.0
  %578 = vmatpush2.msra.mxu0 0.0
  %579 = vmatprep.subr.mxu0 0.0
  %580 = vmatpush2.msra.mxu0 0.0
  %581 = vmatprep.subr.mxu0 0.0
  %582 = vmatpush2.msra.mxu0 0.0
  %583 = vmatprep.subr.mxu0 0.0
  %584 = vmatpush2.msra.mxu0 0.0
  %585 = vmatprep.subr.mxu0 0.0
  %586 = vmatpush2.msra.mxu0 0.0
  %587 = vmatprep.subr.mxu0 0.0
  %588 = vmatpush2.msra.mxu0 0.0
  %589 = vmatprep.subr.mxu0 0.0
  %590 = vmatpush2.msra.mxu0 0.0
  %591 = vmatprep.subr.mxu0 0.0
  %592 = vmatpush2.msra.mxu0 0.0
  %593 = vmatprep.subr.mxu0 0.0
  %594 = vmatpush2.msra.mxu0 0.0
  %595 = vmatprep.mubr.f32.mxu0 0.0
  %596 = vmatmul.mubr.f32.gmra.mxu0 %v529
  %v597 = vpop.f32.mrf.mxu0
  %v598 = vadd.f32 0.0, %v597
  %v599 = vpop.f32.mrf.mxu0
  %600 = vdwg.mxu0
  %v601 = vadd.f32 %v528, %v598
  %v602 = vmul.f32 %v601, 0.5
  %v603 = vtanh.pop %v602
  %v604 = vmul.f32 %v603, 0.5
  %v605 = vadd.f32 %v604, 0.5
  %v606 = vtanh.pop %v601
  %v607 = vmul.f32 %v605, %v514
  %609 = vrot.lane.b32.xlu0 %v606, 32
  %v610 = vpop.permute.xlu0 %609
  %v612 = vmul.f32 %v605, %v610
  %614 = vrot.lane.b32.xlu0 %v612, 32
  %v615 = vpop.permute.xlu0 %614
  %v617 = vadd.f32 %v607, %v615
  %v618 = vtanh.pop %v617
  %620 = vrot.lane.b32.xlu0 %v618, 32
  %v621 = vpop.permute.xlu0 %620
  %v623 = vmul.f32 %v605, %v621
  %625 = vrot.lane.b32.xlu0 %v623, 64
  %v626 = vpop.permute.xlu0 %625
  %s628 = scalar_lea.vmem [#allocation3], 24
  %629 = vst.msk [vmem:[%s628] sm:$0xff] %vm215, %v626
  %s630 = scalar_lea.vmem [#allocation2], 32
  %v631 = vld [vmem:[%s630] sm:$0xff]
  %v632 = vsel %vm215, %v626, 0
  %634 = vmatprep.subr.mxu0 0.0
  %635 = vmatpush1.msra.mxu0 0.0
  %636 = vmatprep.subr.mxu0 0.0
  %637 = vmatpush1.msra.mxu0 0.0
  %638 = vmatprep.subr.mxu0 0.0
  %639 = vmatpush1.msra.mxu0 0.0
  %640 = vmatprep.subr.mxu0 0.0
  %641 = vmatpush1.msra.mxu0 0.0
  %642 = vmatprep.subr.mxu0 0.0
  %643 = vmatpush1.msra.mxu0 0.0
  %644 = vmatprep.subr.mxu0 0.0
  %645 = vmatpush1.msra.mxu0 0.0
  %646 = vmatprep.subr.mxu0 0.0
  %647 = vmatpush1.msra.mxu0 0.0
  %648 = vmatprep.subr.mxu0 0.0
  %649 = vmatpush1.msra.mxu0 0.0
  %650 = vmatprep.subr.mxu0 0.0
  %651 = vmatpush1.msra.mxu0 0.0
  %652 = vmatprep.subr.mxu0 0.0
  %653 = vmatpush1.msra.mxu0 0.0
  %654 = vmatprep.subr.mxu0 0.0
  %655 = vmatpush1.msra.mxu0 0.0
  %656 = vmatprep.subr.mxu0 0.0
  %657 = vmatpush1.msra.mxu0 0.0
  %658 = vmatprep.subr.mxu0 0.0
  %659 = vmatpush1.msra.mxu0 %v211
  %660 = vmatprep.subr.mxu0 0.0
  %661 = vmatpush1.msra.mxu0 %v210
  %662 = vmatprep.subr.mxu0 0.0
  %663 = vmatpush1.msra.mxu0 %v209
  %664 = vmatprep.subr.mxu0 0.0
  %665 = vmatpush1.msra.mxu0 %v208
  %666 = vmatprep.subr.mxu0 0.0
  %667 = vmatpush2.msra.mxu0 0.0
  %668 = vmatprep.subr.mxu0 0.0
  %669 = vmatpush2.msra.mxu0 0.0
  %670 = vmatprep.subr.mxu0 0.0
  %671 = vmatpush2.msra.mxu0 0.0
  %672 = vmatprep.subr.mxu0 0.0
  %673 = vmatpush2.msra.mxu0 0.0
  %674 = vmatprep.subr.mxu0 0.0
  %675 = vmatpush2.msra.mxu0 0.0
  %676 = vmatprep.subr.mxu0 0.0
  %677 = vmatpush2.msra.mxu0 0.0
  %678 = vmatprep.subr.mxu0 0.0
  %679 = vmatpush2.msra.mxu0 0.0
  %680 = vmatprep.subr.mxu0 0.0
  %681 = vmatpush2.msra.mxu0 0.0
  %682 = vmatprep.subr.mxu0 0.0
  %683 = vmatpush2.msra.mxu0 0.0
  %684 = vmatprep.subr.mxu0 0.0
  %685 = vmatpush2.msra.mxu0 0.0
  %686 = vmatprep.subr.mxu0 0.0
  %687 = vmatpush2.msra.mxu0 0.0
  %688 = vmatprep.subr.mxu0 0.0
  %689 = vmatpush2.msra.mxu0 0.0
  %690 = vmatprep.subr.mxu0 0.0
  %691 = vmatpush2.msra.mxu0 0.0
  %692 = vmatprep.subr.mxu0 0.0
  %693 = vmatpush2.msra.mxu0 0.0
  %694 = vmatprep.subr.mxu0 0.0
  %695 = vmatpush2.msra.mxu0 0.0
  %696 = vmatprep.subr.mxu0 0.0
  %697 = vmatpush2.msra.mxu0 0.0
  %698 = vmatprep.mubr.f32.mxu0 0.0
  %699 = vmatmul.mubr.f32.gmra.mxu0 %v632
  %v700 = vpop.f32.mrf.mxu0
  %v701 = vadd.f32 0.0, %v700
  %v702 = vpop.f32.mrf.mxu0
  %703 = vdwg.mxu0
  %v704 = vadd.f32 %v631, %v701
  %v705 = vmul.f32 %v704, 0.5
  %v706 = vtanh.pop %v705
  %v707 = vmul.f32 %v706, 0.5
  %v708 = vadd.f32 %v707, 0.5
  %v709 = vtanh.pop %v704
  %v710 = vmul.f32 %v708, %v617
  %712 = vrot.lane.b32.xlu0 %v709, 32
  %v713 = vpop.permute.xlu0 %712
  %v715 = vmul.f32 %v708, %v713
  %717 = vrot.lane.b32.xlu0 %v715, 32
  %v718 = vpop.permute.xlu0 %717
  %v720 = vadd.f32 %v710, %v718
  %v721 = vtanh.pop %v720
  %723 = vrot.lane.b32.xlu0 %v721, 32
  %v724 = vpop.permute.xlu0 %723
  %v726 = vmul.f32 %v708, %v724
  %728 = vrot.lane.b32.xlu0 %v726, 64
  %v729 = vpop.permute.xlu0 %728
  %s731 = scalar_lea.vmem [#allocation3], 32
  %732 = vst.msk [vmem:[%s731] sm:$0xff] %vm215, %v729
  %s733 = scalar_lea.vmem [#allocation2], 40
  %v734 = vld [vmem:[%s733] sm:$0xff]
  %v735 = vsel %vm215, %v729, 0
  %737 = vmatprep.subr.mxu0 0.0
  %738 = vmatpush1.msra.mxu0 0.0
  %739 = vmatprep.subr.mxu0 0.0
  %740 = vmatpush1.msra.mxu0 0.0
  %741 = vmatprep.subr.mxu0 0.0
  %742 = vmatpush1.msra.mxu0 0.0
  %743 = vmatprep.subr.mxu0 0.0
  %744 = vmatpush1.msra.mxu0 0.0
  %745 = vmatprep.subr.mxu0 0.0
  %746 = vmatpush1.msra.mxu0 0.0
  %747 = vmatprep.subr.mxu0 0.0
  %748 = vmatpush1.msra.mxu0 0.0
  %749 = vmatprep.subr.mxu0 0.0
  %750 = vmatpush1.msra.mxu0 0.0
  %751 = vmatprep.subr.mxu0 0.0
  %752 = vmatpush1.msra.mxu0 0.0
  %753 = vmatprep.subr.mxu0 0.0
  %754 = vmatpush1.msra.mxu0 0.0
  %755 = vmatprep.subr.mxu0 0.0
  %756 = vmatpush1.msra.mxu0 0.0
  %757 = vmatprep.subr.mxu0 0.0
  %758 = vmatpush1.msra.mxu0 0.0
  %759 = vmatprep.subr.mxu0 0.0
  %760 = vmatpush1.msra.mxu0 0.0
  %761 = vmatprep.subr.mxu0 0.0
  %762 = vmatpush1.msra.mxu0 %v211
  %763 = vmatprep.subr.mxu0 0.0
  %764 = vmatpush1.msra.mxu0 %v210
  %765 = vmatprep.subr.mxu0 0.0
  %766 = vmatpush1.msra.mxu0 %v209
  %767 = vmatprep.subr.mxu0 0.0
  %768 = vmatpush1.msra.mxu0 %v208
  %769 = vmatprep.subr.mxu0 0.0
  %770 = vmatpush2.msra.mxu0 0.0
  %771 = vmatprep.subr.mxu0 0.0
  %772 = vmatpush2.msra.mxu0 0.0
  %773 = vmatprep.subr.mxu0 0.0
  %774 = vmatpush2.msra.mxu0 0.0
  %775 = vmatprep.subr.mxu0 0.0
  %776 = vmatpush2.msra.mxu0 0.0
  %777 = vmatprep.subr.mxu0 0.0
  %778 = vmatpush2.msra.mxu0 0.0
  %779 = vmatprep.subr.mxu0 0.0
  %780 = vmatpush2.msra.mxu0 0.0
  %781 = vmatprep.subr.mxu0 0.0
  %782 = vmatpush2.msra.mxu0 0.0
  %783 = vmatprep.subr.mxu0 0.0
  %784 = vmatpush2.msra.mxu0 0.0
  %785 = vmatprep.subr.mxu0 0.0
  %786 = vmatpush2.msra.mxu0 0.0
  %787 = vmatprep.subr.mxu0 0.0
  %788 = vmatpush2.msra.mxu0 0.0
  %789 = vmatprep.subr.mxu0 0.0
  %790 = vmatpush2.msra.mxu0 0.0
  %791 = vmatprep.subr.mxu0 0.0
  %792 = vmatpush2.msra.mxu0 0.0
  %793 = vmatprep.subr.mxu0 0.0
  %794 = vmatpush2.msra.mxu0 0.0
  %795 = vmatprep.subr.mxu0 0.0
  %796 = vmatpush2.msra.mxu0 0.0
  %797 = vmatprep.subr.mxu0 0.0
  %798 = vmatpush2.msra.mxu0 0.0
  %799 = vmatprep.subr.mxu0 0.0
  %800 = vmatpush2.msra.mxu0 0.0
  %801 = vmatprep.mubr.f32.mxu0 0.0
  %802 = vmatmul.mubr.f32.gmra.mxu0 %v735
  %v803 = vpop.f32.mrf.mxu0
  %v804 = vadd.f32 0.0, %v803
  %v805 = vpop.f32.mrf.mxu0
  %806 = vdwg.mxu0
  %v807 = vadd.f32 %v734, %v804
  %v808 = vmul.f32 %v807, 0.5
  %v809 = vtanh.pop %v808
  %v810 = vmul.f32 %v809, 0.5
  %v811 = vadd.f32 %v810, 0.5
  %v812 = vtanh.pop %v807
  %v813 = vmul.f32 %v811, %v720
  %815 = vrot.lane.b32.xlu0 %v812, 32
  %v816 = vpop.permute.xlu0 %815
  %v818 = vmul.f32 %v811, %v816
  %820 = vrot.lane.b32.xlu0 %v818, 32
  %v821 = vpop.permute.xlu0 %820
  %v823 = vadd.f32 %v813, %v821
  %v824 = vtanh.pop %v823
  %826 = vrot.lane.b32.xlu0 %v824, 32
  %v827 = vpop.permute.xlu0 %826
  %v829 = vmul.f32 %v811, %v827
  %831 = vrot.lane.b32.xlu0 %v829, 64
  %v832 = vpop.permute.xlu0 %831
  %s834 = scalar_lea.vmem [#allocation3], 40
  %835 = vst.msk [vmem:[%s834] sm:$0xff] %vm215, %v832
  %s836 = scalar_lea.vmem [#allocation2], 48
  %v837 = vld [vmem:[%s836] sm:$0xff]
  %v838 = vsel %vm215, %v832, 0
  %840 = vmatprep.subr.mxu0 0.0
  %841 = vmatpush1.msra.mxu0 0.0
  %842 = vmatprep.subr.mxu0 0.0
  %843 = vmatpush1.msra.mxu0 0.0
  %844 = vmatprep.subr.mxu0 0.0
  %845 = vmatpush1.msra.mxu0 0.0
  %846 = vmatprep.subr.mxu0 0.0
  %847 = vmatpush1.msra.mxu0 0.0
  %848 = vmatprep.subr.mxu0 0.0
  %849 = vmatpush1.msra.mxu0 0.0
  %850 = vmatprep.subr.mxu0 0.0
  %851 = vmatpush1.msra.mxu0 0.0
  %852 = vmatprep.subr.mxu0 0.0
  %853 = vmatpush1.msra.mxu0 0.0
  %854 = vmatprep.subr.mxu0 0.0
  %855 = vmatpush1.msra.mxu0 0.0
  %856 = vmatprep.subr.mxu0 0.0
  %857 = vmatpush1.msra.mxu0 0.0
  %858 = vmatprep.subr.mxu0 0.0
  %859 = vmatpush1.msra.mxu0 0.0
  %860 = vmatprep.subr.mxu0 0.0
  %861 = vmatpush1.msra.mxu0 0.0
  %862 = vmatprep.subr.mxu0 0.0
  %863 = vmatpush1.msra.mxu0 0.0
  %864 = vmatprep.subr.mxu0 0.0
  %865 = vmatpush1.msra.mxu0 %v211
  %866 = vmatprep.subr.mxu0 0.0
  %867 = vmatpush1.msra.mxu0 %v210
  %868 = vmatprep.subr.mxu0 0.0
  %869 = vmatpush1.msra.mxu0 %v209
  %870 = vmatprep.subr.mxu0 0.0
  %871 = vmatpush1.msra.mxu0 %v208
  %872 = vmatprep.subr.mxu0 0.0
  %873 = vmatpush2.msra.mxu0 0.0
  %874 = vmatprep.subr.mxu0 0.0
  %875 = vmatpush2.msra.mxu0 0.0
  %876 = vmatprep.subr.mxu0 0.0
  %877 = vmatpush2.msra.mxu0 0.0
  %878 = vmatprep.subr.mxu0 0.0
  %879 = vmatpush2.msra.mxu0 0.0
  %880 = vmatprep.subr.mxu0 0.0
  %881 = vmatpush2.msra.mxu0 0.0
  %882 = vmatprep.subr.mxu0 0.0
  %883 = vmatpush2.msra.mxu0 0.0
  %884 = vmatprep.subr.mxu0 0.0
  %885 = vmatpush2.msra.mxu0 0.0
  %886 = vmatprep.subr.mxu0 0.0
  %887 = vmatpush2.msra.mxu0 0.0
  %888 = vmatprep.subr.mxu0 0.0
  %889 = vmatpush2.msra.mxu0 0.0
  %890 = vmatprep.subr.mxu0 0.0
  %891 = vmatpush2.msra.mxu0 0.0
  %892 = vmatprep.subr.mxu0 0.0
  %893 = vmatpush2.msra.mxu0 0.0
  %894 = vmatprep.subr.mxu0 0.0
  %895 = vmatpush2.msra.mxu0 0.0
  %896 = vmatprep.subr.mxu0 0.0
  %897 = vmatpush2.msra.mxu0 0.0
  %898 = vmatprep.subr.mxu0 0.0
  %899 = vmatpush2.msra.mxu0 0.0
  %900 = vmatprep.subr.mxu0 0.0
  %901 = vmatpush2.msra.mxu0 0.0
  %902 = vmatprep.subr.mxu0 0.0
  %903 = vmatpush2.msra.mxu0 0.0
  %904 = vmatprep.mubr.f32.mxu0 0.0
  %905 = vmatmul.mubr.f32.gmra.mxu0 %v838
  %v906 = vpop.f32.mrf.mxu0
  %v907 = vadd.f32 0.0, %v906
  %v908 = vpop.f32.mrf.mxu0
  %909 = vdwg.mxu0
  %v910 = vadd.f32 %v837, %v907
  %v911 = vmul.f32 %v910, 0.5
  %v912 = vtanh.pop %v911
  %v913 = vmul.f32 %v912, 0.5
  %v914 = vadd.f32 %v913, 0.5
  %v915 = vtanh.pop %v910
  %v916 = vmul.f32 %v914, %v823
  %918 = vrot.lane.b32.xlu0 %v915, 32
  %v919 = vpop.permute.xlu0 %918
  %v921 = vmul.f32 %v914, %v919
  %923 = vrot.lane.b32.xlu0 %v921, 32
  %v924 = vpop.permute.xlu0 %923
  %v926 = vadd.f32 %v916, %v924
  %v927 = vtanh.pop %v926
  %929 = vrot.lane.b32.xlu0 %v927, 32
  %v930 = vpop.permute.xlu0 %929
  %v932 = vmul.f32 %v914, %v930
  %934 = vrot.lane.b32.xlu0 %v932, 64
  %v935 = vpop.permute.xlu0 %934
  %s937 = scalar_lea.vmem [#allocation3], 48
  %938 = vst.msk [vmem:[%s937] sm:$0xff] %vm215, %v935
  %s939 = scalar_lea.vmem [#allocation2], 56
  %v940 = vld [vmem:[%s939] sm:$0xff]
  %v941 = vsel %vm215, %v935, 0
  %943 = vmatprep.subr.mxu0 0.0
  %944 = vmatpush1.msra.mxu0 0.0
  %945 = vmatprep.subr.mxu0 0.0
  %946 = vmatpush1.msra.mxu0 0.0
  %947 = vmatprep.subr.mxu0 0.0
  %948 = vmatpush1.msra.mxu0 0.0
  %949 = vmatprep.subr.mxu0 0.0
  %950 = vmatpush1.msra.mxu0 0.0
  %951 = vmatprep.subr.mxu0 0.0
  %952 = vmatpush1.msra.mxu0 0.0
  %953 = vmatprep.subr.mxu0 0.0
  %954 = vmatpush1.msra.mxu0 0.0
  %955 = vmatprep.subr.mxu0 0.0
  %956 = vmatpush1.msra.mxu0 0.0
  %957 = vmatprep.subr.mxu0 0.0
  %958 = vmatpush1.msra.mxu0 0.0
  %959 = vmatprep.subr.mxu0 0.0
  %960 = vmatpush1.msra.mxu0 0.0
  %961 = vmatprep.subr.mxu0 0.0
  %962 = vmatpush1.msra.mxu0 0.0
  %963 = vmatprep.subr.mxu0 0.0
  %964 = vmatpush1.msra.mxu0 0.0
  %965 = vmatprep.subr.mxu0 0.0
  %966 = vmatpush1.msra.mxu0 0.0
  %967 = vmatprep.subr.mxu0 0.0
  %968 = vmatpush1.msra.mxu0 %v211
  %969 = vmatprep.subr.mxu0 0.0
  %970 = vmatpush1.msra.mxu0 %v210
  %971 = vmatprep.subr.mxu0 0.0
  %972 = vmatpush1.msra.mxu0 %v209
  %973 = vmatprep.subr.mxu0 0.0
  %974 = vmatpush1.msra.mxu0 %v208
  %975 = vmatprep.subr.mxu0 0.0
  %976 = vmatpush2.msra.mxu0 0.0
  %977 = vmatprep.subr.mxu0 0.0
  %978 = vmatpush2.msra.mxu0 0.0
  %979 = vmatprep.subr.mxu0 0.0
  %980 = vmatpush2.msra.mxu0 0.0
  %981 = vmatprep.subr.mxu0 0.0
  %982 = vmatpush2.msra.mxu0 0.0
  %983 = vmatprep.subr.mxu0 0.0
  %984 = vmatpush2.msra.mxu0 0.0
  %985 = vmatprep.subr.mxu0 0.0
  %986 = vmatpush2.msra.mxu0 0.0
  %987 = vmatprep.subr.mxu0 0.0
  %988 = vmatpush2.msra.mxu0 0.0
  %989 = vmatprep.subr.mxu0 0.0
  %990 = vmatpush2.msra.mxu0 0.0
  %991 = vmatprep.subr.mxu0 0.0
  %992 = vmatpush2.msra.mxu0 0.0
  %993 = vmatprep.subr.mxu0 0.0
  %994 = vmatpush2.msra.mxu0 0.0
  %995 = vmatprep.subr.mxu0 0.0
  %996 = vmatpush2.msra.mxu0 0.0
  %997 = vmatprep.subr.mxu0 0.0
  %998 = vmatpush2.msra.mxu0 0.0
  %999 = vmatprep.subr.mxu0 0.0
  %1000 = vmatpush2.msra.mxu0 0.0
  %1001 = vmatprep.subr.mxu0 0.0
  %1002 = vmatpush2.msra.mxu0 0.0
  %1003 = vmatprep.subr.mxu0 0.0
  %1004 = vmatpush2.msra.mxu0 0.0
  %1005 = vmatprep.subr.mxu0 0.0
  %1006 = vmatpush2.msra.mxu0 0.0
  %1007 = vmatprep.mubr.f32.mxu0 0.0
  %1008 = vmatmul.mubr.f32.gmra.mxu0 %v941
  %v1009 = vpop.f32.mrf.mxu0
  %v1010 = vadd.f32 0.0, %v1009
  %v1011 = vpop.f32.mrf.mxu0
  %1012 = vdwg.mxu0
  %v1013 = vadd.f32 %v940, %v1010
  %v1014 = vmul.f32 %v1013, 0.5
  %v1015 = vtanh.pop %v1014
  %v1016 = vmul.f32 %v1015, 0.5
  %v1017 = vadd.f32 %v1016, 0.5
  %v1018 = vtanh.pop %v1013
  %v1019 = vmul.f32 %v1017, %v926
  %1021 = vrot.lane.b32.xlu0 %v1018, 32
  %v1022 = vpop.permute.xlu0 %1021
  %v1024 = vmul.f32 %v1017, %v1022
  %1026 = vrot.lane.b32.xlu0 %v1024, 32
  %v1027 = vpop.permute.xlu0 %1026
  %v1029 = vadd.f32 %v1019, %v1027
  %v1030 = vtanh.pop %v1029
  %1032 = vrot.lane.b32.xlu0 %v1030, 32
  %v1033 = vpop.permute.xlu0 %1032
  %v1035 = vmul.f32 %v1017, %v1033
  %1037 = vrot.lane.b32.xlu0 %v1035, 64
  %v1038 = vpop.permute.xlu0 %1037
  %s1040 = scalar_lea.vmem [#allocation3], 56
  %1041 = vst.msk [vmem:[%s1040] sm:$0xff] %vm215, %v1038
  %1042 = vst.msk [vmem:[%s12] sm:$0xff] %vm215, %v1038
  %1044 = vrot.lane.b32.xlu0 %v1029, 96
  %v1045 = vpop.permute.xlu0 %1044
  %1047 = vst.msk [vmem:[%s13] sm:$0xff] %vm215, %v1045
  %v1048 = vld [vmem:[#allocation3] sm:$0xff]
  %v1049 = vld [vmem:[#allocation3 + $0x8] sm:$0xff]
  %v1050 = vld [vmem:[#allocation3 + $0x10] sm:$0xff]
  %v1051 = vld [vmem:[#allocation3 + $0x18] sm:$0xff]
  %v1052 = vld [vmem:[#allocation3 + $0x20] sm:$0xff]
  %v1053 = vld [vmem:[#allocation3 + $0x28] sm:$0xff]
  %v1054 = vld [vmem:[#allocation3 + $0x30] sm:$0xff]
  %v1055 = vld [vmem:[#allocation3 + $0x38] sm:$0xff]
  %v1056 = vld [vmem:[%s6] sm:$0xff]
  %v1057 = vld [vmem:[%s6 + $0x8] sm:$0xff]
  %v1058 = vld [vmem:[%s6 + $0x10] sm:$0xff]
  %v1059 = vld [vmem:[%s6 + $0x18] sm:$0xff]
  %v1060 = vld [vmem:[%s8] sm:$0x1]
  %v1062 = vlaneseq
  %v1063 = vshrl.u32 %v1062, 7
  %v1064 = vsub.s32 0, %v1063
  %v1065 = vrot.slane %v1060, %v1064
  %v1068 = vsel %vm215, %v1048, 0
  %v1071 = vsel %vm215, %v1049, 0
  %v1074 = vsel %vm215, %v1050, 0
  %v1077 = vsel %vm215, %v1051, 0
  %v1080 = vsel %vm215, %v1052, 0
  %v1083 = vsel %vm215, %v1053, 0
  %v1086 = vsel %vm215, %v1054, 0
  %v1089 = vsel %vm215, %v1055, 0
  %1091 = vmatprep.subr.mxu0 0.0
  %1092 = vmatpush1.msra.mxu0 0.0
  %1093 = vmatprep.subr.mxu0 0.0
  %1094 = vmatpush1.msra.mxu0 0.0
  %1095 = vmatprep.subr.mxu0 0.0
  %1096 = vmatpush1.msra.mxu0 0.0
  %1097 = vmatprep.subr.mxu0 0.0
  %1098 = vmatpush1.msra.mxu0 0.0
  %1099 = vmatprep.subr.mxu0 0.0
  %1100 = vmatpush1.msra.mxu0 0.0
  %1101 = vmatprep.subr.mxu0 0.0
  %1102 = vmatpush1.msra.mxu0 0.0
  %1103 = vmatprep.subr.mxu0 0.0
  %1104 = vmatpush1.msra.mxu0 0.0
  %1105 = vmatprep.subr.mxu0 0.0
  %1106 = vmatpush1.msra.mxu0 0.0
  %1107 = vmatprep.subr.mxu0 0.0
  %1108 = vmatpush1.msra.mxu0 0.0
  %1109 = vmatprep.subr.mxu0 0.0
  %1110 = vmatpush1.msra.mxu0 0.0
  %1111 = vmatprep.subr.mxu0 0.0
  %1112 = vmatpush1.msra.mxu0 0.0
  %1113 = vmatprep.subr.mxu0 0.0
  %1114 = vmatpush1.msra.mxu0 0.0
  %1115 = vmatprep.subr.mxu0 0.0
  %1116 = vmatpush1.msra.mxu0 %v1059
  %1117 = vmatprep.subr.mxu0 0.0
  %1118 = vmatpush1.msra.mxu0 %v1058
  %1119 = vmatprep.subr.mxu0 0.0
  %1120 = vmatpush1.msra.mxu0 %v1057
  %1121 = vmatprep.subr.mxu0 0.0
  %1122 = vmatpush1.msra.mxu0 %v1056
  %1123 = vmatprep.subr.mxu0 0.0
  %1124 = vmatpush2.msra.mxu0 0.0
  %1125 = vmatprep.subr.mxu0 0.0
  %1126 = vmatpush2.msra.mxu0 0.0
  %1127 = vmatprep.subr.mxu0 0.0
  %1128 = vmatpush2.msra.mxu0 0.0
  %1129 = vmatprep.subr.mxu0 0.0
  %1130 = vmatpush2.msra.mxu0 0.0
  %1131 = vmatprep.subr.mxu0 0.0
  %1132 = vmatpush2.msra.mxu0 0.0
  %1133 = vmatprep.subr.mxu0 0.0
  %1134 = vmatpush2.msra.mxu0 0.0
  %1135 = vmatprep.subr.mxu0 0.0
  %1136 = vmatpush2.msra.mxu0 0.0
  %1137 = vmatprep.subr.mxu0 0.0
  %1138 = vmatpush2.msra.mxu0 0.0
  %1139 = vmatprep.subr.mxu0 0.0
  %1140 = vmatpush2.msra.mxu0 0.0
  %1141 = vmatprep.subr.mxu0 0.0
  %1142 = vmatpush2.msra.mxu0 0.0
  %1143 = vmatprep.subr.mxu0 0.0
  %1144 = vmatpush2.msra.mxu0 0.0
  %1145 = vmatprep.subr.mxu0 0.0
  %1146 = vmatpush2.msra.mxu0 0.0
  %1147 = vmatprep.subr.mxu0 0.0
  %1148 = vmatpush2.msra.mxu0 0.0
  %1149 = vmatprep.subr.mxu0 0.0
  %1150 = vmatpush2.msra.mxu0 0.0
  %1151 = vmatprep.subr.mxu0 0.0
  %1152 = vmatpush2.msra.mxu0 0.0
  %1153 = vmatprep.subr.mxu0 0.0
  %1154 = vmatpush2.msra.mxu0 0.0
  %1155 = vmatprep.mubr.f32.mxu0 0.0
  %1156 = vmatmul.mubr.f32.gmra.mxu0 %v1068
  %v1157 = vpop.f32.mrf.mxu0
  %v1158 = vadd.f32 %v1065, %v1157
  %v1159 = vpop.f32.mrf.mxu0
  %1160 = vmatprep.mubr.f32.mxu0 0.0
  %1161 = vmatmul.mubr.f32.gmra.mxu0 %v1071
  %v1162 = vpop.f32.mrf.mxu0
  %v1163 = vadd.f32 %v1065, %v1162
  %v1164 = vpop.f32.mrf.mxu0
  %1165 = vmatprep.mubr.f32.mxu0 0.0
  %1166 = vmatmul.mubr.f32.gmra.mxu0 %v1074
  %v1167 = vpop.f32.mrf.mxu0
  %v1168 = vadd.f32 %v1065, %v1167
  %v1169 = vpop.f32.mrf.mxu0
  %1170 = vmatprep.mubr.f32.mxu0 0.0
  %1171 = vmatmul.mubr.f32.gmra.mxu0 %v1077
  %v1172 = vpop.f32.mrf.mxu0
  %v1173 = vadd.f32 %v1065, %v1172
  %v1174 = vpop.f32.mrf.mxu0
  %1175 = vmatprep.mubr.f32.mxu0 0.0
  %1176 = vmatmul.mubr.f32.gmra.mxu0 %v1080
  %v1177 = vpop.f32.mrf.mxu0
  %v1178 = vadd.f32 %v1065, %v1177
  %v1179 = vpop.f32.mrf.mxu0
  %1180 = vmatprep.mubr.f32.mxu0 0.0
  %1181 = vmatmul.mubr.f32.gmra.mxu0 %v1083
  %v1182 = vpop.f32.mrf.mxu0
  %v1183 = vadd.f32 %v1065, %v1182
  %v1184 = vpop.f32.mrf.mxu0
  %1185 = vmatprep.mubr.f32.mxu0 0.0
  %1186 = vmatmul.mubr.f32.gmra.mxu0 %v1086
  %v1187 = vpop.f32.mrf.mxu0
  %v1188 = vadd.f32 %v1065, %v1187
  %v1189 = vpop.f32.mrf.mxu0
  %1190 = vmatprep.mubr.f32.mxu0 0.0
  %1191 = vmatmul.mubr.f32.gmra.mxu0 %v1089
  %v1192 = vpop.f32.mrf.mxu0
  %v1193 = vadd.f32 %v1065, %v1192
  %v1194 = vpop.f32.mrf.mxu0
  %1195 = vdwg.mxu0
  %1196 = vst [vmem:[#allocation2] sm:$0xff] %v1158
  %1197 = vst [vmem:[#allocation2 + $0x8] sm:$0xff] %v1163
  %1198 = vst [vmem:[#allocation2 + $0x10] sm:$0xff] %v1168
  %1199 = vst [vmem:[#allocation2 + $0x18] sm:$0xff] %v1173
  %1200 = vst [vmem:[#allocation2 + $0x20] sm:$0xff] %v1178
  %1201 = vst [vmem:[#allocation2 + $0x28] sm:$0xff] %v1183
  %1202 = vst [vmem:[#allocation2 + $0x30] sm:$0xff] %v1188
  %1203 = vst [vmem:[#allocation2 + $0x38] sm:$0xff] %v1193
  %v1204 = vld [vmem:[%s7] sm:$0xff]
  %v1205 = vld [vmem:[%s7 + $0x8] sm:$0xff]
  %v1206 = vld [vmem:[%s7 + $0x10] sm:$0xff]
  %v1207 = vld [vmem:[%s7 + $0x18] sm:$0xff]
  %s1208 = scalar_lea.vmem %s12, 8
  %v1209 = vld [vmem:[%s1208] sm:$0xff]
  %s1210 = scalar_lea.vmem %s13, 8
  %v1211 = vld [vmem:[%s1210] sm:$0xff]
  %v1212 = vld [vmem:[#allocation2] sm:$0xff]
  %v1214 = vsel %vm215, %v1209, 0
  %1216 = vmatprep.subr.mxu0 0.0
  %1217 = vmatpush1.msra.mxu0 0.0
  %1218 = vmatprep.subr.mxu0 0.0
  %1219 = vmatpush1.msra.mxu0 0.0
  %1220 = vmatprep.subr.mxu0 0.0
  %1221 = vmatpush1.msra.mxu0 0.0
  %1222 = vmatprep.subr.mxu0 0.0
  %1223 = vmatpush1.msra.mxu0 0.0
  %1224 = vmatprep.subr.mxu0 0.0
  %1225 = vmatpush1.msra.mxu0 0.0
  %1226 = vmatprep.subr.mxu0 0.0
  %1227 = vmatpush1.msra.mxu0 0.0
  %1228 = vmatprep.subr.mxu0 0.0
  %1229 = vmatpush1.msra.mxu0 0.0
  %1230 = vmatprep.subr.mxu0 0.0
  %1231 = vmatpush1.msra.mxu0 0.0
  %1232 = vmatprep.subr.mxu0 0.0
  %1233 = vmatpush1.msra.mxu0 0.0
  %1234 = vmatprep.subr.mxu0 0.0
  %1235 = vmatpush1.msra.mxu0 0.0
  %1236 = vmatprep.subr.mxu0 0.0
  %1237 = vmatpush1.msra.mxu0 0.0
  %1238 = vmatprep.subr.mxu0 0.0
  %1239 = vmatpush1.msra.mxu0 0.0
  %1240 = vmatprep.subr.mxu0 0.0
  %1241 = vmatpush1.msra.mxu0 %v1207
  %1242 = vmatprep.subr.mxu0 0.0
  %1243 = vmatpush1.msra.mxu0 %v1206
  %1244 = vmatprep.subr.mxu0 0.0
  %1245 = vmatpush1.msra.mxu0 %v1205
  %1246 = vmatprep.subr.mxu0 0.0
  %1247 = vmatpush1.msra.mxu0 %v1204
  %1248 = vmatprep.subr.mxu0 0.0
  %1249 = vmatpush2.msra.mxu0 0.0
  %1250 = vmatprep.subr.mxu0 0.0
  %1251 = vmatpush2.msra.mxu0 0.0
  %1252 = vmatprep.subr.mxu0 0.0
  %1253 = vmatpush2.msra.mxu0 0.0
  %1254 = vmatprep.subr.mxu0 0.0
  %1255 = vmatpush2.msra.mxu0 0.0
  %1256 = vmatprep.subr.mxu0 0.0
  %1257 = vmatpush2.msra.mxu0 0.0
  %1258 = vmatprep.subr.mxu0 0.0
  %1259 = vmatpush2.msra.mxu0 0.0
  %1260 = vmatprep.subr.mxu0 0.0
  %1261 = vmatpush2.msra.mxu0 0.0
  %1262 = vmatprep.subr.mxu0 0.0
  %1263 = vmatpush2.msra.mxu0 0.0
  %1264 = vmatprep.subr.mxu0 0.0
  %1265 = vmatpush2.msra.mxu0 0.0
  %1266 = vmatprep.subr.mxu0 0.0
  %1267 = vmatpush2.msra.mxu0 0.0
  %1268 = vmatprep.subr.mxu0 0.0
  %1269 = vmatpush2.msra.mxu0 0.0
  %1270 = vmatprep.subr.mxu0 0.0
  %1271 = vmatpush2.msra.mxu0 0.0
  %1272 = vmatprep.subr.mxu0 0.0
  %1273 = vmatpush2.msra.mxu0 0.0
  %1274 = vmatprep.subr.mxu0 0.0
  %1275 = vmatpush2.msra.mxu0 0.0
  %1276 = vmatprep.subr.mxu0 0.0
  %1277 = vmatpush2.msra.mxu0 0.0
  %1278 = vmatprep.subr.mxu0 0.0
  %1279 = vmatpush2.msra.mxu0 0.0
  %1280 = vmatprep.mubr.f32.mxu0 0.0
  %1281 = vmatmul.mubr.f32.gmra.mxu0 %v1214
  %v1282 = vpop.f32.mrf.mxu0
  %v1283 = vadd.f32 0.0, %v1282
  %v1284 = vpop.f32.mrf.mxu0
  %1285 = vdwg.mxu0
  %v1286 = vadd.f32 %v1212, %v1283
  %v1287 = vmul.f32 %v1286, 0.5
  %v1288 = vtanh.pop %v1287
  %v1289 = vmul.f32 %v1288, 0.5
  %v1290 = vadd.f32 %v1289, 0.5
  %v1291 = vtanh.pop %v1286
  %1293 = vrot.lane.b32.xlu0 %v1211, 32
  %v1294 = vpop.permute.xlu0 %1293
  %v1296 = vmul.f32 %v1290, %v1294
  %1298 = vrot.lane.b32.xlu0 %v1291, 32
  %v1299 = vpop.permute.xlu0 %1298
  %v1301 = vmul.f32 %v1290, %v1299
  %1303 = vrot.lane.b32.xlu0 %v1301, 32
  %v1304 = vpop.permute.xlu0 %1303
  %v1306 = vadd.f32 %v1296, %v1304
  %v1307 = vtanh.pop %v1306
  %1309 = vrot.lane.b32.xlu0 %v1307, 32
  %v1310 = vpop.permute.xlu0 %1309
  %v1312 = vmul.f32 %v1290, %v1310
  %1314 = vrot.lane.b32.xlu0 %v1312, 64
  %v1315 = vpop.permute.xlu0 %1314
  %1317 = vst.msk [vmem:[#allocation3] sm:$0xff] %vm215, %v1315
  %v1318 = vld [vmem:[%s321] sm:$0xff]
  %v1319 = vsel %vm215, %v1315, 0
  %1321 = vmatprep.subr.mxu0 0.0
  %1322 = vmatpush1.msra.mxu0 0.0
  %1323 = vmatprep.subr.mxu0 0.0
  %1324 = vmatpush1.msra.mxu0 0.0
  %1325 = vmatprep.subr.mxu0 0.0
  %1326 = vmatpush1.msra.mxu0 0.0
  %1327 = vmatprep.subr.mxu0 0.0
  %1328 = vmatpush1.msra.mxu0 0.0
  %1329 = vmatprep.subr.mxu0 0.0
  %1330 = vmatpush1.msra.mxu0 0.0
  %1331 = vmatprep.subr.mxu0 0.0
  %1332 = vmatpush1.msra.mxu0 0.0
  %1333 = vmatprep.subr.mxu0 0.0
  %1334 = vmatpush1.msra.mxu0 0.0
  %1335 = vmatprep.subr.mxu0 0.0
  %1336 = vmatpush1.msra.mxu0 0.0
  %1337 = vmatprep.subr.mxu0 0.0
  %1338 = vmatpush1.msra.mxu0 0.0
  %1339 = vmatprep.subr.mxu0 0.0
  %1340 = vmatpush1.msra.mxu0 0.0
  %1341 = vmatprep.subr.mxu0 0.0
  %1342 = vmatpush1.msra.mxu0 0.0
  %1343 = vmatprep.subr.mxu0 0.0
  %1344 = vmatpush1.msra.mxu0 0.0
  %1345 = vmatprep.subr.mxu0 0.0
  %1346 = vmatpush1.msra.mxu0 %v1207
  %1347 = vmatprep.subr.mxu0 0.0
  %1348 = vmatpush1.msra.mxu0 %v1206
  %1349 = vmatprep.subr.mxu0 0.0
  %1350 = vmatpush1.msra.mxu0 %v1205
  %1351 = vmatprep.subr.mxu0 0.0
  %1352 = vmatpush1.msra.mxu0 %v1204
  %1353 = vmatprep.subr.mxu0 0.0
  %1354 = vmatpush2.msra.mxu0 0.0
  %1355 = vmatprep.subr.mxu0 0.0
  %1356 = vmatpush2.msra.mxu0 0.0
  %1357 = vmatprep.subr.mxu0 0.0
  %1358 = vmatpush2.msra.mxu0 0.0
  %1359 = vmatprep.subr.mxu0 0.0
  %1360 = vmatpush2.msra.mxu0 0.0
  %1361 = vmatprep.subr.mxu0 0.0
  %1362 = vmatpush2.msra.mxu0 0.0
  %1363 = vmatprep.subr.mxu0 0.0
  %1364 = vmatpush2.msra.mxu0 0.0
  %1365 = vmatprep.subr.mxu0 0.0
  %1366 = vmatpush2.msra.mxu0 0.0
  %1367 = vmatprep.subr.mxu0 0.0
  %1368 = vmatpush2.msra.mxu0 0.0
  %1369 = vmatprep.subr.mxu0 0.0
  %1370 = vmatpush2.msra.mxu0 0.0
  %1371 = vmatprep.subr.mxu0 0.0
  %1372 = vmatpush2.msra.mxu0 0.0
  %1373 = vmatprep.subr.mxu0 0.0
  %1374 = vmatpush2.msra.mxu0 0.0
  %1375 = vmatprep.subr.mxu0 0.0
  %1376 = vmatpush2.msra.mxu0 0.0
  %1377 = vmatprep.subr.mxu0 0.0
  %1378 = vmatpush2.msra.mxu0 0.0
  %1379 = vmatprep.subr.mxu0 0.0
  %1380 = vmatpush2.msra.mxu0 0.0
  %1381 = vmatprep.subr.mxu0 0.0
  %1382 = vmatpush2.msra.mxu0 0.0
  %1383 = vmatprep.subr.mxu0 0.0
  %1384 = vmatpush2.msra.mxu0 0.0
  %1385 = vmatprep.mubr.f32.mxu0 0.0
  %1386 = vmatmul.mubr.f32.gmra.mxu0 %v1319
  %v1387 = vpop.f32.mrf.mxu0
  %v1388 = vadd.f32 0.0, %v1387
  %v1389 = vpop.f32.mrf.mxu0
  %1390 = vdwg.mxu0
  %v1391 = vadd.f32 %v1318, %v1388
  %v1392 = vmul.f32 %v1391, 0.5
  %v1393 = vtanh.pop %v1392
  %v1394 = vmul.f32 %v1393, 0.5
  %v1395 = vadd.f32 %v1394, 0.5
  %v1396 = vtanh.pop %v1391
  %v1397 = vmul.f32 %v1395, %v1306
  %1399 = vrot.lane.b32.xlu0 %v1396, 32
  %v1400 = vpop.permute.xlu0 %1399
  %v1402 = vmul.f32 %v1395, %v1400
  %1404 = vrot.lane.b32.xlu0 %v1402, 32
  %v1405 = vpop.permute.xlu0 %1404
  %v1407 = vadd.f32 %v1397, %v1405
  %v1408 = vtanh.pop %v1407
  %1410 = vrot.lane.b32.xlu0 %v1408, 32
  %v1411 = vpop.permute.xlu0 %1410
  %v1413 = vmul.f32 %v1395, %v1411
  %1415 = vrot.lane.b32.xlu0 %v1413, 64
  %v1416 = vpop.permute.xlu0 %1415
  %1418 = vst.msk [vmem:[%s422] sm:$0xff] %vm215, %v1416
  %v1419 = vld [vmem:[%s424] sm:$0xff]
  %v1420 = vsel %vm215, %v1416, 0
  %1422 = vmatprep.subr.mxu0 0.0
  %1423 = vmatpush1.msra.mxu0 0.0
  %1424 = vmatprep.subr.mxu0 0.0
  %1425 = vmatpush1.msra.mxu0 0.0
  %1426 = vmatprep.subr.mxu0 0.0
  %1427 = vmatpush1.msra.mxu0 0.0
  %1428 = vmatprep.subr.mxu0 0.0
  %1429 = vmatpush1.msra.mxu0 0.0
  %1430 = vmatprep.subr.mxu0 0.0
  %1431 = vmatpush1.msra.mxu0 0.0
  %1432 = vmatprep.subr.mxu0 0.0
  %1433 = vmatpush1.msra.mxu0 0.0
  %1434 = vmatprep.subr.mxu0 0.0
  %1435 = vmatpush1.msra.mxu0 0.0
  %1436 = vmatprep.subr.mxu0 0.0
  %1437 = vmatpush1.msra.mxu0 0.0
  %1438 = vmatprep.subr.mxu0 0.0
  %1439 = vmatpush1.msra.mxu0 0.0
  %1440 = vmatprep.subr.mxu0 0.0
  %1441 = vmatpush1.msra.mxu0 0.0
  %1442 = vmatprep.subr.mxu0 0.0
  %1443 = vmatpush1.msra.mxu0 0.0
  %1444 = vmatprep.subr.mxu0 0.0
  %1445 = vmatpush1.msra.mxu0 0.0
  %1446 = vmatprep.subr.mxu0 0.0
  %1447 = vmatpush1.msra.mxu0 %v1207
  %1448 = vmatprep.subr.mxu0 0.0
  %1449 = vmatpush1.msra.mxu0 %v1206
  %1450 = vmatprep.subr.mxu0 0.0
  %1451 = vmatpush1.msra.mxu0 %v1205
  %1452 = vmatprep.subr.mxu0 0.0
  %1453 = vmatpush1.msra.mxu0 %v1204
  %1454 = vmatprep.subr.mxu0 0.0
  %1455 = vmatpush2.msra.mxu0 0.0
  %1456 = vmatprep.subr.mxu0 0.0
  %1457 = vmatpush2.msra.mxu0 0.0
  %1458 = vmatprep.subr.mxu0 0.0
  %1459 = vmatpush2.msra.mxu0 0.0
  %1460 = vmatprep.subr.mxu0 0.0
  %1461 = vmatpush2.msra.mxu0 0.0
  %1462 = vmatprep.subr.mxu0 0.0
  %1463 = vmatpush2.msra.mxu0 0.0
  %1464 = vmatprep.subr.mxu0 0.0
  %1465 = vmatpush2.msra.mxu0 0.0
  %1466 = vmatprep.subr.mxu0 0.0
  %1467 = vmatpush2.msra.mxu0 0.0
  %1468 = vmatprep.subr.mxu0 0.0
  %1469 = vmatpush2.msra.mxu0 0.0
  %1470 = vmatprep.subr.mxu0 0.0
  %1471 = vmatpush2.msra.mxu0 0.0
  %1472 = vmatprep.subr.mxu0 0.0
  %1473 = vmatpush2.msra.mxu0 0.0
  %1474 = vmatprep.subr.mxu0 0.0
  %1475 = vmatpush2.msra.mxu0 0.0
  %1476 = vmatprep.subr.mxu0 0.0
  %1477 = vmatpush2.msra.mxu0 0.0
  %1478 = vmatprep.subr.mxu0 0.0
  %1479 = vmatpush2.msra.mxu0 0.0
  %1480 = vmatprep.subr.mxu0 0.0
  %1481 = vmatpush2.msra.mxu0 0.0
  %1482 = vmatprep.subr.mxu0 0.0
  %1483 = vmatpush2.msra.mxu0 0.0
  %1484 = vmatprep.subr.mxu0 0.0
  %1485 = vmatpush2.msra.mxu0 0.0
  %1486 = vmatprep.mubr.f32.mxu0 0.0
  %1487 = vmatmul.mubr.f32.gmra.mxu0 %v1420
  %v1488 = vpop.f32.mrf.mxu0
  %v1489 = vadd.f32 0.0, %v1488
  %v1490 = vpop.f32.mrf.mxu0
  %1491 = vdwg.mxu0
  %v1492 = vadd.f32 %v1419, %v1489
  %v1493 = vmul.f32 %v1492, 0.5
  %v1494 = vtanh.pop %v1493
  %v1495 = vmul.f32 %v1494, 0.5
  %v1496 = vadd.f32 %v1495, 0.5
  %v1497 = vtanh.pop %v1492
  %v1498 = vmul.f32 %v1496, %v1407
  %1500 = vrot.lane.b32.xlu0 %v1497, 32
  %v1501 = vpop.permute.xlu0 %1500
  %v1503 = vmul.f32 %v1496, %v1501
  %1505 = vrot.lane.b32.xlu0 %v1503, 32
  %v1506 = vpop.permute.xlu0 %1505
  %v1508 = vadd.f32 %v1498, %v1506
  %v1509 = vtanh.pop %v1508
  %1511 = vrot.lane.b32.xlu0 %v1509, 32
  %v1512 = vpop.permute.xlu0 %1511
  %v1514 = vmul.f32 %v1496, %v1512
  %1516 = vrot.lane.b32.xlu0 %v1514, 64
  %v1517 = vpop.permute.xlu0 %1516
  %1519 = vst.msk [vmem:[%s525] sm:$0xff] %vm215, %v1517
  %v1520 = vld [vmem:[%s527] sm:$0xff]
  %v1521 = vsel %vm215, %v1517, 0
  %1523 = vmatprep.subr.mxu0 0.0
  %1524 = vmatpush1.msra.mxu0 0.0
  %1525 = vmatprep.subr.mxu0 0.0
  %1526 = vmatpush1.msra.mxu0 0.0
  %1527 = vmatprep.subr.mxu0 0.0
  %1528 = vmatpush1.msra.mxu0 0.0
  %1529 = vmatprep.subr.mxu0 0.0
  %1530 = vmatpush1.msra.mxu0 0.0
  %1531 = vmatprep.subr.mxu0 0.0
  %1532 = vmatpush1.msra.mxu0 0.0
  %1533 = vmatprep.subr.mxu0 0.0
  %1534 = vmatpush1.msra.mxu0 0.0
  %1535 = vmatprep.subr.mxu0 0.0
  %1536 = vmatpush1.msra.mxu0 0.0
  %1537 = vmatprep.subr.mxu0 0.0
  %1538 = vmatpush1.msra.mxu0 0.0
  %1539 = vmatprep.subr.mxu0 0.0
  %1540 = vmatpush1.msra.mxu0 0.0
  %1541 = vmatprep.subr.mxu0 0.0
  %1542 = vmatpush1.msra.mxu0 0.0
  %1543 = vmatprep.subr.mxu0 0.0
  %1544 = vmatpush1.msra.mxu0 0.0
  %1545 = vmatprep.subr.mxu0 0.0
  %1546 = vmatpush1.msra.mxu0 0.0
  %1547 = vmatprep.subr.mxu0 0.0
  %1548 = vmatpush1.msra.mxu0 %v1207
  %1549 = vmatprep.subr.mxu0 0.0
  %1550 = vmatpush1.msra.mxu0 %v1206
  %1551 = vmatprep.subr.mxu0 0.0
  %1552 = vmatpush1.msra.mxu0 %v1205
  %1553 = vmatprep.subr.mxu0 0.0
  %1554 = vmatpush1.msra.mxu0 %v1204
  %1555 = vmatprep.subr.mxu0 0.0
  %1556 = vmatpush2.msra.mxu0 0.0
  %1557 = vmatprep.subr.mxu0 0.0
  %1558 = vmatpush2.msra.mxu0 0.0
  %1559 = vmatprep.subr.mxu0 0.0
  %1560 = vmatpush2.msra.mxu0 0.0
  %1561 = vmatprep.subr.mxu0 0.0
  %1562 = vmatpush2.msra.mxu0 0.0
  %1563 = vmatprep.subr.mxu0 0.0
  %1564 = vmatpush2.msra.mxu0 0.0
  %1565 = vmatprep.subr.mxu0 0.0
  %1566 = vmatpush2.msra.mxu0 0.0
  %1567 = vmatprep.subr.mxu0 0.0
  %1568 = vmatpush2.msra.mxu0 0.0
  %1569 = vmatprep.subr.mxu0 0.0
  %1570 = vmatpush2.msra.mxu0 0.0
  %1571 = vmatprep.subr.mxu0 0.0
  %1572 = vmatpush2.msra.mxu0 0.0
  %1573 = vmatprep.subr.mxu0 0.0
  %1574 = vmatpush2.msra.mxu0 0.0
  %1575 = vmatprep.subr.mxu0 0.0
  %1576 = vmatpush2.msra.mxu0 0.0
  %1577 = vmatprep.subr.mxu0 0.0
  %1578 = vmatpush2.msra.mxu0 0.0
  %1579 = vmatprep.subr.mxu0 0.0
  %1580 = vmatpush2.msra.mxu0 0.0
  %1581 = vmatprep.subr.mxu0 0.0
  %1582 = vmatpush2.msra.mxu0 0.0
  %1583 = vmatprep.subr.mxu0 0.0
  %1584 = vmatpush2.msra.mxu0 0.0
  %1585 = vmatprep.subr.mxu0 0.0
  %1586 = vmatpush2.msra.mxu0 0.0
  %1587 = vmatprep.mubr.f32.mxu0 0.0
  %1588 = vmatmul.mubr.f32.gmra.mxu0 %v1521
  %v1589 = vpop.f32.mrf.mxu0
  %v1590 = vadd.f32 0.0, %v1589
  %v1591 = vpop.f32.mrf.mxu0
  %1592 = vdwg.mxu0
  %v1593 = vadd.f32 %v1520, %v1590
  %v1594 = vmul.f32 %v1593, 0.5
  %v1595 = vtanh.pop %v1594
  %v1596 = vmul.f32 %v1595, 0.5
  %v1597 = vadd.f32 %v1596, 0.5
  %v1598 = vtanh.pop %v1593
  %v1599 = vmul.f32 %v1597, %v1508
  %1601 = vrot.lane.b32.xlu0 %v1598, 32
  %v1602 = vpop.permute.xlu0 %1601
  %v1604 = vmul.f32 %v1597, %v1602
  %1606 = vrot.lane.b32.xlu0 %v1604, 32
  %v1607 = vpop.permute.xlu0 %1606
  %v1609 = vadd.f32 %v1599, %v1607
  %v1610 = vtanh.pop %v1609
  %1612 = vrot.lane.b32.xlu0 %v1610, 32
  %v1613 = vpop.permute.xlu0 %1612
  %v1615 = vmul.f32 %v1597, %v1613
  %1617 = vrot.lane.b32.xlu0 %v1615, 64
  %v1618 = vpop.permute.xlu0 %1617
  %1620 = vst.msk [vmem:[%s628] sm:$0xff] %vm215, %v1618
  %v1621 = vld [vmem:[%s630] sm:$0xff]
  %v1622 = vsel %vm215, %v1618, 0
  %1624 = vmatprep.subr.mxu0 0.0
  %1625 = vmatpush1.msra.mxu0 0.0
  %1626 = vmatprep.subr.mxu0 0.0
  %1627 = vmatpush1.msra.mxu0 0.0
  %1628 = vmatprep.subr.mxu0 0.0
  %1629 = vmatpush1.msra.mxu0 0.0
  %1630 = vmatprep.subr.mxu0 0.0
  %1631 = vmatpush1.msra.mxu0 0.0
  %1632 = vmatprep.subr.mxu0 0.0
  %1633 = vmatpush1.msra.mxu0 0.0
  %1634 = vmatprep.subr.mxu0 0.0
  %1635 = vmatpush1.msra.mxu0 0.0
  %1636 = vmatprep.subr.mxu0 0.0
  %1637 = vmatpush1.msra.mxu0 0.0
  %1638 = vmatprep.subr.mxu0 0.0
  %1639 = vmatpush1.msra.mxu0 0.0
  %1640 = vmatprep.subr.mxu0 0.0
  %1641 = vmatpush1.msra.mxu0 0.0
  %1642 = vmatprep.subr.mxu0 0.0
  %1643 = vmatpush1.msra.mxu0 0.0
  %1644 = vmatprep.subr.mxu0 0.0
  %1645 = vmatpush1.msra.mxu0 0.0
  %1646 = vmatprep.subr.mxu0 0.0
  %1647 = vmatpush1.msra.mxu0 0.0
  %1648 = vmatprep.subr.mxu0 0.0
  %1649 = vmatpush1.msra.mxu0 %v1207
  %1650 = vmatprep.subr.mxu0 0.0
  %1651 = vmatpush1.msra.mxu0 %v1206
  %1652 = vmatprep.subr.mxu0 0.0
  %1653 = vmatpush1.msra.mxu0 %v1205
  %1654 = vmatprep.subr.mxu0 0.0
  %1655 = vmatpush1.msra.mxu0 %v1204
  %1656 = vmatprep.subr.mxu0 0.0
  %1657 = vmatpush2.msra.mxu0 0.0
  %1658 = vmatprep.subr.mxu0 0.0
  %1659 = vmatpush2.msra.mxu0 0.0
  %1660 = vmatprep.subr.mxu0 0.0
  %1661 = vmatpush2.msra.mxu0 0.0
  %1662 = vmatprep.subr.mxu0 0.0
  %1663 = vmatpush2.msra.mxu0 0.0
  %1664 = vmatprep.subr.mxu0 0.0
  %1665 = vmatpush2.msra.mxu0 0.0
  %1666 = vmatprep.subr.mxu0 0.0
  %1667 = vmatpush2.msra.mxu0 0.0
  %1668 = vmatprep.subr.mxu0 0.0
  %1669 = vmatpush2.msra.mxu0 0.0
  %1670 = vmatprep.subr.mxu0 0.0
  %1671 = vmatpush2.msra.mxu0 0.0
  %1672 = vmatprep.subr.mxu0 0.0
  %1673 = vmatpush2.msra.mxu0 0.0
  %1674 = vmatprep.subr.mxu0 0.0
  %1675 = vmatpush2.msra.mxu0 0.0
  %1676 = vmatprep.subr.mxu0 0.0
  %1677 = vmatpush2.msra.mxu0 0.0
  %1678 = vmatprep.subr.mxu0 0.0
  %1679 = vmatpush2.msra.mxu0 0.0
  %1680 = vmatprep.subr.mxu0 0.0
  %1681 = vmatpush2.msra.mxu0 0.0
  %1682 = vmatprep.subr.mxu0 0.0
  %1683 = vmatpush2.msra.mxu0 0.0
  %1684 = vmatprep.subr.mxu0 0.0
  %1685 = vmatpush2.msra.mxu0 0.0
  %1686 = vmatprep.subr.mxu0 0.0
  %1687 = vmatpush2.msra.mxu0 0.0
  %1688 = vmatprep.mubr.f32.mxu0 0.0
  %1689 = vmatmul.mubr.f32.gmra.mxu0 %v1622
  %v1690 = vpop.f32.mrf.mxu0
  %v1691 = vadd.f32 0.0, %v1690
  %v1692 = vpop.f32.mrf.mxu0
  %1693 = vdwg.mxu0
  %v1694 = vadd.f32 %v1621, %v1691
  %v1695 = vmul.f32 %v1694, 0.5
  %v1696 = vtanh.pop %v1695
  %v1697 = vmul.f32 %v1696, 0.5
  %v1698 = vadd.f32 %v1697, 0.5
  %v1699 = vtanh.pop %v1694
  %v1700 = vmul.f32 %v1698, %v1609
  %1702 = vrot.lane.b32.xlu0 %v1699, 32
  %v1703 = vpop.permute.xlu0 %1702
  %v1705 = vmul.f32 %v1698, %v1703
  %1707 = vrot.lane.b32.xlu0 %v1705, 32
  %v1708 = vpop.permute.xlu0 %1707
  %v1710 = vadd.f32 %v1700, %v1708
  %v1711 = vtanh.pop %v1710
  %1713 = vrot.lane.b32.xlu0 %v1711, 32
  %v1714 = vpop.permute.xlu0 %1713
  %v1716 = vmul.f32 %v1698, %v1714
  %1718 = vrot.lane.b32.xlu0 %v1716, 64
  %v1719 = vpop.permute.xlu0 %1718
  %1721 = vst.msk [vmem:[%s731] sm:$0xff] %vm215, %v1719
  %v1722 = vld [vmem:[%s733] sm:$0xff]
  %v1723 = vsel %vm215, %v1719, 0
  %1725 = vmatprep.subr.mxu0 0.0
  %1726 = vmatpush1.msra.mxu0 0.0
  %1727 = vmatprep.subr.mxu0 0.0
  %1728 = vmatpush1.msra.mxu0 0.0
  %1729 = vmatprep.subr.mxu0 0.0
  %1730 = vmatpush1.msra.mxu0 0.0
  %1731 = vmatprep.subr.mxu0 0.0
  %1732 = vmatpush1.msra.mxu0 0.0
  %1733 = vmatprep.subr.mxu0 0.0
  %1734 = vmatpush1.msra.mxu0 0.0
  %1735 = vmatprep.subr.mxu0 0.0
  %1736 = vmatpush1.msra.mxu0 0.0
  %1737 = vmatprep.subr.mxu0 0.0
  %1738 = vmatpush1.msra.mxu0 0.0
  %1739 = vmatprep.subr.mxu0 0.0
  %1740 = vmatpush1.msra.mxu0 0.0
  %1741 = vmatprep.subr.mxu0 0.0
  %1742 = vmatpush1.msra.mxu0 0.0
  %1743 = vmatprep.subr.mxu0 0.0
  %1744 = vmatpush1.msra.mxu0 0.0
  %1745 = vmatprep.subr.mxu0 0.0
  %1746 = vmatpush1.msra.mxu0 0.0
  %1747 = vmatprep.subr.mxu0 0.0
  %1748 = vmatpush1.msra.mxu0 0.0
  %1749 = vmatprep.subr.mxu0 0.0
  %1750 = vmatpush1.msra.mxu0 %v1207
  %1751 = vmatprep.subr.mxu0 0.0
  %1752 = vmatpush1.msra.mxu0 %v1206
  %1753 = vmatprep.subr.mxu0 0.0
  %1754 = vmatpush1.msra.mxu0 %v1205
  %1755 = vmatprep.subr.mxu0 0.0
  %1756 = vmatpush1.msra.mxu0 %v1204
  %1757 = vmatprep.subr.mxu0 0.0
  %1758 = vmatpush2.msra.mxu0 0.0
  %1759 = vmatprep.subr.mxu0 0.0
  %1760 = vmatpush2.msra.mxu0 0.0
  %1761 = vmatprep.subr.mxu0 0.0
  %1762 = vmatpush2.msra.mxu0 0.0
  %1763 = vmatprep.subr.mxu0 0.0
  %1764 = vmatpush2.msra.mxu0 0.0
  %1765 = vmatprep.subr.mxu0 0.0
  %1766 = vmatpush2.msra.mxu0 0.0
  %1767 = vmatprep.subr.mxu0 0.0
  %1768 = vmatpush2.msra.mxu0 0.0
  %1769 = vmatprep.subr.mxu0 0.0
  %1770 = vmatpush2.msra.mxu0 0.0
  %1771 = vmatprep.subr.mxu0 0.0
  %1772 = vmatpush2.msra.mxu0 0.0
  %1773 = vmatprep.subr.mxu0 0.0
  %1774 = vmatpush2.msra.mxu0 0.0
  %1775 = vmatprep.subr.mxu0 0.0
  %1776 = vmatpush2.msra.mxu0 0.0
  %1777 = vmatprep.subr.mxu0 0.0
  %1778 = vmatpush2.msra.mxu0 0.0
  %1779 = vmatprep.subr.mxu0 0.0
  %1780 = vmatpush2.msra.mxu0 0.0
  %1781 = vmatprep.subr.mxu0 0.0
  %1782 = vmatpush2.msra.mxu0 0.0
  %1783 = vmatprep.subr.mxu0 0.0
  %1784 = vmatpush2.msra.mxu0 0.0
  %1785 = vmatprep.subr.mxu0 0.0
  %1786 = vmatpush2.msra.mxu0 0.0
  %1787 = vmatprep.subr.mxu0 0.0
  %1788 = vmatpush2.msra.mxu0 0.0
  %1789 = vmatprep.mubr.f32.mxu0 0.0
  %1790 = vmatmul.mubr.f32.gmra.mxu0 %v1723
  %v1791 = vpop.f32.mrf.mxu0
  %v1792 = vadd.f32 0.0, %v1791
  %v1793 = vpop.f32.mrf.mxu0
  %1794 = vdwg.mxu0
  %v1795 = vadd.f32 %v1722, %v1792
  %v1796 = vmul.f32 %v1795, 0.5
  %v1797 = vtanh.pop %v1796
  %v1798 = vmul.f32 %v1797, 0.5
  %v1799 = vadd.f32 %v1798, 0.5
  %v1800 = vtanh.pop %v1795
  %v1801 = vmul.f32 %v1799, %v1710
  %1803 = vrot.lane.b32.xlu0 %v1800, 32
  %v1804 = vpop.permute.xlu0 %1803
  %v1806 = vmul.f32 %v1799, %v1804
  %1808 = vrot.lane.b32.xlu0 %v1806, 32
  %v1809 = vpop.permute.xlu0 %1808
  %v1811 = vadd.f32 %v1801, %v1809
  %v1812 = vtanh.pop %v1811
  %1814 = vrot.lane.b32.xlu0 %v1812, 32
  %v1815 = vpop.permute.xlu0 %1814
  %v1817 = vmul.f32 %v1799, %v1815
  %1819 = vrot.lane.b32.xlu0 %v1817, 64
  %v1820 = vpop.permute.xlu0 %1819
  %1822 = vst.msk [vmem:[%s834] sm:$0xff] %vm215, %v1820
  %v1823 = vld [vmem:[%s836] sm:$0xff]
  %v1824 = vsel %vm215, %v1820, 0
  %1826 = vmatprep.subr.mxu0 0.0
  %1827 = vmatpush1.msra.mxu0 0.0
  %1828 = vmatprep.subr.mxu0 0.0
  %1829 = vmatpush1.msra.mxu0 0.0
  %1830 = vmatprep.subr.mxu0 0.0
  %1831 = vmatpush1.msra.mxu0 0.0
  %1832 = vmatprep.subr.mxu0 0.0
  %1833 = vmatpush1.msra.mxu0 0.0
  %1834 = vmatprep.subr.mxu0 0.0
  %1835 = vmatpush1.msra.mxu0 0.0
  %1836 = vmatprep.subr.mxu0 0.0
  %1837 = vmatpush1.msra.mxu0 0.0
  %1838 = vmatprep.subr.mxu0 0.0
  %1839 = vmatpush1.msra.mxu0 0.0
  %1840 = vmatprep.subr.mxu0 0.0
  %1841 = vmatpush1.msra.mxu0 0.0
  %1842 = vmatprep.subr.mxu0 0.0
  %1843 = vmatpush1.msra.mxu0 0.0
  %1844 = vmatprep.subr.mxu0 0.0
  %1845 = vmatpush1.msra.mxu0 0.0
  %1846 = vmatprep.subr.mxu0 0.0
  %1847 = vmatpush1.msra.mxu0 0.0
  %1848 = vmatprep.subr.mxu0 0.0
  %1849 = vmatpush1.msra.mxu0 0.0
  %1850 = vmatprep.subr.mxu0 0.0
  %1851 = vmatpush1.msra.mxu0 %v1207
  %1852 = vmatprep.subr.mxu0 0.0
  %1853 = vmatpush1.msra.mxu0 %v1206
  %1854 = vmatprep.subr.mxu0 0.0
  %1855 = vmatpush1.msra.mxu0 %v1205
  %1856 = vmatprep.subr.mxu0 0.0
  %1857 = vmatpush1.msra.mxu0 %v1204
  %1858 = vmatprep.subr.mxu0 0.0
  %1859 = vmatpush2.msra.mxu0 0.0
  %1860 = vmatprep.subr.mxu0 0.0
  %1861 = vmatpush2.msra.mxu0 0.0
  %1862 = vmatprep.subr.mxu0 0.0
  %1863 = vmatpush2.msra.mxu0 0.0
  %1864 = vmatprep.subr.mxu0 0.0
  %1865 = vmatpush2.msra.mxu0 0.0
  %1866 = vmatprep.subr.mxu0 0.0
  %1867 = vmatpush2.msra.mxu0 0.0
  %1868 = vmatprep.subr.mxu0 0.0
  %1869 = vmatpush2.msra.mxu0 0.0
  %1870 = vmatprep.subr.mxu0 0.0
  %1871 = vmatpush2.msra.mxu0 0.0
  %1872 = vmatprep.subr.mxu0 0.0
  %1873 = vmatpush2.msra.mxu0 0.0
  %1874 = vmatprep.subr.mxu0 0.0
  %1875 = vmatpush2.msra.mxu0 0.0
  %1876 = vmatprep.subr.mxu0 0.0
  %1877 = vmatpush2.msra.mxu0 0.0
  %1878 = vmatprep.subr.mxu0 0.0
  %1879 = vmatpush2.msra.mxu0 0.0
  %1880 = vmatprep.subr.mxu0 0.0
  %1881 = vmatpush2.msra.mxu0 0.0
  %1882 = vmatprep.subr.mxu0 0.0
  %1883 = vmatpush2.msra.mxu0 0.0
  %1884 = vmatprep.subr.mxu0 0.0
  %1885 = vmatpush2.msra.mxu0 0.0
  %1886 = vmatprep.subr.mxu0 0.0
  %1887 = vmatpush2.msra.mxu0 0.0
  %1888 = vmatprep.subr.mxu0 0.0
  %1889 = vmatpush2.msra.mxu0 0.0
  %1890 = vmatprep.mubr.f32.mxu0 0.0
  %1891 = vmatmul.mubr.f32.gmra.mxu0 %v1824
  %v1892 = vpop.f32.mrf.mxu0
  %v1893 = vadd.f32 0.0, %v1892
  %v1894 = vpop.f32.mrf.mxu0
  %1895 = vdwg.mxu0
  %v1896 = vadd.f32 %v1823, %v1893
  %v1897 = vmul.f32 %v1896, 0.5
  %v1898 = vtanh.pop %v1897
  %v1899 = vmul.f32 %v1898, 0.5
  %v1900 = vadd.f32 %v1899, 0.5
  %v1901 = vtanh.pop %v1896
  %v1902 = vmul.f32 %v1900, %v1811
  %1904 = vrot.lane.b32.xlu0 %v1901, 32
  %v1905 = vpop.permute.xlu0 %1904
  %v1907 = vmul.f32 %v1900, %v1905
  %1909 = vrot.lane.b32.xlu0 %v1907, 32
  %v1910 = vpop.permute.xlu0 %1909
  %v1912 = vadd.f32 %v1902, %v1910
  %v1913 = vtanh.pop %v1912
  %1915 = vrot.lane.b32.xlu0 %v1913, 32
  %v1916 = vpop.permute.xlu0 %1915
  %v1918 = vmul.f32 %v1900, %v1916
  %1920 = vrot.lane.b32.xlu0 %v1918, 64
  %v1921 = vpop.permute.xlu0 %1920
  %1923 = vst.msk [vmem:[%s937] sm:$0xff] %vm215, %v1921
  %v1924 = vld [vmem:[%s939] sm:$0xff]
  %v1925 = vsel %vm215, %v1921, 0
  %1927 = vmatprep.subr.mxu0 0.0
  %1928 = vmatpush1.msra.mxu0 0.0
  %1929 = vmatprep.subr.mxu0 0.0
  %1930 = vmatpush1.msra.mxu0 0.0
  %1931 = vmatprep.subr.mxu0 0.0
  %1932 = vmatpush1.msra.mxu0 0.0
  %1933 = vmatprep.subr.mxu0 0.0
  %1934 = vmatpush1.msra.mxu0 0.0
  %1935 = vmatprep.subr.mxu0 0.0
  %1936 = vmatpush1.msra.mxu0 0.0
  %1937 = vmatprep.subr.mxu0 0.0
  %1938 = vmatpush1.msra.mxu0 0.0
  %1939 = vmatprep.subr.mxu0 0.0
  %1940 = vmatpush1.msra.mxu0 0.0
  %1941 = vmatprep.subr.mxu0 0.0
  %1942 = vmatpush1.msra.mxu0 0.0
  %1943 = vmatprep.subr.mxu0 0.0
  %1944 = vmatpush1.msra.mxu0 0.0
  %1945 = vmatprep.subr.mxu0 0.0
  %1946 = vmatpush1.msra.mxu0 0.0
  %1947 = vmatprep.subr.mxu0 0.0
  %1948 = vmatpush1.msra.mxu0 0.0
  %1949 = vmatprep.subr.mxu0 0.0
  %1950 = vmatpush1.msra.mxu0 0.0
  %1951 = vmatprep.subr.mxu0 0.0
  %1952 = vmatpush1.msra.mxu0 %v1207
  %1953 = vmatprep.subr.mxu0 0.0
  %1954 = vmatpush1.msra.mxu0 %v1206
  %1955 = vmatprep.subr.mxu0 0.0
  %1956 = vmatpush1.msra.mxu0 %v1205
  %1957 = vmatprep.subr.mxu0 0.0
  %1958 = vmatpush1.msra.mxu0 %v1204
  %1959 = vmatprep.subr.mxu0 0.0
  %1960 = vmatpush2.msra.mxu0 0.0
  %1961 = vmatprep.subr.mxu0 0.0
  %1962 = vmatpush2.msra.mxu0 0.0
  %1963 = vmatprep.subr.mxu0 0.0
  %1964 = vmatpush2.msra.mxu0 0.0
  %1965 = vmatprep.subr.mxu0 0.0
  %1966 = vmatpush2.msra.mxu0 0.0
  %1967 = vmatprep.subr.mxu0 0.0
  %1968 = vmatpush2.msra.mxu0 0.0
  %1969 = vmatprep.subr.mxu0 0.0
  %1970 = vmatpush2.msra.mxu0 0.0
  %1971 = vmatprep.subr.mxu0 0.0
  %1972 = vmatpush2.msra.mxu0 0.0
  %1973 = vmatprep.subr.mxu0 0.0
  %1974 = vmatpush2.msra.mxu0 0.0
  %1975 = vmatprep.subr.mxu0 0.0
  %1976 = vmatpush2.msra.mxu0 0.0
  %1977 = vmatprep.subr.mxu0 0.0
  %1978 = vmatpush2.msra.mxu0 0.0
  %1979 = vmatprep.subr.mxu0 0.0
  %1980 = vmatpush2.msra.mxu0 0.0
  %1981 = vmatprep.subr.mxu0 0.0
  %1982 = vmatpush2.msra.mxu0 0.0
  %1983 = vmatprep.subr.mxu0 0.0
  %1984 = vmatpush2.msra.mxu0 0.0
  %1985 = vmatprep.subr.mxu0 0.0
  %1986 = vmatpush2.msra.mxu0 0.0
  %1987 = vmatprep.subr.mxu0 0.0
  %1988 = vmatpush2.msra.mxu0 0.0
  %1989 = vmatprep.subr.mxu0 0.0
  %1990 = vmatpush2.msra.mxu0 0.0
  %1991 = vmatprep.mubr.f32.mxu0 0.0
  %1992 = vmatmul.mubr.f32.gmra.mxu0 %v1925
  %v1993 = vpop.f32.mrf.mxu0
  %v1994 = vadd.f32 0.0, %v1993
  %v1995 = vpop.f32.mrf.mxu0
  %1996 = vdwg.mxu0
  %v1997 = vadd.f32 %v1924, %v1994
  %v1998 = vmul.f32 %v1997, 0.5
  %v1999 = vtanh.pop %v1998
  %v2000 = vmul.f32 %v1999, 0.5
  %v2001 = vadd.f32 %v2000, 0.5
  %v2002 = vtanh.pop %v1997
  %v2003 = vmul.f32 %v2001, %v1912
  %2005 = vrot.lane.b32.xlu0 %v2002, 32
  %v2006 = vpop.permute.xlu0 %2005
  %v2008 = vmul.f32 %v2001, %v2006
  %2010 = vrot.lane.b32.xlu0 %v2008, 32
  %v2011 = vpop.permute.xlu0 %2010
  %v2013 = vadd.f32 %v2003, %v2011
  %v2014 = vtanh.pop %v2013
  %2016 = vrot.lane.b32.xlu0 %v2014, 32
  %v2017 = vpop.permute.xlu0 %2016
  %v2019 = vmul.f32 %v2001, %v2017
  %2021 = vrot.lane.b32.xlu0 %v2019, 64
  %v2022 = vpop.permute.xlu0 %2021
  %2024 = vst.msk [vmem:[%s1040] sm:$0xff] %vm215, %v2022
  %2025 = vst.msk [vmem:[%s1208] sm:$0xff] %vm215, %v2022
  %2027 = vrot.lane.b32.xlu0 %v2013, 96
  %v2028 = vpop.permute.xlu0 %2027
  %2030 = vst.msk [vmem:[%s1210] sm:$0xff] %vm215, %v2028
  %v2031 = vld [vmem:[#allocation3] sm:$0xff]
  %v2032 = vld [vmem:[#allocation3 + $0x8] sm:$0xff]
  %v2033 = vld [vmem:[#allocation3 + $0x10] sm:$0xff]
  %v2034 = vld [vmem:[#allocation3 + $0x18] sm:$0xff]
  %v2035 = vld [vmem:[#allocation3 + $0x20] sm:$0xff]
  %v2036 = vld [vmem:[#allocation3 + $0x28] sm:$0xff]
  %v2037 = vld [vmem:[#allocation3 + $0x30] sm:$0xff]
  %v2038 = vld [vmem:[#allocation3 + $0x38] sm:$0xff]
  %v2039 = vld [vmem:[%s9] sm:$0xff]
  %v2040 = vld [vmem:[%s9 + $0x8] sm:$0xff]
  %v2041 = vld [vmem:[%s9 + $0x10] sm:$0xff]
  %v2042 = vld [vmem:[%s9 + $0x18] sm:$0xff]
  %v2043 = vld [vmem:[%s10] sm:$0x1]
  %v2045 = vlaneseq
  %v2046 = vshrl.u32 %v2045, 7
  %v2047 = vsub.s32 0, %v2046
  %v2048 = vrot.slane %v2043, %v2047
  %v2051 = vsel %vm215, %v2031, 0
  %v2054 = vsel %vm215, %v2032, 0
  %v2057 = vsel %vm215, %v2033, 0
  %v2060 = vsel %vm215, %v2034, 0
  %v2063 = vsel %vm215, %v2035, 0
  %v2066 = vsel %vm215, %v2036, 0
  %v2069 = vsel %vm215, %v2037, 0
  %v2072 = vsel %vm215, %v2038, 0
  %2074 = vmatprep.subr.mxu0 0.0
  %2075 = vmatpush1.msra.mxu0 0.0
  %2076 = vmatprep.subr.mxu0 0.0
  %2077 = vmatpush1.msra.mxu0 0.0
  %2078 = vmatprep.subr.mxu0 0.0
  %2079 = vmatpush1.msra.mxu0 0.0
  %2080 = vmatprep.subr.mxu0 0.0
  %2081 = vmatpush1.msra.mxu0 0.0
  %2082 = vmatprep.subr.mxu0 0.0
  %2083 = vmatpush1.msra.mxu0 0.0
  %2084 = vmatprep.subr.mxu0 0.0
  %2085 = vmatpush1.msra.mxu0 0.0
  %2086 = vmatprep.subr.mxu0 0.0
  %2087 = vmatpush1.msra.mxu0 0.0
  %2088 = vmatprep.subr.mxu0 0.0
  %2089 = vmatpush1.msra.mxu0 0.0
  %2090 = vmatprep.subr.mxu0 0.0
  %2091 = vmatpush1.msra.mxu0 0.0
  %2092 = vmatprep.subr.mxu0 0.0
  %2093 = vmatpush1.msra.mxu0 0.0
  %2094 = vmatprep.subr.mxu0 0.0
  %2095 = vmatpush1.msra.mxu0 0.0
  %2096 = vmatprep.subr.mxu0 0.0
  %2097 = vmatpush1.msra.mxu0 0.0
  %2098 = vmatprep.subr.mxu0 0.0
  %2099 = vmatpush1.msra.mxu0 %v2042
  %2100 = vmatprep.subr.mxu0 0.0
  %2101 = vmatpush1.msra.mxu0 %v2041
  %2102 = vmatprep.subr.mxu0 0.0
  %2103 = vmatpush1.msra.mxu0 %v2040
  %2104 = vmatprep.subr.mxu0 0.0
  %2105 = vmatpush1.msra.mxu0 %v2039
  %2106 = vmatprep.subr.mxu0 0.0
  %2107 = vmatpush2.msra.mxu0 0.0
  %2108 = vmatprep.subr.mxu0 0.0
  %2109 = vmatpush2.msra.mxu0 0.0
  %2110 = vmatprep.subr.mxu0 0.0
  %2111 = vmatpush2.msra.mxu0 0.0
  %2112 = vmatprep.subr.mxu0 0.0
  %2113 = vmatpush2.msra.mxu0 0.0
  %2114 = vmatprep.subr.mxu0 0.0
  %2115 = vmatpush2.msra.mxu0 0.0
  %2116 = vmatprep.subr.mxu0 0.0
  %2117 = vmatpush2.msra.mxu0 0.0
  %2118 = vmatprep.subr.mxu0 0.0
  %2119 = vmatpush2.msra.mxu0 0.0
  %2120 = vmatprep.subr.mxu0 0.0
  %2121 = vmatpush2.msra.mxu0 0.0
  %2122 = vmatprep.subr.mxu0 0.0
  %2123 = vmatpush2.msra.mxu0 0.0
  %2124 = vmatprep.subr.mxu0 0.0
  %2125 = vmatpush2.msra.mxu0 0.0
  %2126 = vmatprep.subr.mxu0 0.0
  %2127 = vmatpush2.msra.mxu0 0.0
  %2128 = vmatprep.subr.mxu0 0.0
  %2129 = vmatpush2.msra.mxu0 0.0
  %2130 = vmatprep.subr.mxu0 0.0
  %2131 = vmatpush2.msra.mxu0 0.0
  %2132 = vmatprep.subr.mxu0 0.0
  %2133 = vmatpush2.msra.mxu0 0.0
  %2134 = vmatprep.subr.mxu0 0.0
  %2135 = vmatpush2.msra.mxu0 0.0
  %2136 = vmatprep.subr.mxu0 0.0
  %2137 = vmatpush2.msra.mxu0 0.0
  %2138 = vmatprep.mubr.f32.mxu0 0.0
  %2139 = vmatmul.mubr.f32.gmra.mxu0 %v2051
  %v2140 = vpop.f32.mrf.mxu0
  %v2141 = vadd.f32 %v2048, %v2140
  %v2142 = vpop.f32.mrf.mxu0
  %2143 = vmatprep.mubr.f32.mxu0 0.0
  %2144 = vmatmul.mubr.f32.gmra.mxu0 %v2054
  %v2145 = vpop.f32.mrf.mxu0
  %v2146 = vadd.f32 %v2048, %v2145
  %v2147 = vpop.f32.mrf.mxu0
  %2148 = vmatprep.mubr.f32.mxu0 0.0
  %2149 = vmatmul.mubr.f32.gmra.mxu0 %v2057
  %v2150 = vpop.f32.mrf.mxu0
  %v2151 = vadd.f32 %v2048, %v2150
  %v2152 = vpop.f32.mrf.mxu0
  %2153 = vmatprep.mubr.f32.mxu0 0.0
  %2154 = vmatmul.mubr.f32.gmra.mxu0 %v2060
  %v2155 = vpop.f32.mrf.mxu0
  %v2156 = vadd.f32 %v2048, %v2155
  %v2157 = vpop.f32.mrf.mxu0
  %2158 = vmatprep.mubr.f32.mxu0 0.0
  %2159 = vmatmul.mubr.f32.gmra.mxu0 %v2063
  %v2160 = vpop.f32.mrf.mxu0
  %v2161 = vadd.f32 %v2048, %v2160
  %v2162 = vpop.f32.mrf.mxu0
  %2163 = vmatprep.mubr.f32.mxu0 0.0
  %2164 = vmatmul.mubr.f32.gmra.mxu0 %v2066
  %v2165 = vpop.f32.mrf.mxu0
  %v2166 = vadd.f32 %v2048, %v2165
  %v2167 = vpop.f32.mrf.mxu0
  %2168 = vmatprep.mubr.f32.mxu0 0.0
  %2169 = vmatmul.mubr.f32.gmra.mxu0 %v2069
  %v2170 = vpop.f32.mrf.mxu0
  %v2171 = vadd.f32 %v2048, %v2170
  %v2172 = vpop.f32.mrf.mxu0
  %2173 = vmatprep.mubr.f32.mxu0 0.0
  %2174 = vmatmul.mubr.f32.gmra.mxu0 %v2072
  %v2175 = vpop.f32.mrf.mxu0
  %v2176 = vadd.f32 %v2048, %v2175
  %v2177 = vpop.f32.mrf.mxu0
  %2178 = vdwg.mxu0
  %2179 = vst [vmem:[%s11] sm:$0xff] %v2141
  %2180 = vst [vmem:[%s11 + $0x8] sm:$0xff] %v2146
  %2181 = vst [vmem:[%s11 + $0x10] sm:$0xff] %v2151
  %2182 = vst [vmem:[%s11 + $0x18] sm:$0xff] %v2156
  %2183 = vst [vmem:[%s11 + $0x20] sm:$0xff] %v2161
  %2184 = vst [vmem:[%s11 + $0x28] sm:$0xff] %v2166
  %2185 = vst [vmem:[%s11 + $0x30] sm:$0xff] %v2171
  %2186 = vst [vmem:[%s11 + $0x38] sm:$0xff] %v2176
  // Predicated region
  $region50: #{lstm_forward.1} parent=0 // pred_check
    _
  $region51: #{lstm_forward.1} parent=0 // pred_check_branch
    %2188 = sbr.rel (0) target = $region53
  $region52: #{lstm_forward.1} parent=0 // pred_region
    _
  $region53: #{lstm_forward.1} parent=0 // pred_fallthru
    _
  // Predicated region
  $region54: #{lstm_forward.1} parent=0 // pred_check
    _
  $region55: #{lstm_forward.1} parent=0 // pred_check_branch
    %2190 = sbr.rel (0) target = $region57
  $region56: #{lstm_forward.1} parent=0 // pred_region
    _
  $region57: #{lstm_forward.1} parent=0 // pred_fallthru
    _
  // Predicated region
  $region58: #{lstm_forward.1} parent=0 // pred_check
    _
  $region59: #{lstm_forward.1} parent=0 // pred_check_branch
    %2192 = sbr.rel (0) target = $region61
  $region60: #{lstm_forward.1} parent=0 // pred_region
    _
  $region61: #{lstm_forward.1} parent=0 // pred_fallthru
    _
  // Predicated region
  $region62: #{lstm_forward.1} parent=0 // pred_check
    _
  $region63: #{lstm_forward.1} parent=0 // pred_check_branch
    %2194 = sbr.rel (0) target = $region65
  $region64: #{lstm_forward.1} parent=0 // pred_region
    _
  $region65: #{lstm_forward.1} parent=0 // pred_fallthru
    _
  // Predicated region
  $region66: #{lstm_forward.1} parent=0 // pred_check
    _
  $region67: #{lstm_forward.1} parent=0 // pred_check_branch
    %2196 = sbr.rel (0) target = $region69
  $region68: #{lstm_forward.1} parent=0 // pred_region
    _
  $region69: #{lstm_forward.1} parent=0 // pred_fallthru
    _
  // Predicated region
  $region70: #{lstm_forward.1} parent=0 // pred_check
    _
  $region71: #{lstm_forward.1} parent=0 // pred_check_branch
    %2198 = sbr.rel (0) target = $region73
  $region72: #{lstm_forward.1} parent=0 // pred_region
    _
  $region73: #{lstm_forward.1} parent=0 // pred_fallthru
    _

</llo_original>
